<compile_context>
chip_gen: v7x
topology: tpu7x:2x2x1
jax: 0.10.0
libtpu: 0.0.40
codegen_flags: <defaults>
</compile_context>

<pallas_src>
import functools

import jax
import jax.numpy as jnp
from jax.experimental import pallas as pl
from jax.experimental.pallas import tpu as pltpu


def _gat_model_kernel(*refs, layer_cfgs, total_heads):
    """Fused multi-layer GAT forward.

    refs = (x, adj, ef_bf16, we_all_bf16, [w_fused, bias] * L, out)
    """
    x_ref, adj_ref, ef_ref, we_ref = refs[0], refs[1], refs[2], refs[3]
    out_ref = refs[-1]
    pref = refs[4:-1]

    n = x_ref.shape[0]
    x = x_ref[...]                                            # (N, F_in) f32

    # Additive softmax mask: computed ONCE for all layers and heads.
    adj_bias = jnp.where(adj_ref[...] > 0.0, 0.0, -1e30).astype(jnp.float32)
    adj_bias3 = adj_bias.reshape(1, n, n)                     # broadcast form, hoisted

    # Edge-feature attention logits for ALL layers and heads: ONE bf16 MXU
    # matmul over the dominant (N*N, E) tensor (operands pre-cast in wrapper,
    # f32 accumulation).  Result is tiny: (N*N, SUM_NH).
    el_all = jnp.dot(ef_ref[...], we_ref[...],
                     preferred_element_type=jnp.float32)      # (N*N, SUM_NH)
    el_all3 = el_all.reshape(n, n, total_heads)               # major-dim split (cheap)

    head_off = 0
    for li, cfg in enumerate(layer_cfgs):
        w_ref, bias_ref = pref[2 * li], pref[2 * li + 1]
        nh, f_out = cfg["num_heads"], cfg["f_out"]
        hw = nh * f_out

        # ---- ONE fused projection per layer (MXU): [x@w | x@(w@a) | x@skip_w]
        hp_full = jnp.dot(x, w_ref[...], preferred_element_type=jnp.float32)
        hp = hp_full[:, :hw]                                  # (N, NH*F)
        # One 2-D transpose per layer for BOTH score vectors (hoisted out of
        # the head loop): rows = heads on sublanes.
        s_t = jnp.transpose(hp_full[:, hw:hw + 2 * nh])       # (2*NH, N)
        s_tgt_t = s_t[:nh]                                    # (NH, N)
        s_src_t = s_t[nh:]                                    # (NH, N)
        skip = hp_full[:, hw + 2 * nh:] if cfg["use_skip_proj"] else None
        bias = bias_ref[...]

        # Per-head edge logits as (NH, N, N): static lane slices (no one-hot
        # multiply / cross-lane reduction), stacked on a leading batch axis.
        el_hnn = jnp.stack(
            [el_all3[:, :, head_off + h] for h in range(nh)], axis=0)

        # ---- head-BATCHED attention logits + masked softmax over sources ----
        e3 = s_tgt_t[:, :, None] + s_src_t[:, None, :] + el_hnn   # (NH, N, N)
        e3 = jnp.where(e3 >= 0.0, e3, 0.2 * e3)               # LeakyReLU(0.2)
        e3 = e3 + adj_bias3                                   # -1e30 off-edge
        e3 = e3 - jnp.max(e3, axis=-1, keepdims=True)
        p = jnp.exp(e3)                                       # masked -> exactly 0
        denom = jnp.sum(p, axis=-1, keepdims=True) + 1e-16
        alpha = p * pl.reciprocal(denom, approx=True)         # EUP divide (free slot)

        # ---- per-head aggregation: tiny (N,N)@(N,F) matmuls ----
        parts = []
        acc = None
        for h in range(nh):
            out_h = jnp.dot(alpha[h], hp[:, h * f_out:(h + 1) * f_out],
                            preferred_element_type=jnp.float32)
            if cfg["concat"]:
                parts.append(out_h)
            else:
                out_h = out_h + (skip[:, h * f_out:(h + 1) * f_out]
                                 if skip is not None else x)
                acc = out_h if acc is None else acc + out_h

        if cfg["concat"]:
            # Assemble all heads lane-dense, add skip + bias full-width.
            val = jnp.concatenate(parts, axis=-1)             # (N, NH*F)
            val = val + (skip if skip is not None
                         else jnp.concatenate([x] * nh, axis=-1))
            val = val + bias
        else:                                                 # last layer: mean heads
            val = acc * jnp.float32(1.0 / nh) + bias
        if cfg["apply_act"]:                                  # ELU on hidden layers
            val = jnp.where(val > 0.0, val,
                            jnp.exp(jnp.minimum(val, 0.0)) - 1.0)
        x = val
        head_off += nh

    out_ref[...] = x          # single store of the final (N, F_out) features


def gat_model_forward(params, data):
    node_feats, adj, edge_feats = data
    n = node_feats.shape[0]
    e_dim = edge_feats.shape[-1]

    # Pre-cast the dominant tensor to bf16 in the WRAPPER (halves its DMA and
    # removes the in-kernel cast pass); concatenate all layers' edge-attention
    # weights so the kernel contracts the (N*N, E) tensor exactly once.
    ef_bf = edge_feats.reshape(n * n, e_dim).astype(jnp.bfloat16)
    we_all_bf = jnp.concatenate(
        [p["w_edge_t"] for p in params], axis=1).astype(jnp.bfloat16)

    cfgs = tuple(dict(num_heads=p["num_heads"], f_out=p["f_out"],
                      concat=p["concat"], apply_act=p["apply_act"],
                      use_skip_proj=p["use_skip_proj"]) for p in params)
    total_heads = sum(p["num_heads"] for p in params)
    last = params[-1]
    out_dim = (last["num_heads"] * last["f_out"] if last["concat"]
               else last["f_out"])

    flat_weights = []
    for p in params:
        flat_weights += [p["w_fused"], p["bias"]]

    vmem = pl.BlockSpec(memory_space=pltpu.MemorySpace.VMEM)
    kernel = functools.partial(_gat_model_kernel, layer_cfgs=cfgs,
                               total_heads=total_heads)
    # Whole-resident design (<1 MiB of VMEM at these shapes): default scoped
    # VMEM limits are ample on every generation, so no explicit override.
    return pl.pallas_call(
        kernel,
        out_shape=jax.ShapeDtypeStruct((n, out_dim), jnp.float32),
        in_specs=[vmem] * (4 + len(flat_weights)),
        out_specs=vmem,
    )(node_feats, adj, ef_bf, we_all_bf, *flat_weights)


def init_gat_params(key, num_in, num_hidden, num_out, num_layers, num_heads,
                    edge_dim):
    heads = [1] + [num_heads] * num_layers
    feats = [num_in] + [num_hidden] * (num_layers - 1) + [num_out]
    layers = []
    for i in range(num_layers):
        f_in = feats[i] * heads[i]
        f_out = feats[i + 1]
        nh = heads[i + 1]
        concat = i < num_layers - 1
        use_skip_proj = (f_in != f_out)
        key, k1, k2, k3, k4, k5 = jax.random.split(key, 6)
        s_in = 1.0 / jnp.sqrt(jnp.float32(f_in))
        s_out = 1.0 / jnp.sqrt(jnp.float32(f_out))
        s_e = 1.0 / jnp.sqrt(jnp.float32(edge_dim))
        out_dim = nh * f_out if concat else f_out

        w = jax.random.normal(k1, (f_in, nh * f_out), jnp.float32) * s_in
        a_tgt = jax.random.normal(k2, (nh, f_out), jnp.float32) * s_out
        a_src = jax.random.normal(k3, (nh, f_out), jnp.float32) * s_out
        w_edge = jax.random.normal(k4, (nh, edge_dim), jnp.float32) * s_e
        skip_w = jax.random.normal(k5, (f_in, nh * f_out), jnp.float32) * s_in

        # Block-diagonal attention matrix so per-head score reductions become
        # part of the single fused projection: scores = x @ (w @ attn_mat).
        eye = jnp.eye(nh, dtype=jnp.float32)
        attn_mat = jnp.concatenate(
            [(a_tgt[:, :, None] * eye[:, None, :]).reshape(nh * f_out, nh),
             (a_src[:, :, None] * eye[:, None, :]).reshape(nh * f_out, nh)],
            axis=1)                                           # (NH*F, 2*NH)
        # Fused projection weights: [ w | w@attn_mat | skip_w ].
        fused_cols = [w, jnp.dot(w, attn_mat)]
        if use_skip_proj:
            fused_cols.append(skip_w)
        w_fused = jnp.concatenate(fused_cols, axis=1)

        layers.append(dict(
            w_fused=w_fused,                                  # (F_in, fused)
            w_edge_t=jnp.transpose(w_edge),                   # (E, NH)
            bias=jnp.zeros((1, out_dim), jnp.float32),
            num_heads=nh, f_out=f_out, concat=concat,
            apply_act=concat,                 # ELU on all but the last layer
            use_skip_proj=use_skip_proj,
        ))
    return layers


if __name__ == "__main__":
    N = 16                                   # number of graph nodes
    NUM_IN, NUM_HID, NUM_OUT = 32, 16, 8
    NUM_LAYERS, NUM_HEADS = 2, 4
    EDGE_DIM = 144

    key = jax.random.PRNGKey(0)
    kx, ka, ke, kp = jax.random.split(key, 4)
    x = jax.random.normal(kx, (N, NUM_IN), jnp.float32)
    adj = (jax.random.uniform(ka, (N, N)) < 0.4).astype(jnp.float32)
    adj = jnp.maximum(adj, jnp.eye(N, dtype=jnp.float32))     # self-loops
    ef = jax.random.normal(ke, (N, N, EDGE_DIM), jnp.float32)

    params = init_gat_params(kp, NUM_IN, NUM_HID, NUM_OUT, NUM_LAYERS,
                             NUM_HEADS, EDGE_DIM)

    out = gat_model_forward(params, (x, adj, ef))
    out = jax.block_until_ready(out)
    assert out.shape == (N, NUM_OUT), out.shape
    assert bool(jnp.all(jnp.isfinite(out)))
    print("KERNEL_OK")
</pallas_src>

<mosaic_0001>
module attributes {stable_mosaic.version = 11 : i64} {
  func.func @_gat_model_kernel(%arg0: memref<16x32xf32, #tpu.memory_space<vmem>>, %arg1: memref<16x16xf32, #tpu.memory_space<vmem>>, %arg2: memref<256x144xbf16, #tpu.memory_space<vmem>>, %arg3: memref<144x8xbf16, #tpu.memory_space<vmem>>, %arg4: memref<32x136xf32, #tpu.memory_space<vmem>>, %arg5: memref<1x64xf32, #tpu.memory_space<vmem>>, %arg6: memref<64x72xf32, #tpu.memory_space<vmem>>, %arg7: memref<1x8xf32, #tpu.memory_space<vmem>>, %arg8: memref<16x8xf32, #tpu.memory_space<vmem>>) attributes {dimension_semantics = [], scalar_prefetch = 0 : i64, scratch_operands = 0 : i64, tpu.core_type = #tpu.core_type<tc>} {
    %c0 = arith.constant 0 : index
    %c0_0 = arith.constant 0 : index
    %0 = vector.load %arg0[%c0, %c0_0] : memref<16x32xf32, #tpu.memory_space<vmem>>, vector<16x32xf32>
    %c0_1 = arith.constant 0 : index
    %c0_2 = arith.constant 0 : index
    %1 = vector.load %arg1[%c0_1, %c0_2] : memref<16x16xf32, #tpu.memory_space<vmem>>, vector<16x16xf32>
    %cst = arith.constant 0.000000e+00 : f32
    %2 = vector.broadcast %cst : f32 to vector<16x16xf32>
    %3 = arith.cmpf ogt, %1, %2 : vector<16x16xf32>
    %cst_3 = arith.constant 0.000000e+00 : f32
    %cst_4 = arith.constant -1.000000e+30 : f32
    %4 = vector.broadcast %cst_3 : f32 to vector<16x16xf32>
    %5 = vector.broadcast %cst_4 : f32 to vector<16x16xf32>
    %6 = arith.select %3, %4, %5 : vector<16x16xi1>, vector<16x16xf32>
    %7 = vector.shape_cast %6 : vector<16x16xf32> to vector<1x16x16xf32>
    %c0_5 = arith.constant 0 : index
    %c0_6 = arith.constant 0 : index
    %8 = vector.load %arg2[%c0_5, %c0_6] : memref<256x144xbf16, #tpu.memory_space<vmem>>, vector<256x144xbf16>
    %c0_7 = arith.constant 0 : index
    %c0_8 = arith.constant 0 : index
    %9 = vector.load %arg3[%c0_7, %c0_8] : memref<144x8xbf16, #tpu.memory_space<vmem>>, vector<144x8xbf16>
    %cst_9 = arith.constant dense<0.000000e+00> : vector<256x8xf32>
    %10 = tpu.matmul %8, %9, %cst_9 {dimension_numbers = #tpu.dot_dimension_numbers<[1], [0], [0], [1], [0, 0, 1, 1], [], []>} : vector<256x144xbf16>, vector<144x8xbf16>, vector<256x8xf32> -> vector<256x8xf32>
    %11 = vector.shape_cast %10 : vector<256x8xf32> to vector<16x16x8xf32>
    %c0_10 = arith.constant 0 : index
    %c0_11 = arith.constant 0 : index
    %12 = vector.load %arg4[%c0_10, %c0_11] : memref<32x136xf32, #tpu.memory_space<vmem>>, vector<32x136xf32>
    %cst_12 = arith.constant dense<0.000000e+00> : vector<16x136xf32>
    %13 = tpu.matmul %0, %12, %cst_12 {dimension_numbers = #tpu.dot_dimension_numbers<[1], [0], [0], [1], [0, 0, 1, 1], [], []>} : vector<16x32xf32>, vector<32x136xf32>, vector<16x136xf32> -> vector<16x136xf32>
    %14 = vector.extract_strided_slice %13 {offsets = [0, 0], sizes = [16, 64], strides = [1, 1]} : vector<16x136xf32> to vector<16x64xf32>
    %15 = vector.extract_strided_slice %13 {offsets = [0, 64], sizes = [16, 8], strides = [1, 1]} : vector<16x136xf32> to vector<16x8xf32>
    %16 = tpu.transpose %15, [1, 0] : vector<16x8xf32> -> vector<8x16xf32>
    %17 = vector.extract_strided_slice %16 {offsets = [0, 0], sizes = [4, 16], strides = [1, 1]} : vector<8x16xf32> to vector<4x16xf32>
    %18 = vector.extract_strided_slice %16 {offsets = [4, 0], sizes = [4, 16], strides = [1, 1]} : vector<8x16xf32> to vector<4x16xf32>
    %19 = vector.extract_strided_slice %13 {offsets = [0, 72], sizes = [16, 64], strides = [1, 1]} : vector<16x136xf32> to vector<16x64xf32>
    %c0_13 = arith.constant 0 : index
    %c0_14 = arith.constant 0 : index
    %20 = vector.load %arg5[%c0_13, %c0_14] : memref<1x64xf32, #tpu.memory_space<vmem>>, vector<1x64xf32>
    %21 = vector.extract_strided_slice %11 {offsets = [0, 0, 0], sizes = [16, 16, 1], strides = [1, 1, 1]} : vector<16x16x8xf32> to vector<16x16x1xf32>
    %22 = vector.shape_cast %21 : vector<16x16x1xf32> to vector<16x16xf32>
    %23 = vector.extract_strided_slice %11 {offsets = [0, 0, 1], sizes = [16, 16, 1], strides = [1, 1, 1]} : vector<16x16x8xf32> to vector<16x16x1xf32>
    %24 = vector.shape_cast %23 : vector<16x16x1xf32> to vector<16x16xf32>
    %25 = vector.extract_strided_slice %11 {offsets = [0, 0, 2], sizes = [16, 16, 1], strides = [1, 1, 1]} : vector<16x16x8xf32> to vector<16x16x1xf32>
    %26 = vector.shape_cast %25 : vector<16x16x1xf32> to vector<16x16xf32>
    %27 = vector.extract_strided_slice %11 {offsets = [0, 0, 3], sizes = [16, 16, 1], strides = [1, 1, 1]} : vector<16x16x8xf32> to vector<16x16x1xf32>
    %28 = vector.shape_cast %27 : vector<16x16x1xf32> to vector<16x16xf32>
    %29 = vector.shape_cast %22 : vector<16x16xf32> to vector<1x16x16xf32>
    %30 = vector.shape_cast %24 : vector<16x16xf32> to vector<1x16x16xf32>
    %31 = vector.shape_cast %26 : vector<16x16xf32> to vector<1x16x16xf32>
    %32 = vector.shape_cast %28 : vector<16x16xf32> to vector<1x16x16xf32>
    %33 = tpu.concatenate %29, %30, %31, %32 in 0 : vector<1x16x16xf32>, vector<1x16x16xf32>, vector<1x16x16xf32>, vector<1x16x16xf32> -> vector<4x16x16xf32>
    %34 = vector.shape_cast %17 : vector<4x16xf32> to vector<4x16x1xf32>
    %35 = vector.shape_cast %18 : vector<4x16xf32> to vector<4x1x16xf32>
    %36 = vector.broadcast %34 : vector<4x16x1xf32> to vector<4x16x16xf32>
    %37 = vector.broadcast %35 : vector<4x1x16xf32> to vector<4x16x16xf32>
    %38 = arith.addf %36, %37 : vector<4x16x16xf32>
    %39 = arith.addf %38, %33 : vector<4x16x16xf32>
    %cst_15 = arith.constant 0.000000e+00 : f32
    %40 = vector.broadcast %cst_15 : f32 to vector<4x16x16xf32>
    %41 = arith.cmpf oge, %39, %40 : vector<4x16x16xf32>
    %cst_16 = arith.constant 2.000000e-01 : f32
    %42 = vector.broadcast %cst_16 : f32 to vector<4x16x16xf32>
    %43 = arith.mulf %42, %39 : vector<4x16x16xf32>
    %44 = arith.select %41, %39, %43 : vector<4x16x16xi1>, vector<4x16x16xf32>
    %45 = vector.broadcast %7 : vector<1x16x16xf32> to vector<4x16x16xf32>
    %46 = arith.addf %44, %45 : vector<4x16x16xf32>
    %cst_17 = arith.constant dense<0xFF800000> : vector<4x16xf32>
    %47 = vector.multi_reduction <maximumf>, %46, %cst_17 [2] : vector<4x16x16xf32> to vector<4x16xf32>
    %48 = vector.shape_cast %47 : vector<4x16xf32> to vector<4x16x1xf32>
    %49 = vector.broadcast %48 : vector<4x16x1xf32> to vector<4x16x16xf32>
    %50 = arith.subf %46, %49 : vector<4x16x16xf32>
    %51 = math.exp %50 : vector<4x16x16xf32>
    %cst_18 = arith.constant dense<0.000000e+00> : vector<4x16xf32>
    %52 = vector.multi_reduction <add>, %51, %cst_18 [2] : vector<4x16x16xf32> to vector<4x16xf32>
    %53 = vector.shape_cast %52 : vector<4x16xf32> to vector<4x16x1xf32>
    %cst_19 = arith.constant 1.000000e-16 : f32
    %54 = vector.broadcast %cst_19 : f32 to vector<4x16x1xf32>
    %55 = arith.addf %53, %54 : vector<4x16x1xf32>
    %56 = tpu.reciprocal %55 {approx = true} : vector<4x16x1xf32> -> vector<4x16x1xf32>
    %57 = vector.broadcast %56 : vector<4x16x1xf32> to vector<4x16x16xf32>
    %58 = arith.mulf %51, %57 : vector<4x16x16xf32>
    %59 = vector.extract_strided_slice %58 {offsets = [0, 0, 0], sizes = [1, 16, 16], strides = [1, 1, 1]} : vector<4x16x16xf32> to vector<1x16x16xf32>
    %60 = vector.shape_cast %59 : vector<1x16x16xf32> to vector<16x16xf32>
    %61 = vector.extract_strided_slice %14 {offsets = [0, 0], sizes = [16, 16], strides = [1, 1]} : vector<16x64xf32> to vector<16x16xf32>
    %cst_20 = arith.constant dense<0.000000e+00> : vector<16x16xf32>
    %62 = tpu.matmul %60, %61, %cst_20 {dimension_numbers = #tpu.dot_dimension_numbers<[1], [0], [0], [1], [0, 0, 1, 1], [], []>} : vector<16x16xf32>, vector<16x16xf32>, vector<16x16xf32> -> vector<16x16xf32>
    %63 = vector.extract_strided_slice %58 {offsets = [1, 0, 0], sizes = [1, 16, 16], strides = [1, 1, 1]} : vector<4x16x16xf32> to vector<1x16x16xf32>
    %64 = vector.shape_cast %63 : vector<1x16x16xf32> to vector<16x16xf32>
    %65 = vector.extract_strided_slice %14 {offsets = [0, 16], sizes = [16, 16], strides = [1, 1]} : vector<16x64xf32> to vector<16x16xf32>
    %cst_21 = arith.constant dense<0.000000e+00> : vector<16x16xf32>
    %66 = tpu.matmul %64, %65, %cst_21 {dimension_numbers = #tpu.dot_dimension_numbers<[1], [0], [0], [1], [0, 0, 1, 1], [], []>} : vector<16x16xf32>, vector<16x16xf32>, vector<16x16xf32> -> vector<16x16xf32>
    %67 = vector.extract_strided_slice %58 {offsets = [2, 0, 0], sizes = [1, 16, 16], strides = [1, 1, 1]} : vector<4x16x16xf32> to vector<1x16x16xf32>
    %68 = vector.shape_cast %67 : vector<1x16x16xf32> to vector<16x16xf32>
    %69 = vector.extract_strided_slice %14 {offsets = [0, 32], sizes = [16, 16], strides = [1, 1]} : vector<16x64xf32> to vector<16x16xf32>
    %cst_22 = arith.constant dense<0.000000e+00> : vector<16x16xf32>
    %70 = tpu.matmul %68, %69, %cst_22 {dimension_numbers = #tpu.dot_dimension_numbers<[1], [0], [0], [1], [0, 0, 1, 1], [], []>} : vector<16x16xf32>, vector<16x16xf32>, vector<16x16xf32> -> vector<16x16xf32>
    %71 = vector.extract_strided_slice %58 {offsets = [3, 0, 0], sizes = [1, 16, 16], strides = [1, 1, 1]} : vector<4x16x16xf32> to vector<1x16x16xf32>
    %72 = vector.shape_cast %71 : vector<1x16x16xf32> to vector<16x16xf32>
    %73 = vector.extract_strided_slice %14 {offsets = [0, 48], sizes = [16, 16], strides = [1, 1]} : vector<16x64xf32> to vector<16x16xf32>
    %cst_23 = arith.constant dense<0.000000e+00> : vector<16x16xf32>
    %74 = tpu.matmul %72, %73, %cst_23 {dimension_numbers = #tpu.dot_dimension_numbers<[1], [0], [0], [1], [0, 0, 1, 1], [], []>} : vector<16x16xf32>, vector<16x16xf32>, vector<16x16xf32> -> vector<16x16xf32>
    %75 = tpu.concatenate %62, %66, %70, %74 in 1 : vector<16x16xf32>, vector<16x16xf32>, vector<16x16xf32>, vector<16x16xf32> -> vector<16x64xf32>
    %76 = arith.addf %75, %19 : vector<16x64xf32>
    %77 = vector.broadcast %20 : vector<1x64xf32> to vector<16x64xf32>
    %78 = arith.addf %76, %77 : vector<16x64xf32>
    %cst_24 = arith.constant 0.000000e+00 : f32
    %79 = vector.broadcast %cst_24 : f32 to vector<16x64xf32>
    %80 = arith.cmpf ogt, %78, %79 : vector<16x64xf32>
    %cst_25 = arith.constant 0.000000e+00 : f32
    %81 = vector.broadcast %cst_25 : f32 to vector<16x64xf32>
    %82 = arith.minimumf %78, %81 : vector<16x64xf32>
    %83 = math.exp %82 : vector<16x64xf32>
    %cst_26 = arith.constant 1.000000e+00 : f32
    %84 = vector.broadcast %cst_26 : f32 to vector<16x64xf32>
    %85 = arith.subf %83, %84 : vector<16x64xf32>
    %86 = arith.select %80, %78, %85 : vector<16x64xi1>, vector<16x64xf32>
    %c0_27 = arith.constant 0 : index
    %c0_28 = arith.constant 0 : index
    %87 = vector.load %arg6[%c0_27, %c0_28] : memref<64x72xf32, #tpu.memory_space<vmem>>, vector<64x72xf32>
    %cst_29 = arith.constant dense<0.000000e+00> : vector<16x72xf32>
    %88 = tpu.matmul %86, %87, %cst_29 {dimension_numbers = #tpu.dot_dimension_numbers<[1], [0], [0], [1], [0, 0, 1, 1], [], []>} : vector<16x64xf32>, vector<64x72xf32>, vector<16x72xf32> -> vector<16x72xf32>
    %89 = vector.extract_strided_slice %88 {offsets = [0, 0], sizes = [16, 32], strides = [1, 1]} : vector<16x72xf32> to vector<16x32xf32>
    %90 = vector.extract_strided_slice %88 {offsets = [0, 32], sizes = [16, 8], strides = [1, 1]} : vector<16x72xf32> to vector<16x8xf32>
    %91 = tpu.transpose %90, [1, 0] : vector<16x8xf32> -> vector<8x16xf32>
    %92 = vector.extract_strided_slice %91 {offsets = [0, 0], sizes = [4, 16], strides = [1, 1]} : vector<8x16xf32> to vector<4x16xf32>
    %93 = vector.extract_strided_slice %91 {offsets = [4, 0], sizes = [4, 16], strides = [1, 1]} : vector<8x16xf32> to vector<4x16xf32>
    %94 = vector.extract_strided_slice %88 {offsets = [0, 40], sizes = [16, 32], strides = [1, 1]} : vector<16x72xf32> to vector<16x32xf32>
    %c0_30 = arith.constant 0 : index
    %c0_31 = arith.constant 0 : index
    %95 = vector.load %arg7[%c0_30, %c0_31] : memref<1x8xf32, #tpu.memory_space<vmem>>, vector<1x8xf32>
    %96 = vector.extract_strided_slice %11 {offsets = [0, 0, 4], sizes = [16, 16, 1], strides = [1, 1, 1]} : vector<16x16x8xf32> to vector<16x16x1xf32>
    %97 = vector.shape_cast %96 : vector<16x16x1xf32> to vector<16x16xf32>
    %98 = vector.extract_strided_slice %11 {offsets = [0, 0, 5], sizes = [16, 16, 1], strides = [1, 1, 1]} : vector<16x16x8xf32> to vector<16x16x1xf32>
    %99 = vector.shape_cast %98 : vector<16x16x1xf32> to vector<16x16xf32>
    %100 = vector.extract_strided_slice %11 {offsets = [0, 0, 6], sizes = [16, 16, 1], strides = [1, 1, 1]} : vector<16x16x8xf32> to vector<16x16x1xf32>
    %101 = vector.shape_cast %100 : vector<16x16x1xf32> to vector<16x16xf32>
    %102 = vector.extract_strided_slice %11 {offsets = [0, 0, 7], sizes = [16, 16, 1], strides = [1, 1, 1]} : vector<16x16x8xf32> to vector<16x16x1xf32>
    %103 = vector.shape_cast %102 : vector<16x16x1xf32> to vector<16x16xf32>
    %104 = vector.shape_cast %97 : vector<16x16xf32> to vector<1x16x16xf32>
    %105 = vector.shape_cast %99 : vector<16x16xf32> to vector<1x16x16xf32>
    %106 = vector.shape_cast %101 : vector<16x16xf32> to vector<1x16x16xf32>
    %107 = vector.shape_cast %103 : vector<16x16xf32> to vector<1x16x16xf32>
    %108 = tpu.concatenate %104, %105, %106, %107 in 0 : vector<1x16x16xf32>, vector<1x16x16xf32>, vector<1x16x16xf32>, vector<1x16x16xf32> -> vector<4x16x16xf32>
    %109 = vector.shape_cast %92 : vector<4x16xf32> to vector<4x16x1xf32>
    %110 = vector.shape_cast %93 : vector<4x16xf32> to vector<4x1x16xf32>
    %111 = vector.broadcast %109 : vector<4x16x1xf32> to vector<4x16x16xf32>
    %112 = vector.broadcast %110 : vector<4x1x16xf32> to vector<4x16x16xf32>
    %113 = arith.addf %111, %112 : vector<4x16x16xf32>
    %114 = arith.addf %113, %108 : vector<4x16x16xf32>
    %cst_32 = arith.constant 0.000000e+00 : f32
    %115 = vector.broadcast %cst_32 : f32 to vector<4x16x16xf32>
    %116 = arith.cmpf oge, %114, %115 : vector<4x16x16xf32>
    %cst_33 = arith.constant 2.000000e-01 : f32
    %117 = vector.broadcast %cst_33 : f32 to vector<4x16x16xf32>
    %118 = arith.mulf %117, %114 : vector<4x16x16xf32>
    %119 = arith.select %116, %114, %118 : vector<4x16x16xi1>, vector<4x16x16xf32>
    %120 = vector.broadcast %7 : vector<1x16x16xf32> to vector<4x16x16xf32>
    %121 = arith.addf %119, %120 : vector<4x16x16xf32>
    %cst_34 = arith.constant dense<0xFF800000> : vector<4x16xf32>
    %122 = vector.multi_reduction <maximumf>, %121, %cst_34 [2] : vector<4x16x16xf32> to vector<4x16xf32>
    %123 = vector.shape_cast %122 : vector<4x16xf32> to vector<4x16x1xf32>
    %124 = vector.broadcast %123 : vector<4x16x1xf32> to vector<4x16x16xf32>
    %125 = arith.subf %121, %124 : vector<4x16x16xf32>
    %126 = math.exp %125 : vector<4x16x16xf32>
    %cst_35 = arith.constant dense<0.000000e+00> : vector<4x16xf32>
    %127 = vector.multi_reduction <add>, %126, %cst_35 [2] : vector<4x16x16xf32> to vector<4x16xf32>
    %128 = vector.shape_cast %127 : vector<4x16xf32> to vector<4x16x1xf32>
    %cst_36 = arith.constant 1.000000e-16 : f32
    %129 = vector.broadcast %cst_36 : f32 to vector<4x16x1xf32>
    %130 = arith.addf %128, %129 : vector<4x16x1xf32>
    %131 = tpu.reciprocal %130 {approx = true} : vector<4x16x1xf32> -> vector<4x16x1xf32>
    %132 = vector.broadcast %131 : vector<4x16x1xf32> to vector<4x16x16xf32>
    %133 = arith.mulf %126, %132 : vector<4x16x16xf32>
    %134 = vector.extract_strided_slice %133 {offsets = [0, 0, 0], sizes = [1, 16, 16], strides = [1, 1, 1]} : vector<4x16x16xf32> to vector<1x16x16xf32>
    %135 = vector.shape_cast %134 : vector<1x16x16xf32> to vector<16x16xf32>
    %136 = vector.extract_strided_slice %89 {offsets = [0, 0], sizes = [16, 8], strides = [1, 1]} : vector<16x32xf32> to vector<16x8xf32>
    %cst_37 = arith.constant dense<0.000000e+00> : vector<16x8xf32>
    %137 = tpu.matmul %135, %136, %cst_37 {dimension_numbers = #tpu.dot_dimension_numbers<[1], [0], [0], [1], [0, 0, 1, 1], [], []>} : vector<16x16xf32>, vector<16x8xf32>, vector<16x8xf32> -> vector<16x8xf32>
    %138 = vector.extract_strided_slice %94 {offsets = [0, 0], sizes = [16, 8], strides = [1, 1]} : vector<16x32xf32> to vector<16x8xf32>
    %139 = arith.addf %137, %138 : vector<16x8xf32>
    %140 = vector.extract_strided_slice %133 {offsets = [1, 0, 0], sizes = [1, 16, 16], strides = [1, 1, 1]} : vector<4x16x16xf32> to vector<1x16x16xf32>
    %141 = vector.shape_cast %140 : vector<1x16x16xf32> to vector<16x16xf32>
    %142 = vector.extract_strided_slice %89 {offsets = [0, 8], sizes = [16, 8], strides = [1, 1]} : vector<16x32xf32> to vector<16x8xf32>
    %cst_38 = arith.constant dense<0.000000e+00> : vector<16x8xf32>
    %143 = tpu.matmul %141, %142, %cst_38 {dimension_numbers = #tpu.dot_dimension_numbers<[1], [0], [0], [1], [0, 0, 1, 1], [], []>} : vector<16x16xf32>, vector<16x8xf32>, vector<16x8xf32> -> vector<16x8xf32>
    %144 = vector.extract_strided_slice %94 {offsets = [0, 8], sizes = [16, 8], strides = [1, 1]} : vector<16x32xf32> to vector<16x8xf32>
    %145 = arith.addf %143, %144 : vector<16x8xf32>
    %146 = arith.addf %139, %145 : vector<16x8xf32>
    %147 = vector.extract_strided_slice %133 {offsets = [2, 0, 0], sizes = [1, 16, 16], strides = [1, 1, 1]} : vector<4x16x16xf32> to vector<1x16x16xf32>
    %148 = vector.shape_cast %147 : vector<1x16x16xf32> to vector<16x16xf32>
    %149 = vector.extract_strided_slice %89 {offsets = [0, 16], sizes = [16, 8], strides = [1, 1]} : vector<16x32xf32> to vector<16x8xf32>
    %cst_39 = arith.constant dense<0.000000e+00> : vector<16x8xf32>
    %150 = tpu.matmul %148, %149, %cst_39 {dimension_numbers = #tpu.dot_dimension_numbers<[1], [0], [0], [1], [0, 0, 1, 1], [], []>} : vector<16x16xf32>, vector<16x8xf32>, vector<16x8xf32> -> vector<16x8xf32>
    %151 = vector.extract_strided_slice %94 {offsets = [0, 16], sizes = [16, 8], strides = [1, 1]} : vector<16x32xf32> to vector<16x8xf32>
    %152 = arith.addf %150, %151 : vector<16x8xf32>
    %153 = arith.addf %146, %152 : vector<16x8xf32>
    %154 = vector.extract_strided_slice %133 {offsets = [3, 0, 0], sizes = [1, 16, 16], strides = [1, 1, 1]} : vector<4x16x16xf32> to vector<1x16x16xf32>
    %155 = vector.shape_cast %154 : vector<1x16x16xf32> to vector<16x16xf32>
    %156 = vector.extract_strided_slice %89 {offsets = [0, 24], sizes = [16, 8], strides = [1, 1]} : vector<16x32xf32> to vector<16x8xf32>
    %cst_40 = arith.constant dense<0.000000e+00> : vector<16x8xf32>
    %157 = tpu.matmul %155, %156, %cst_40 {dimension_numbers = #tpu.dot_dimension_numbers<[1], [0], [0], [1], [0, 0, 1, 1], [], []>} : vector<16x16xf32>, vector<16x8xf32>, vector<16x8xf32> -> vector<16x8xf32>
    %158 = vector.extract_strided_slice %94 {offsets = [0, 24], sizes = [16, 8], strides = [1, 1]} : vector<16x32xf32> to vector<16x8xf32>
    %159 = arith.addf %157, %158 : vector<16x8xf32>
    %160 = arith.addf %153, %159 : vector<16x8xf32>
    %cst_41 = arith.constant 2.500000e-01 : f32
    %161 = vector.broadcast %cst_41 : f32 to vector<16x8xf32>
    %162 = arith.mulf %160, %161 : vector<16x8xf32>
    %163 = vector.broadcast %95 : vector<1x8xf32> to vector<16x8xf32>
    %164 = arith.addf %162, %163 : vector<16x8xf32>
    %c0_42 = arith.constant 0 : index
    %c0_43 = arith.constant 0 : index
    %165 = vector.load %arg8[%c0_42, %c0_43] : memref<16x8xf32, #tpu.memory_space<vmem>>, vector<16x8xf32>
    tpu.vector_store %arg8[%c0_42, %c0_43], %164 {strides = array<i32>} : memref<16x8xf32, #tpu.memory_space<vmem>>, vector<16x8xf32>,
    return
  }
}

</mosaic_0001>

<llo_original>
// kernel: tpu_custom_call.1
$region0: #{tpu_custom_call.1}
  #allocation0 [shape = 'u32[]', space=smem, size = 0x4, offset = 0x4, fixed_abs, tag = 'smem constant byte address 0x4 - core index']
  #allocation1 [shape = 'u32[144,128]{1,0:T(1,128)}', space=vmem, size = 0x12000, scoped, tag = 'internal scratch']
  %s0 = inlined_call_operand.vmem [shape: f32[16,32], index: 0, kind: input, shape index: {}]
  %s1 = inlined_call_operand.vmem [shape: f32[16,16], index: 1, kind: input, shape index: {}]
  %s2 = inlined_call_operand.vmem [shape: bf16[256,144], index: 2, kind: input, shape index: {}]
  %s3 = inlined_call_operand.vmem [shape: bf16[144,8], index: 3, kind: input, shape index: {}]
  %s4 = inlined_call_operand.vmem [shape: f32[32,136], index: 4, kind: input, shape index: {}]
  %s5 = inlined_call_operand.vmem [shape: f32[1,64], index: 5, kind: input, shape index: {}]
  %s6 = inlined_call_operand.vmem [shape: f32[64,72], index: 6, kind: input, shape index: {}]
  %s7 = inlined_call_operand.vmem [shape: f32[1,8], index: 7, kind: input, shape index: {}]
  %s8 = inlined_call_operand.vmem [shape: f32[16,8], index: 8, kind: output, shape index: {}]
  %s9 = sld [smem:[#allocation0]]
  $region42: #{tpu_custom_call.1} parent=0
    _
  %s11 = ssub.s32 1, %s9
  %s12 = scalar_select 0, %s11, %s9
  // Predicated region
  $region2: #{tpu_custom_call.1} parent=0 // pred_check
    _
  $region3: #{tpu_custom_call.1} parent=0 // pred_check_branch
    %14 = sbr.rel (0) target = $region5
  $region4: #{tpu_custom_call.1} parent=0 // pred_region
    _
  $region5: #{tpu_custom_call.1} parent=0 // pred_fallthru
    _
  // Predicated region
  $region6: #{tpu_custom_call.1} parent=0 // pred_check
    _
  $region7: #{tpu_custom_call.1} parent=0 // pred_check_branch
    %16 = sbr.rel (0) target = $region9
  $region8: #{tpu_custom_call.1} parent=0 // pred_region
    _
  $region9: #{tpu_custom_call.1} parent=0 // pred_fallthru
    _
  // Predicated region
  $region10: #{tpu_custom_call.1} parent=0 // pred_check
    _
  $region11: #{tpu_custom_call.1} parent=0 // pred_check_branch
    %18 = sbr.rel (0) target = $region13
  $region12: #{tpu_custom_call.1} parent=0 // pred_region
    _
  $region13: #{tpu_custom_call.1} parent=0 // pred_fallthru
    _
  // Predicated region
  $region14: #{tpu_custom_call.1} parent=0 // pred_check
    _
  $region15: #{tpu_custom_call.1} parent=0 // pred_check_branch
    %20 = sbr.rel (0) target = $region17
  $region16: #{tpu_custom_call.1} parent=0 // pred_region
    _
  $region17: #{tpu_custom_call.1} parent=0 // pred_fallthru
    _
  // Predicated region
  $region18: #{tpu_custom_call.1} parent=0 // pred_check
    _
  $region19: #{tpu_custom_call.1} parent=0 // pred_check_branch
    %22 = sbr.rel (0) target = $region21
  $region20: #{tpu_custom_call.1} parent=0 // pred_region
    _
  $region21: #{tpu_custom_call.1} parent=0 // pred_fallthru
    _
  // Predicated region
  $region22: #{tpu_custom_call.1} parent=0 // pred_check
    _
  $region23: #{tpu_custom_call.1} parent=0 // pred_check_branch
    %24 = sbr.rel (0) target = $region25
  $region24: #{tpu_custom_call.1} parent=0 // pred_region
    _
  $region25: #{tpu_custom_call.1} parent=0 // pred_fallthru
    _
  // Predicated region
  $region26: #{tpu_custom_call.1} parent=0 // pred_check
    _
  $region27: #{tpu_custom_call.1} parent=0 // pred_check_branch
    %26 = sbr.rel (0) target = $region29
  $region28: #{tpu_custom_call.1} parent=0 // pred_region
    _
  $region29: #{tpu_custom_call.1} parent=0 // pred_fallthru
    _
  // Predicated region
  $region30: #{tpu_custom_call.1} parent=0 // pred_check
    _
  $region31: #{tpu_custom_call.1} parent=0 // pred_check_branch
    %28 = sbr.rel (0) target = $region33
  $region32: #{tpu_custom_call.1} parent=0 // pred_region
    _
  $region33: #{tpu_custom_call.1} parent=0 // pred_fallthru
    _
  %v30 = vld [vmem:[%s0] sm:$0xff]
  %v31 = vld [vmem:[%s0 + $0x8] sm:$0xff]
  %v32 = vld [vmem:[%s1] sm:$0xff]
  %v33 = vld [vmem:[%s1 + $0x8] sm:$0xff]
  %vm34 = vcmp.gt.f32.partialorder %v32, 0.0
  %vm35 = vcmp.gt.f32.partialorder %v33, 0.0
  %v36 = vsel %vm34, 0.0, -1e+30
  %v37 = vsel %vm35, 0.0, -1e+30
  %v38 = vld [vmem:[%s2] sm:$0xff]
  %v39 = vld [vmem:[%s2 + $0x8] sm:$0xff]
  %v40 = vld [vmem:[%s2 + $0x10] sm:$0xff]
  %v41 = vld [vmem:[%s2 + $0x18] sm:$0xff]
  %v42 = vld [vmem:[%s2 + $0x20] sm:$0xff]
  %v43 = vld [vmem:[%s2 + $0x28] sm:$0xff]
  %v44 = vld [vmem:[%s2 + $0x30] sm:$0xff]
  %v45 = vld [vmem:[%s2 + $0x38] sm:$0xff]
  %v46 = vld [vmem:[%s2 + $0x40] sm:$0xff]
  %v47 = vld [vmem:[%s2 + $0x48] sm:$0xff]
  %v48 = vld [vmem:[%s2 + $0x50] sm:$0xff]
  %v49 = vld [vmem:[%s2 + $0x58] sm:$0xff]
  %v50 = vld [vmem:[%s2 + $0x60] sm:$0xff]
  %v51 = vld [vmem:[%s2 + $0x68] sm:$0xff]
  %v52 = vld [vmem:[%s2 + $0x70] sm:$0xff]
  %v53 = vld [vmem:[%s2 + $0x78] sm:$0xff]
  %v54 = vld [vmem:[%s2 + $0x80] sm:$0xff]
  %v55 = vld [vmem:[%s2 + $0x88] sm:$0xff]
  %v56 = vld [vmem:[%s2 + $0x90] sm:$0xff]
  %v57 = vld [vmem:[%s2 + $0x98] sm:$0xff]
  %v58 = vld [vmem:[%s2 + $0xa0] sm:$0xff]
  %v59 = vld [vmem:[%s2 + $0xa8] sm:$0xff]
  %v60 = vld [vmem:[%s2 + $0xb0] sm:$0xff]
  %v61 = vld [vmem:[%s2 + $0xb8] sm:$0xff]
  %v62 = vld [vmem:[%s2 + $0xc0] sm:$0xff]
  %v63 = vld [vmem:[%s2 + $0xc8] sm:$0xff]
  %v64 = vld [vmem:[%s2 + $0xd0] sm:$0xff]
  %v65 = vld [vmem:[%s2 + $0xd8] sm:$0xff]
  %v66 = vld [vmem:[%s2 + $0xe0] sm:$0xff]
  %v67 = vld [vmem:[%s2 + $0xe8] sm:$0xff]
  %v68 = vld [vmem:[%s2 + $0xf0] sm:$0xff]
  %v69 = vld [vmem:[%s2 + $0xf8] sm:$0xff]
  %v70 = vld [vmem:[%s3] sm:$0xf]
  %v71 = vld [vmem:[%s3 + $0x4] sm:$0xf]
  %v72 = vld [vmem:[%s3 + $0x8] sm:$0xf]
  %v73 = vld [vmem:[%s3 + $0xc] sm:$0xf]
  %v74 = vld [vmem:[%s3 + $0x10] sm:$0xf]
  %v75 = vld [vmem:[%s3 + $0x14] sm:$0xf]
  %v76 = vld [vmem:[%s3 + $0x18] sm:$0xf]
  %v77 = vld [vmem:[%s3 + $0x1c] sm:$0xf]
  %v78 = vld [vmem:[%s3 + $0x20] sm:$0xf]
  %v79 = vld [vmem:[%s3 + $0x24] sm:$0xf]
  %v80 = vld [vmem:[%s3 + $0x28] sm:$0xf]
  %v81 = vld [vmem:[%s3 + $0x2c] sm:$0xf]
  %v82 = vld [vmem:[%s3 + $0x30] sm:$0xf]
  %v83 = vld [vmem:[%s3 + $0x34] sm:$0xf]
  %v84 = vld [vmem:[%s3 + $0x38] sm:$0xf]
  %v85 = vld [vmem:[%s3 + $0x3c] sm:$0xf]
  %v86 = vld [vmem:[%s3 + $0x40] sm:$0xf]
  %v87 = vld [vmem:[%s3 + $0x44] sm:$0xf]
  %v120 = vunpack.c.l.b16 %v38
  %v121 = vunpack.c.h.b16 %v38
  %v122 = vunpack.c.l.b16 %v39
  %v123 = vunpack.c.h.b16 %v39
  %v124 = vunpack.c.l.b16 %v40
  %v125 = vunpack.c.h.b16 %v40
  %v126 = vunpack.c.l.b16 %v41
  %v127 = vunpack.c.h.b16 %v41
  %v128 = vunpack.c.l.b16 %v42
  %v129 = vunpack.c.h.b16 %v42
  %v130 = vunpack.c.l.b16 %v43
  %v131 = vunpack.c.h.b16 %v43
  %v132 = vunpack.c.l.b16 %v44
  %v133 = vunpack.c.h.b16 %v44
  %v134 = vunpack.c.l.b16 %v45
  %v135 = vunpack.c.h.b16 %v45
  %v136 = vunpack.c.l.b16 %v46
  %v137 = vunpack.c.h.b16 %v46
  %v138 = vunpack.c.l.b16 %v47
  %v139 = vunpack.c.h.b16 %v47
  %v140 = vunpack.c.l.b16 %v48
  %v141 = vunpack.c.h.b16 %v48
  %v142 = vunpack.c.l.b16 %v49
  %v143 = vunpack.c.h.b16 %v49
  %v144 = vunpack.c.l.b16 %v50
  %v145 = vunpack.c.h.b16 %v50
  %v146 = vunpack.c.l.b16 %v51
  %v147 = vunpack.c.h.b16 %v51
  %v148 = vunpack.c.l.b16 %v52
  %v149 = vunpack.c.h.b16 %v52
  %v150 = vunpack.c.l.b16 %v53
  %v151 = vunpack.c.h.b16 %v53
  %v152 = vunpack.c.l.b16 %v54
  %v153 = vunpack.c.h.b16 %v54
  %v154 = vunpack.c.l.b16 %v55
  %v155 = vunpack.c.h.b16 %v55
  %v156 = vunpack.c.l.b16 %v56
  %v157 = vunpack.c.h.b16 %v56
  %v158 = vunpack.c.l.b16 %v57
  %v159 = vunpack.c.h.b16 %v57
  %v160 = vunpack.c.l.b16 %v58
  %v161 = vunpack.c.h.b16 %v58
  %v162 = vunpack.c.l.b16 %v59
  %v163 = vunpack.c.h.b16 %v59
  %v164 = vunpack.c.l.b16 %v60
  %v165 = vunpack.c.h.b16 %v60
  %v166 = vunpack.c.l.b16 %v61
  %v167 = vunpack.c.h.b16 %v61
  %v168 = vunpack.c.l.b16 %v62
  %v169 = vunpack.c.h.b16 %v62
  %v170 = vunpack.c.l.b16 %v63
  %v171 = vunpack.c.h.b16 %v63
  %v172 = vunpack.c.l.b16 %v64
  %v173 = vunpack.c.h.b16 %v64
  %v174 = vunpack.c.l.b16 %v65
  %v175 = vunpack.c.h.b16 %v65
  %v176 = vunpack.c.l.b16 %v66
  %v177 = vunpack.c.h.b16 %v66
  %v178 = vunpack.c.l.b16 %v67
  %v179 = vunpack.c.h.b16 %v67
  %v180 = vunpack.c.l.b16 %v68
  %v181 = vunpack.c.h.b16 %v68
  %v182 = vunpack.c.l.b16 %v69
  %v183 = vunpack.c.h.b16 %v69
  %v184 = vpack.c.b16 %v122, %v120
  %v185 = vpack.c.b16 %v123, %v121
  %v186 = vpack.c.b16 %v126, %v124
  %v187 = vpack.c.b16 %v127, %v125
  %v188 = vpack.c.b16 %v130, %v128
  %v189 = vpack.c.b16 %v131, %v129
  %v190 = vpack.c.b16 %v134, %v132
  %v191 = vpack.c.b16 %v135, %v133
  %v192 = vpack.c.b16 %v138, %v136
  %v193 = vpack.c.b16 %v139, %v137
  %v194 = vpack.c.b16 %v142, %v140
  %v195 = vpack.c.b16 %v143, %v141
  %v196 = vpack.c.b16 %v146, %v144
  %v197 = vpack.c.b16 %v147, %v145
  %v198 = vpack.c.b16 %v150, %v148
  %v199 = vpack.c.b16 %v151, %v149
  %v200 = vpack.c.b16 %v154, %v152
  %v201 = vpack.c.b16 %v155, %v153
  %v202 = vpack.c.b16 %v158, %v156
  %v203 = vpack.c.b16 %v159, %v157
  %v204 = vpack.c.b16 %v162, %v160
  %v205 = vpack.c.b16 %v163, %v161
  %v206 = vpack.c.b16 %v166, %v164
  %v207 = vpack.c.b16 %v167, %v165
  %v208 = vpack.c.b16 %v170, %v168
  %v209 = vpack.c.b16 %v171, %v169
  %v210 = vpack.c.b16 %v174, %v172
  %v211 = vpack.c.b16 %v175, %v173
  %v212 = vpack.c.b16 %v178, %v176
  %v213 = vpack.c.b16 %v179, %v177
  %v214 = vpack.c.b16 %v182, %v180
  %v215 = vpack.c.b16 %v183, %v181
  %v250 = vunpack.c.l.b16 %v70
  %v251 = vunpack.c.l.b16 %v71
  %v252 = vunpack.c.l.b16 %v72
  %v253 = vunpack.c.l.b16 %v73
  %v254 = vunpack.c.l.b16 %v74
  %v255 = vunpack.c.l.b16 %v75
  %v256 = vunpack.c.l.b16 %v76
  %v257 = vunpack.c.l.b16 %v77
  %v258 = vunpack.c.l.b16 %v78
  %v259 = vunpack.c.l.b16 %v79
  %v260 = vunpack.c.l.b16 %v80
  %v261 = vunpack.c.l.b16 %v81
  %v262 = vunpack.c.l.b16 %v82
  %v263 = vunpack.c.l.b16 %v83
  %v264 = vunpack.c.l.b16 %v84
  %v265 = vunpack.c.l.b16 %v85
  %v266 = vunpack.c.l.b16 %v86
  %v267 = vunpack.c.l.b16 %v87
  %v268 = vpack.c.b16 %v251, %v250
  %v269 = vpack.c.b16 %v253, %v252
  %v270 = vpack.c.b16 %v255, %v254
  %v271 = vpack.c.b16 %v257, %v256
  %v272 = vpack.c.b16 %v259, %v258
  %v273 = vpack.c.b16 %v261, %v260
  %v274 = vpack.c.b16 %v263, %v262
  %v275 = vpack.c.b16 %v265, %v264
  %v276 = vpack.c.b16 %v267, %v266
  %vm286 = vcmask 130048
  %v288 = vsel %vm286, %v185, 0
  %v291 = vsel %vm286, %v187, 0
  %v294 = vsel %vm286, %v189, 0
  %v297 = vsel %vm286, %v191, 0
  %v300 = vsel %vm286, %v193, 0
  %v303 = vsel %vm286, %v195, 0
  %v306 = vsel %vm286, %v197, 0
  %v309 = vsel %vm286, %v199, 0
  %v312 = vsel %vm286, %v201, 0
  %v315 = vsel %vm286, %v203, 0
  %v318 = vsel %vm286, %v205, 0
  %v321 = vsel %vm286, %v207, 0
  %v324 = vsel %vm286, %v209, 0
  %v327 = vsel %vm286, %v211, 0
  %v330 = vsel %vm286, %v213, 0
  %v333 = vsel %vm286, %v215, 0
  %335 = vmatprep.subr.bf16.mxu0 0
  %336 = vmatpush1.bf16.msra.mxu0 %v268
  %337 = vmatprep.subr.bf16.mxu0 0
  %338 = vmatpush1.bf16.msra.mxu0 %v269
  %339 = vmatprep.subr.bf16.mxu0 0
  %340 = vmatpush1.bf16.msra.mxu0 %v270
  %341 = vmatprep.subr.bf16.mxu0 0
  %342 = vmatpush1.bf16.msra.mxu0 %v271
  %343 = vmatprep.subr.bf16.mxu0 0
  %344 = vmatpush1.bf16.msra.mxu0 %v272
  %345 = vmatprep.subr.bf16.mxu0 0
  %346 = vmatpush1.bf16.msra.mxu0 %v273
  %347 = vmatprep.subr.bf16.mxu0 0
  %348 = vmatpush1.bf16.msra.mxu0 %v274
  %349 = vmatprep.subr.bf16.mxu0 0
  %350 = vmatpush1.bf16.msra.mxu0 %v275
  %351 = vmatprep.subr.bf16.mxu0 0
  %352 = vmatpush1.bf16.msra.mxu0 %v276
  %353 = vmatprep.subr.bf16.mxu0 0
  %354 = vmatpush1.bf16.msra.mxu0 0
  %355 = vmatprep.subr.bf16.mxu0 0
  %356 = vmatpush1.bf16.msra.mxu0 0
  %357 = vmatprep.subr.bf16.mxu0 0
  %358 = vmatpush1.bf16.msra.mxu0 0
  %359 = vmatprep.subr.bf16.mxu0 0
  %360 = vmatpush1.bf16.msra.mxu0 0
  %361 = vmatprep.subr.bf16.mxu0 0
  %362 = vmatpush1.bf16.msra.mxu0 0
  %363 = vmatprep.subr.bf16.mxu0 0
  %364 = vmatpush1.bf16.msra.mxu0 0
  %365 = vmatprep.subr.bf16.mxu0 0
  %366 = vmatpush1.bf16.msra.mxu0 0
  %367 = vmatprep.mubr.bf16.mxu0 %v288
  %368 = vmatmul.mubr.bf16.gmra.mrb[0].mxu0 %v184
  %v369 = vpop.f32.mrb[0].mxu0
  %v370 = vadd.f32 0.0, %v369
  %v371 = vpop.f32.mrb[0].mxu0
  %v372 = vpop.f32.mrb[0].mxu0
  %v373 = vadd.f32 0.0, %v372
  %v374 = vpop.f32.mrb[0].mxu0
  %375 = vmatprep.mubr.bf16.mxu0 %v291
  %376 = vmatmul.mubr.bf16.gmra.mrb[0].mxu0 %v186
  %v377 = vpop.f32.mrb[0].mxu0
  %v378 = vadd.f32 0.0, %v377
  %v379 = vpop.f32.mrb[0].mxu0
  %v380 = vpop.f32.mrb[0].mxu0
  %v381 = vadd.f32 0.0, %v380
  %v382 = vpop.f32.mrb[0].mxu0
  %383 = vmatprep.mubr.bf16.mxu0 %v294
  %384 = vmatmul.mubr.bf16.gmra.mrb[0].mxu0 %v188
  %v385 = vpop.f32.mrb[0].mxu0
  %v386 = vadd.f32 0.0, %v385
  %v387 = vpop.f32.mrb[0].mxu0
  %v388 = vpop.f32.mrb[0].mxu0
  %v389 = vadd.f32 0.0, %v388
  %v390 = vpop.f32.mrb[0].mxu0
  %391 = vmatprep.mubr.bf16.mxu0 %v297
  %392 = vmatmul.mubr.bf16.gmra.mrb[0].mxu0 %v190
  %v393 = vpop.f32.mrb[0].mxu0
  %v394 = vadd.f32 0.0, %v393
  %v395 = vpop.f32.mrb[0].mxu0
  %v396 = vpop.f32.mrb[0].mxu0
  %v397 = vadd.f32 0.0, %v396
  %v398 = vpop.f32.mrb[0].mxu0
  %399 = vmatprep.mubr.bf16.mxu0 %v300
  %400 = vmatmul.mubr.bf16.gmra.mrb[0].mxu0 %v192
  %v401 = vpop.f32.mrb[0].mxu0
  %v402 = vadd.f32 0.0, %v401
  %v403 = vpop.f32.mrb[0].mxu0
  %v404 = vpop.f32.mrb[0].mxu0
  %v405 = vadd.f32 0.0, %v404
  %v406 = vpop.f32.mrb[0].mxu0
  %407 = vmatprep.mubr.bf16.mxu0 %v303
  %408 = vmatmul.mubr.bf16.gmra.mrb[0].mxu0 %v194
  %v409 = vpop.f32.mrb[0].mxu0
  %v410 = vadd.f32 0.0, %v409
  %v411 = vpop.f32.mrb[0].mxu0
  %v412 = vpop.f32.mrb[0].mxu0
  %v413 = vadd.f32 0.0, %v412
  %v414 = vpop.f32.mrb[0].mxu0
  %415 = vmatprep.mubr.bf16.mxu0 %v306
  %416 = vmatmul.mubr.bf16.gmra.mrb[0].mxu0 %v196
  %v417 = vpop.f32.mrb[0].mxu0
  %v418 = vadd.f32 0.0, %v417
  %v419 = vpop.f32.mrb[0].mxu0
  %v420 = vpop.f32.mrb[0].mxu0
  %v421 = vadd.f32 0.0, %v420
  %v422 = vpop.f32.mrb[0].mxu0
  %423 = vmatprep.mubr.bf16.mxu0 %v309
  %424 = vmatmul.mubr.bf16.gmra.mrb[0].mxu0 %v198
  %v425 = vpop.f32.mrb[0].mxu0
  %v426 = vadd.f32 0.0, %v425
  %v427 = vpop.f32.mrb[0].mxu0
  %v428 = vpop.f32.mrb[0].mxu0
  %v429 = vadd.f32 0.0, %v428
  %v430 = vpop.f32.mrb[0].mxu0
  %431 = vmatprep.mubr.bf16.mxu0 %v312
  %432 = vmatmul.mubr.bf16.gmra.mrb[0].mxu0 %v200
  %v433 = vpop.f32.mrb[0].mxu0
  %v434 = vadd.f32 0.0, %v433
  %v435 = vpop.f32.mrb[0].mxu0
  %v436 = vpop.f32.mrb[0].mxu0
  %v437 = vadd.f32 0.0, %v436
  %v438 = vpop.f32.mrb[0].mxu0
  %439 = vmatprep.mubr.bf16.mxu0 %v315
  %440 = vmatmul.mubr.bf16.gmra.mrb[0].mxu0 %v202
  %v441 = vpop.f32.mrb[0].mxu0
  %v442 = vadd.f32 0.0, %v441
  %v443 = vpop.f32.mrb[0].mxu0
  %v444 = vpop.f32.mrb[0].mxu0
  %v445 = vadd.f32 0.0, %v444
  %v446 = vpop.f32.mrb[0].mxu0
  %447 = vmatprep.mubr.bf16.mxu0 %v318
  %448 = vmatmul.mubr.bf16.gmra.mrb[0].mxu0 %v204
  %v449 = vpop.f32.mrb[0].mxu0
  %v450 = vadd.f32 0.0, %v449
  %v451 = vpop.f32.mrb[0].mxu0
  %v452 = vpop.f32.mrb[0].mxu0
  %v453 = vadd.f32 0.0, %v452
  %v454 = vpop.f32.mrb[0].mxu0
  %455 = vmatprep.mubr.bf16.mxu0 %v321
  %456 = vmatmul.mubr.bf16.gmra.mrb[0].mxu0 %v206
  %v457 = vpop.f32.mrb[0].mxu0
  %v458 = vadd.f32 0.0, %v457
  %v459 = vpop.f32.mrb[0].mxu0
  %v460 = vpop.f32.mrb[0].mxu0
  %v461 = vadd.f32 0.0, %v460
  %v462 = vpop.f32.mrb[0].mxu0
  %463 = vmatprep.mubr.bf16.mxu0 %v324
  %464 = vmatmul.mubr.bf16.gmra.mrb[0].mxu0 %v208
  %v465 = vpop.f32.mrb[0].mxu0
  %v466 = vadd.f32 0.0, %v465
  %v467 = vpop.f32.mrb[0].mxu0
  %v468 = vpop.f32.mrb[0].mxu0
  %v469 = vadd.f32 0.0, %v468
  %v470 = vpop.f32.mrb[0].mxu0
  %471 = vmatprep.mubr.bf16.mxu0 %v327
  %472 = vmatmul.mubr.bf16.gmra.mrb[0].mxu0 %v210
  %v473 = vpop.f32.mrb[0].mxu0
  %v474 = vadd.f32 0.0, %v473
  %v475 = vpop.f32.mrb[0].mxu0
  %v476 = vpop.f32.mrb[0].mxu0
  %v477 = vadd.f32 0.0, %v476
  %v478 = vpop.f32.mrb[0].mxu0
  %479 = vmatprep.mubr.bf16.mxu0 %v330
  %480 = vmatmul.mubr.bf16.gmra.mrb[0].mxu0 %v212
  %v481 = vpop.f32.mrb[0].mxu0
  %v482 = vadd.f32 0.0, %v481
  %v483 = vpop.f32.mrb[0].mxu0
  %v484 = vpop.f32.mrb[0].mxu0
  %v485 = vadd.f32 0.0, %v484
  %v486 = vpop.f32.mrb[0].mxu0
  %487 = vmatprep.mubr.bf16.mxu0 %v333
  %488 = vmatmul.mubr.bf16.gmra.mrb[0].mxu0 %v214
  %v489 = vpop.f32.mrb[0].mxu0
  %v490 = vadd.f32 0.0, %v489
  %v491 = vpop.f32.mrb[0].mxu0
  %v492 = vpop.f32.mrb[0].mxu0
  %v493 = vadd.f32 0.0, %v492
  %v494 = vpop.f32.mrb[0].mxu0
  %495 = vdwg.mxu0
  %v496 = vld [vmem:[%s4] sm:$0xff]
  %v497 = vld [vmem:[%s4 + $0x8] sm:$0xff]
  %v498 = vld [vmem:[%s4 + $0x10] sm:$0xff]
  %v499 = vld [vmem:[%s4 + $0x18] sm:$0xff]
  %v500 = vld [vmem:[%s4 + $0x20] sm:$0xff]
  %v501 = vld [vmem:[%s4 + $0x28] sm:$0xff]
  %v502 = vld [vmem:[%s4 + $0x30] sm:$0xff]
  %v503 = vld [vmem:[%s4 + $0x38] sm:$0xff]
  %vm504 = vcmask 261120
  %v506 = vsel %vm504, %v30, 0
  %v509 = vsel %vm504, %v31, 0
  %511 = vmatprep.subr.mxu0 %v497
  %512 = vmatpush1.msra.mxu0 %v496
  %513 = vmatprep.subr.mxu0 %v499
  %514 = vmatpush1.msra.mxu0 %v498
  %515 = vmatprep.subr.mxu0 %v501
  %516 = vmatpush1.msra.mxu0 %v500
  %517 = vmatprep.subr.mxu0 %v503
  %518 = vmatpush1.msra.mxu0 %v502
  %519 = vmatprep.subr.mxu0 0.0
  %520 = vmatpush1.msra.mxu0 0.0
  %521 = vmatprep.subr.mxu0 0.0
  %522 = vmatpush1.msra.mxu0 0.0
  %523 = vmatprep.subr.mxu0 0.0
  %524 = vmatpush1.msra.mxu0 0.0
  %525 = vmatprep.subr.mxu0 0.0
  %526 = vmatpush1.msra.mxu0 0.0
  %527 = vmatprep.subr.mxu0 0.0
  %528 = vmatpush1.msra.mxu0 0.0
  %529 = vmatprep.subr.mxu0 0.0
  %530 = vmatpush1.msra.mxu0 0.0
  %531 = vmatprep.subr.mxu0 0.0
  %532 = vmatpush1.msra.mxu0 0.0
  %533 = vmatprep.subr.mxu0 0.0
  %534 = vmatpush1.msra.mxu0 0.0
  %535 = vmatprep.subr.mxu0 0.0
  %536 = vmatpush1.msra.mxu0 0.0
  %537 = vmatprep.subr.mxu0 0.0
  %538 = vmatpush1.msra.mxu0 0.0
  %539 = vmatprep.subr.mxu0 0.0
  %540 = vmatpush1.msra.mxu0 0.0
  %541 = vmatprep.subr.mxu0 0.0
  %542 = vmatpush1.msra.mxu0 0.0
  %543 = vmatprep.subr.mxu0 0.0
  %544 = vmatpush1.msra.mxu0 0.0
  %545 = vmatprep.subr.mxu0 0.0
  %546 = vmatpush1.msra.mxu0 0.0
  %547 = vmatprep.subr.mxu0 0.0
  %548 = vmatpush1.msra.mxu0 0.0
  %549 = vmatprep.subr.mxu0 0.0
  %550 = vmatpush1.msra.mxu0 0.0
  %551 = vmatprep.subr.mxu0 0.0
  %552 = vmatpush1.msra.mxu0 0.0
  %553 = vmatprep.subr.mxu0 0.0
  %554 = vmatpush1.msra.mxu0 0.0
  %555 = vmatprep.subr.mxu0 0.0
  %556 = vmatpush1.msra.mxu0 0.0
  %557 = vmatprep.subr.mxu0 0.0
  %558 = vmatpush1.msra.mxu0 0.0
  %559 = vmatprep.subr.mxu0 0.0
  %560 = vmatpush1.msra.mxu0 0.0
  %561 = vmatprep.subr.mxu0 0.0
  %562 = vmatpush1.msra.mxu0 0.0
  %563 = vmatprep.subr.mxu0 0.0
  %564 = vmatpush1.msra.mxu0 0.0
  %565 = vmatprep.subr.mxu0 0.0
  %566 = vmatpush1.msra.mxu0 0.0
  %567 = vmatprep.subr.mxu0 0.0
  %568 = vmatpush1.msra.mxu0 0.0
  %569 = vmatprep.subr.mxu0 0.0
  %570 = vmatpush1.msra.mxu0 0.0
  %571 = vmatprep.subr.mxu0 0.0
  %572 = vmatpush1.msra.mxu0 0.0
  %573 = vmatprep.subr.mxu0 0.0
  %574 = vmatpush1.msra.mxu0 0.0
  %575 = vmatprep.mubr.f32.mxu0 0.0
  %576 = vmatmul.mubr.f32.gmra.mrb[0].mxu0 %v506
  %v577 = vpop.f32.mrb[0].mxu0
  %v578 = vadd.f32 0.0, %v577
  %v579 = vpop.f32.mrb[0].mxu0
  %v580 = vadd.f32 0.0, %v579
  %581 = vmatprep.mubr.f32.mxu0 0.0
  %582 = vmatmul.mubr.f32.gmra.mrb[0].mxu0 %v509
  %v583 = vpop.f32.mrb[0].mxu0
  %v584 = vadd.f32 0.0, %v583
  %v585 = vpop.f32.mrb[0].mxu0
  %v586 = vadd.f32 0.0, %v585
  %587 = vdwg.mxu0
  %590 = vrot.lane.b32.xlu0 %v578, 64
  %v591 = vpop.permute.xlu0 %590
  %592 = vrot.lane.b32.xlu0 %v584, 64
  %v593 = vpop.permute.xlu0 %592
  %596 = vxpose.xlu0.b32.start [1/16] %v591, 128
  %597 = vxpose.xlu0.b32.cont [2/16] %v593, 128
  %598 = vxpose.xlu0.b32.cont [3/16] 0.0, 128
  %599 = vxpose.xlu0.b32.cont [4/16] 0.0, 128
  %600 = vxpose.xlu0.b32.cont [5/16] 0.0, 128
  %601 = vxpose.xlu0.b32.cont [6/16] 0.0, 128
  %602 = vxpose.xlu0.b32.cont [7/16] 0.0, 128
  %603 = vxpose.xlu0.b32.cont [8/16] 0.0, 128
  %604 = vxpose.xlu0.b32.cont [9/16] 0.0, 128
  %605 = vxpose.xlu0.b32.cont [10/16] 0.0, 128
  %606 = vxpose.xlu0.b32.cont [11/16] 0.0, 128
  %607 = vxpose.xlu0.b32.cont [12/16] 0.0, 128
  %608 = vxpose.xlu0.b32.cont [13/16] 0.0, 128
  %609 = vxpose.xlu0.b32.cont [14/16] 0.0, 128
  %610 = vxpose.xlu0.b32.cont [15/16] 0.0, 128
  %611 = vxpose.xlu0.b32.end [16/16] 0.0, 128
  %v612 = vpop.trf.xlu0
  %v613 = vpop.trf.xlu0
  %v614 = vpop.trf.xlu0
  %v615 = vpop.trf.xlu0
  %v616 = vpop.trf.xlu0
  %v617 = vpop.trf.xlu0
  %v618 = vpop.trf.xlu0
  %v619 = vpop.trf.xlu0
  %v620 = vpop.trf.xlu0
  %v621 = vpop.trf.xlu0
  %v622 = vpop.trf.xlu0
  %v623 = vpop.trf.xlu0
  %v624 = vpop.trf.xlu0
  %v625 = vpop.trf.xlu0
  %v626 = vpop.trf.xlu0
  %v627 = vpop.trf.xlu0
  %v628 = vld [vmem:[%s5] sm:$0x1]
  %661 = vrot.lane.b32.xlu0 %v370, 127
  %v662 = vpop.permute.xlu0 %661
  %663 = vrot.lane.b32.xlu0 %v373, 127
  %v664 = vpop.permute.xlu0 %663
  %665 = vrot.lane.b32.xlu0 %v378, 127
  %v666 = vpop.permute.xlu0 %665
  %667 = vrot.lane.b32.xlu0 %v381, 127
  %v668 = vpop.permute.xlu0 %667
  %669 = vrot.lane.b32.xlu0 %v386, 127
  %v670 = vpop.permute.xlu0 %669
  %671 = vrot.lane.b32.xlu0 %v389, 127
  %v672 = vpop.permute.xlu0 %671
  %673 = vrot.lane.b32.xlu0 %v394, 127
  %v674 = vpop.permute.xlu0 %673
  %675 = vrot.lane.b32.xlu0 %v397, 127
  %v676 = vpop.permute.xlu0 %675
  %677 = vrot.lane.b32.xlu0 %v402, 127
  %v678 = vpop.permute.xlu0 %677
  %679 = vrot.lane.b32.xlu0 %v405, 127
  %v680 = vpop.permute.xlu0 %679
  %681 = vrot.lane.b32.xlu0 %v410, 127
  %v682 = vpop.permute.xlu0 %681
  %683 = vrot.lane.b32.xlu0 %v413, 127
  %v684 = vpop.permute.xlu0 %683
  %685 = vrot.lane.b32.xlu0 %v418, 127
  %v686 = vpop.permute.xlu0 %685
  %687 = vrot.lane.b32.xlu0 %v421, 127
  %v688 = vpop.permute.xlu0 %687
  %689 = vrot.lane.b32.xlu0 %v426, 127
  %v690 = vpop.permute.xlu0 %689
  %691 = vrot.lane.b32.xlu0 %v429, 127
  %v692 = vpop.permute.xlu0 %691
  %693 = vrot.lane.b32.xlu0 %v434, 127
  %v694 = vpop.permute.xlu0 %693
  %695 = vrot.lane.b32.xlu0 %v437, 127
  %v696 = vpop.permute.xlu0 %695
  %697 = vrot.lane.b32.xlu0 %v442, 127
  %v698 = vpop.permute.xlu0 %697
  %699 = vrot.lane.b32.xlu0 %v445, 127
  %v700 = vpop.permute.xlu0 %699
  %701 = vrot.lane.b32.xlu0 %v450, 127
  %v702 = vpop.permute.xlu0 %701
  %703 = vrot.lane.b32.xlu0 %v453, 127
  %v704 = vpop.permute.xlu0 %703
  %705 = vrot.lane.b32.xlu0 %v458, 127
  %v706 = vpop.permute.xlu0 %705
  %707 = vrot.lane.b32.xlu0 %v461, 127
  %v708 = vpop.permute.xlu0 %707
  %709 = vrot.lane.b32.xlu0 %v466, 127
  %v710 = vpop.permute.xlu0 %709
  %711 = vrot.lane.b32.xlu0 %v469, 127
  %v712 = vpop.permute.xlu0 %711
  %713 = vrot.lane.b32.xlu0 %v474, 127
  %v714 = vpop.permute.xlu0 %713
  %715 = vrot.lane.b32.xlu0 %v477, 127
  %v716 = vpop.permute.xlu0 %715
  %717 = vrot.lane.b32.xlu0 %v482, 127
  %v718 = vpop.permute.xlu0 %717
  %719 = vrot.lane.b32.xlu0 %v485, 127
  %v720 = vpop.permute.xlu0 %719
  %721 = vrot.lane.b32.xlu0 %v490, 127
  %v722 = vpop.permute.xlu0 %721
  %723 = vrot.lane.b32.xlu0 %v493, 127
  %v724 = vpop.permute.xlu0 %723
  %725 = vrot.lane.b32.xlu0 %v370, 126
  %v726 = vpop.permute.xlu0 %725
  %727 = vrot.lane.b32.xlu0 %v373, 126
  %v728 = vpop.permute.xlu0 %727
  %729 = vrot.lane.b32.xlu0 %v378, 126
  %v730 = vpop.permute.xlu0 %729
  %731 = vrot.lane.b32.xlu0 %v381, 126
  %v732 = vpop.permute.xlu0 %731
  %733 = vrot.lane.b32.xlu0 %v386, 126
  %v734 = vpop.permute.xlu0 %733
  %735 = vrot.lane.b32.xlu0 %v389, 126
  %v736 = vpop.permute.xlu0 %735
  %737 = vrot.lane.b32.xlu0 %v394, 126
  %v738 = vpop.permute.xlu0 %737
  %739 = vrot.lane.b32.xlu0 %v397, 126
  %v740 = vpop.permute.xlu0 %739
  %741 = vrot.lane.b32.xlu0 %v402, 126
  %v742 = vpop.permute.xlu0 %741
  %743 = vrot.lane.b32.xlu0 %v405, 126
  %v744 = vpop.permute.xlu0 %743
  %745 = vrot.lane.b32.xlu0 %v410, 126
  %v746 = vpop.permute.xlu0 %745
  %747 = vrot.lane.b32.xlu0 %v413, 126
  %v748 = vpop.permute.xlu0 %747
  %749 = vrot.lane.b32.xlu0 %v418, 126
  %v750 = vpop.permute.xlu0 %749
  %751 = vrot.lane.b32.xlu0 %v421, 126
  %v752 = vpop.permute.xlu0 %751
  %753 = vrot.lane.b32.xlu0 %v426, 126
  %v754 = vpop.permute.xlu0 %753
  %755 = vrot.lane.b32.xlu0 %v429, 126
  %v756 = vpop.permute.xlu0 %755
  %757 = vrot.lane.b32.xlu0 %v434, 126
  %v758 = vpop.permute.xlu0 %757
  %759 = vrot.lane.b32.xlu0 %v437, 126
  %v760 = vpop.permute.xlu0 %759
  %761 = vrot.lane.b32.xlu0 %v442, 126
  %v762 = vpop.permute.xlu0 %761
  %763 = vrot.lane.b32.xlu0 %v445, 126
  %v764 = vpop.permute.xlu0 %763
  %765 = vrot.lane.b32.xlu0 %v450, 126
  %v766 = vpop.permute.xlu0 %765
  %767 = vrot.lane.b32.xlu0 %v453, 126
  %v768 = vpop.permute.xlu0 %767
  %769 = vrot.lane.b32.xlu0 %v458, 126
  %v770 = vpop.permute.xlu0 %769
  %771 = vrot.lane.b32.xlu0 %v461, 126
  %v772 = vpop.permute.xlu0 %771
  %773 = vrot.lane.b32.xlu0 %v466, 126
  %v774 = vpop.permute.xlu0 %773
  %775 = vrot.lane.b32.xlu0 %v469, 126
  %v776 = vpop.permute.xlu0 %775
  %777 = vrot.lane.b32.xlu0 %v474, 126
  %v778 = vpop.permute.xlu0 %777
  %779 = vrot.lane.b32.xlu0 %v477, 126
  %v780 = vpop.permute.xlu0 %779
  %781 = vrot.lane.b32.xlu0 %v482, 126
  %v782 = vpop.permute.xlu0 %781
  %783 = vrot.lane.b32.xlu0 %v485, 126
  %v784 = vpop.permute.xlu0 %783
  %785 = vrot.lane.b32.xlu0 %v490, 126
  %v786 = vpop.permute.xlu0 %785
  %787 = vrot.lane.b32.xlu0 %v493, 126
  %v788 = vpop.permute.xlu0 %787
  %789 = vrot.lane.b32.xlu0 %v370, 125
  %v790 = vpop.permute.xlu0 %789
  %791 = vrot.lane.b32.xlu0 %v373, 125
  %v792 = vpop.permute.xlu0 %791
  %793 = vrot.lane.b32.xlu0 %v378, 125
  %v794 = vpop.permute.xlu0 %793
  %795 = vrot.lane.b32.xlu0 %v381, 125
  %v796 = vpop.permute.xlu0 %795
  %797 = vrot.lane.b32.xlu0 %v386, 125
  %v798 = vpop.permute.xlu0 %797
  %799 = vrot.lane.b32.xlu0 %v389, 125
  %v800 = vpop.permute.xlu0 %799
  %801 = vrot.lane.b32.xlu0 %v394, 125
  %v802 = vpop.permute.xlu0 %801
  %803 = vrot.lane.b32.xlu0 %v397, 125
  %v804 = vpop.permute.xlu0 %803
  %805 = vrot.lane.b32.xlu0 %v402, 125
  %v806 = vpop.permute.xlu0 %805
  %807 = vrot.lane.b32.xlu0 %v405, 125
  %v808 = vpop.permute.xlu0 %807
  %809 = vrot.lane.b32.xlu0 %v410, 125
  %v810 = vpop.permute.xlu0 %809
  %811 = vrot.lane.b32.xlu0 %v413, 125
  %v812 = vpop.permute.xlu0 %811
  %813 = vrot.lane.b32.xlu0 %v418, 125
  %v814 = vpop.permute.xlu0 %813
  %815 = vrot.lane.b32.xlu0 %v421, 125
  %v816 = vpop.permute.xlu0 %815
  %817 = vrot.lane.b32.xlu0 %v426, 125
  %v818 = vpop.permute.xlu0 %817
  %819 = vrot.lane.b32.xlu0 %v429, 125
  %v820 = vpop.permute.xlu0 %819
  %821 = vrot.lane.b32.xlu0 %v434, 125
  %v822 = vpop.permute.xlu0 %821
  %823 = vrot.lane.b32.xlu0 %v437, 125
  %v824 = vpop.permute.xlu0 %823
  %825 = vrot.lane.b32.xlu0 %v442, 125
  %v826 = vpop.permute.xlu0 %825
  %827 = vrot.lane.b32.xlu0 %v445, 125
  %v828 = vpop.permute.xlu0 %827
  %829 = vrot.lane.b32.xlu0 %v450, 125
  %v830 = vpop.permute.xlu0 %829
  %831 = vrot.lane.b32.xlu0 %v453, 125
  %v832 = vpop.permute.xlu0 %831
  %833 = vrot.lane.b32.xlu0 %v458, 125
  %v834 = vpop.permute.xlu0 %833
  %835 = vrot.lane.b32.xlu0 %v461, 125
  %v836 = vpop.permute.xlu0 %835
  %837 = vrot.lane.b32.xlu0 %v466, 125
  %v838 = vpop.permute.xlu0 %837
  %839 = vrot.lane.b32.xlu0 %v469, 125
  %v840 = vpop.permute.xlu0 %839
  %841 = vrot.lane.b32.xlu0 %v474, 125
  %v842 = vpop.permute.xlu0 %841
  %843 = vrot.lane.b32.xlu0 %v477, 125
  %v844 = vpop.permute.xlu0 %843
  %845 = vrot.lane.b32.xlu0 %v482, 125
  %v846 = vpop.permute.xlu0 %845
  %847 = vrot.lane.b32.xlu0 %v485, 125
  %v848 = vpop.permute.xlu0 %847
  %849 = vrot.lane.b32.xlu0 %v490, 125
  %v850 = vpop.permute.xlu0 %849
  %851 = vrot.lane.b32.xlu0 %v493, 125
  %v852 = vpop.permute.xlu0 %851
  %v853 = vlaneseq
  %v854 = vshrl.u32 %v853, 7
  %v855 = vsub.s32 0, %v854
  %v856 = vrot.slane %v612, %v855
  %858 = vbcast.lane.b32.xlu0 %v856, 256
  %v859 = vpop.permute.xlu0 %858
  %s861 = sor.u32 256, 8
  %862 = vbcast.lane.b32.xlu0 %v856, %s861
  %v863 = vpop.permute.xlu0 %862
  %v864 = vlaneseq
  %v865 = vshrl.u32 %v864, 7
  %v866 = vsub.s32 1, %v865
  %v867 = vrot.slane %v612, %v866
  %869 = vbcast.lane.b32.xlu0 %v867, 256
  %v870 = vpop.permute.xlu0 %869
  %s872 = sor.u32 256, 8
  %873 = vbcast.lane.b32.xlu0 %v867, %s872
  %v874 = vpop.permute.xlu0 %873
  %v875 = vlaneseq
  %v876 = vshrl.u32 %v875, 7
  %v877 = vsub.s32 2, %v876
  %v878 = vrot.slane %v612, %v877
  %880 = vbcast.lane.b32.xlu0 %v878, 256
  %v881 = vpop.permute.xlu0 %880
  %s883 = sor.u32 256, 8
  %884 = vbcast.lane.b32.xlu0 %v878, %s883
  %v885 = vpop.permute.xlu0 %884
  %v886 = vlaneseq
  %v887 = vshrl.u32 %v886, 7
  %v888 = vsub.s32 3, %v887
  %v889 = vrot.slane %v612, %v888
  %891 = vbcast.lane.b32.xlu0 %v889, 256
  %v892 = vpop.permute.xlu0 %891
  %s894 = sor.u32 256, 8
  %895 = vbcast.lane.b32.xlu0 %v889, %s894
  %v896 = vpop.permute.xlu0 %895
  %v898 = vcombine.high %v612, %v612
  %v900 = vunpack.c.l.s4 1966171168
  %v901 = vunpack.c.0.s8 %v900
  %v902 = vlaneseq
  %v903 = vshrl.u32 %v902, 7
  %v904 = vsub.s32 %v901, %v903
  %v905 = vrot.slane %v898, %v904
  %v906 = vcombine.high %v905, %v905
  %v908 = vunpack.c.l.s4 1966171168
  %v909 = vunpack.c.0.s8 %v908
  %v910 = vlaneseq
  %v911 = vshrl.u32 %v910, 7
  %v912 = vsub.s32 %v909, %v911
  %v913 = vrot.slane %v905, %v912
  %v915 = vunpack.c.l.s4 1966171168
  %v916 = vunpack.c.0.s8 %v915
  %v917 = vlaneseq
  %v918 = vshrl.u32 %v917, 7
  %v919 = vsub.s32 %v916, %v918
  %v920 = vrot.slane %v906, %v919
  %v921 = vcombine.high %v913, %v913
  %v922 = vcombine.high %v920, %v920
  %v923 = vlaneseq
  %v924 = vshrl.u32 %v923, 7
  %v925 = vsub.s32 0, %v924
  %v926 = vrot.slane %v913, %v925
  %v927 = vlaneseq
  %v928 = vshrl.u32 %v927, 7
  %v929 = vsub.s32 0, %v928
  %v930 = vrot.slane %v920, %v929
  %v931 = vlaneseq
  %v932 = vshrl.u32 %v931, 7
  %v933 = vsub.s32 0, %v932
  %v934 = vrot.slane %v921, %v933
  %v935 = vlaneseq
  %v936 = vshrl.u32 %v935, 7
  %v937 = vsub.s32 0, %v936
  %v938 = vrot.slane %v922, %v937
  %v943 = vadd.f32 %v859, %v926
  %v944 = vadd.f32 %v863, %v926
  %v945 = vadd.f32 %v870, %v930
  %v946 = vadd.f32 %v874, %v930
  %v947 = vadd.f32 %v881, %v934
  %v948 = vadd.f32 %v885, %v934
  %v949 = vadd.f32 %v892, %v938
  %v950 = vadd.f32 %v896, %v938
  %951 = vset.pattern.permute.xlu0 0
  %952 = vperm.xlu0 %951, %v370
  %v953 = vpop.permute.xlu0 %952
  %954 = vset.pattern.permute.xlu0 0
  %955 = vperm.xlu0 %954, %v373
  %v956 = vpop.permute.xlu0 %955
  %957 = vset.pattern.permute.xlu0 0
  %958 = vperm.xlu0 %957, %v378
  %v959 = vpop.permute.xlu0 %958
  %960 = vset.pattern.permute.xlu0 0
  %961 = vperm.xlu0 %960, %v381
  %v962 = vpop.permute.xlu0 %961
  %963 = vset.pattern.permute.xlu0 0
  %964 = vperm.xlu0 %963, %v386
  %v965 = vpop.permute.xlu0 %964
  %966 = vset.pattern.permute.xlu0 0
  %967 = vperm.xlu0 %966, %v389
  %v968 = vpop.permute.xlu0 %967
  %969 = vset.pattern.permute.xlu0 0
  %970 = vperm.xlu0 %969, %v394
  %v971 = vpop.permute.xlu0 %970
  %972 = vset.pattern.permute.xlu0 0
  %973 = vperm.xlu0 %972, %v397
  %v974 = vpop.permute.xlu0 %973
  %975 = vset.pattern.permute.xlu0 0
  %976 = vperm.xlu0 %975, %v402
  %v977 = vpop.permute.xlu0 %976
  %978 = vset.pattern.permute.xlu0 0
  %979 = vperm.xlu0 %978, %v405
  %v980 = vpop.permute.xlu0 %979
  %981 = vset.pattern.permute.xlu0 0
  %982 = vperm.xlu0 %981, %v410
  %v983 = vpop.permute.xlu0 %982
  %984 = vset.pattern.permute.xlu0 0
  %985 = vperm.xlu0 %984, %v413
  %v986 = vpop.permute.xlu0 %985
  %987 = vset.pattern.permute.xlu0 0
  %988 = vperm.xlu0 %987, %v418
  %v989 = vpop.permute.xlu0 %988
  %990 = vset.pattern.permute.xlu0 0
  %991 = vperm.xlu0 %990, %v421
  %v992 = vpop.permute.xlu0 %991
  %993 = vset.pattern.permute.xlu0 0
  %994 = vperm.xlu0 %993, %v426
  %v995 = vpop.permute.xlu0 %994
  %996 = vset.pattern.permute.xlu0 0
  %997 = vperm.xlu0 %996, %v429
  %v998 = vpop.permute.xlu0 %997
  %999 = vset.pattern.permute.xlu0 0
  %1000 = vperm.xlu0 %999, %v434
  %v1001 = vpop.permute.xlu0 %1000
  %1002 = vset.pattern.permute.xlu0 0
  %1003 = vperm.xlu0 %1002, %v437
  %v1004 = vpop.permute.xlu0 %1003
  %1005 = vset.pattern.permute.xlu0 0
  %1006 = vperm.xlu0 %1005, %v442
  %v1007 = vpop.permute.xlu0 %1006
  %1008 = vset.pattern.permute.xlu0 0
  %1009 = vperm.xlu0 %1008, %v445
  %v1010 = vpop.permute.xlu0 %1009
  %1011 = vset.pattern.permute.xlu0 0
  %1012 = vperm.xlu0 %1011, %v450
  %v1013 = vpop.permute.xlu0 %1012
  %1014 = vset.pattern.permute.xlu0 0
  %1015 = vperm.xlu0 %1014, %v453
  %v1016 = vpop.permute.xlu0 %1015
  %1017 = vset.pattern.permute.xlu0 0
  %1018 = vperm.xlu0 %1017, %v458
  %v1019 = vpop.permute.xlu0 %1018
  %1020 = vset.pattern.permute.xlu0 0
  %1021 = vperm.xlu0 %1020, %v461
  %v1022 = vpop.permute.xlu0 %1021
  %1023 = vset.pattern.permute.xlu0 0
  %1024 = vperm.xlu0 %1023, %v466
  %v1025 = vpop.permute.xlu0 %1024
  %1026 = vset.pattern.permute.xlu0 0
  %1027 = vperm.xlu0 %1026, %v469
  %v1028 = vpop.permute.xlu0 %1027
  %1029 = vset.pattern.permute.xlu0 0
  %1030 = vperm.xlu0 %1029, %v474
  %v1031 = vpop.permute.xlu0 %1030
  %1032 = vset.pattern.permute.xlu0 0
  %1033 = vperm.xlu0 %1032, %v477
  %v1034 = vpop.permute.xlu0 %1033
  %1035 = vset.pattern.permute.xlu0 0
  %1036 = vperm.xlu0 %1035, %v482
  %v1037 = vpop.permute.xlu0 %1036
  %1038 = vset.pattern.permute.xlu0 0
  %1039 = vperm.xlu0 %1038, %v485
  %v1040 = vpop.permute.xlu0 %1039
  %1041 = vset.pattern.permute.xlu0 0
  %1042 = vperm.xlu0 %1041, %v490
  %v1043 = vpop.permute.xlu0 %1042
  %1044 = vset.pattern.permute.xlu0 0
  %1045 = vperm.xlu0 %1044, %v493
  %v1046 = vpop.permute.xlu0 %1045
  %1047 = vset.pattern.permute.xlu0 0
  %1048 = vperm.xlu0 %1047, %v662
  %v1049 = vpop.permute.xlu0 %1048
  %1050 = vset.pattern.permute.xlu0 0
  %1051 = vperm.xlu0 %1050, %v664
  %v1052 = vpop.permute.xlu0 %1051
  %1053 = vset.pattern.permute.xlu0 0
  %1054 = vperm.xlu0 %1053, %v666
  %v1055 = vpop.permute.xlu0 %1054
  %1056 = vset.pattern.permute.xlu0 0
  %1057 = vperm.xlu0 %1056, %v668
  %v1058 = vpop.permute.xlu0 %1057
  %1059 = vset.pattern.permute.xlu0 0
  %1060 = vperm.xlu0 %1059, %v670
  %v1061 = vpop.permute.xlu0 %1060
  %1062 = vset.pattern.permute.xlu0 0
  %1063 = vperm.xlu0 %1062, %v672
  %v1064 = vpop.permute.xlu0 %1063
  %1065 = vset.pattern.permute.xlu0 0
  %1066 = vperm.xlu0 %1065, %v674
  %v1067 = vpop.permute.xlu0 %1066
  %1068 = vset.pattern.permute.xlu0 0
  %1069 = vperm.xlu0 %1068, %v676
  %v1070 = vpop.permute.xlu0 %1069
  %1071 = vset.pattern.permute.xlu0 0
  %1072 = vperm.xlu0 %1071, %v678
  %v1073 = vpop.permute.xlu0 %1072
  %1074 = vset.pattern.permute.xlu0 0
  %1075 = vperm.xlu0 %1074, %v680
  %v1076 = vpop.permute.xlu0 %1075
  %1077 = vset.pattern.permute.xlu0 0
  %1078 = vperm.xlu0 %1077, %v682
  %v1079 = vpop.permute.xlu0 %1078
  %1080 = vset.pattern.permute.xlu0 0
  %1081 = vperm.xlu0 %1080, %v684
  %v1082 = vpop.permute.xlu0 %1081
  %1083 = vset.pattern.permute.xlu0 0
  %1084 = vperm.xlu0 %1083, %v686
  %v1085 = vpop.permute.xlu0 %1084
  %1086 = vset.pattern.permute.xlu0 0
  %1087 = vperm.xlu0 %1086, %v688
  %v1088 = vpop.permute.xlu0 %1087
  %1089 = vset.pattern.permute.xlu0 0
  %1090 = vperm.xlu0 %1089, %v690
  %v1091 = vpop.permute.xlu0 %1090
  %1092 = vset.pattern.permute.xlu0 0
  %1093 = vperm.xlu0 %1092, %v692
  %v1094 = vpop.permute.xlu0 %1093
  %1095 = vset.pattern.permute.xlu0 0
  %1096 = vperm.xlu0 %1095, %v694
  %v1097 = vpop.permute.xlu0 %1096
  %1098 = vset.pattern.permute.xlu0 0
  %1099 = vperm.xlu0 %1098, %v696
  %v1100 = vpop.permute.xlu0 %1099
  %1101 = vset.pattern.permute.xlu0 0
  %1102 = vperm.xlu0 %1101, %v698
  %v1103 = vpop.permute.xlu0 %1102
  %1104 = vset.pattern.permute.xlu0 0
  %1105 = vperm.xlu0 %1104, %v700
  %v1106 = vpop.permute.xlu0 %1105
  %1107 = vset.pattern.permute.xlu0 0
  %1108 = vperm.xlu0 %1107, %v702
  %v1109 = vpop.permute.xlu0 %1108
  %1110 = vset.pattern.permute.xlu0 0
  %1111 = vperm.xlu0 %1110, %v704
  %v1112 = vpop.permute.xlu0 %1111
  %1113 = vset.pattern.permute.xlu0 0
  %1114 = vperm.xlu0 %1113, %v706
  %v1115 = vpop.permute.xlu0 %1114
  %1116 = vset.pattern.permute.xlu0 0
  %1117 = vperm.xlu0 %1116, %v708
  %v1118 = vpop.permute.xlu0 %1117
  %1119 = vset.pattern.permute.xlu0 0
  %1120 = vperm.xlu0 %1119, %v710
  %v1121 = vpop.permute.xlu0 %1120
  %1122 = vset.pattern.permute.xlu0 0
  %1123 = vperm.xlu0 %1122, %v712
  %v1124 = vpop.permute.xlu0 %1123
  %1125 = vset.pattern.permute.xlu0 0
  %1126 = vperm.xlu0 %1125, %v714
  %v1127 = vpop.permute.xlu0 %1126
  %1128 = vset.pattern.permute.xlu0 0
  %1129 = vperm.xlu0 %1128, %v716
  %v1130 = vpop.permute.xlu0 %1129
  %1131 = vset.pattern.permute.xlu0 0
  %1132 = vperm.xlu0 %1131, %v718
  %v1133 = vpop.permute.xlu0 %1132
  %1134 = vset.pattern.permute.xlu0 0
  %1135 = vperm.xlu0 %1134, %v720
  %v1136 = vpop.permute.xlu0 %1135
  %1137 = vset.pattern.permute.xlu0 0
  %1138 = vperm.xlu0 %1137, %v722
  %v1139 = vpop.permute.xlu0 %1138
  %1140 = vset.pattern.permute.xlu0 0
  %1141 = vperm.xlu0 %1140, %v724
  %v1142 = vpop.permute.xlu0 %1141
  %1143 = vset.pattern.permute.xlu0 0
  %1144 = vperm.xlu0 %1143, %v726
  %v1145 = vpop.permute.xlu0 %1144
  %1146 = vset.pattern.permute.xlu0 0
  %1147 = vperm.xlu0 %1146, %v728
  %v1148 = vpop.permute.xlu0 %1147
  %1149 = vset.pattern.permute.xlu0 0
  %1150 = vperm.xlu0 %1149, %v730
  %v1151 = vpop.permute.xlu0 %1150
  %1152 = vset.pattern.permute.xlu0 0
  %1153 = vperm.xlu0 %1152, %v732
  %v1154 = vpop.permute.xlu0 %1153
  %1155 = vset.pattern.permute.xlu0 0
  %1156 = vperm.xlu0 %1155, %v734
  %v1157 = vpop.permute.xlu0 %1156
  %1158 = vset.pattern.permute.xlu0 0
  %1159 = vperm.xlu0 %1158, %v736
  %v1160 = vpop.permute.xlu0 %1159
  %1161 = vset.pattern.permute.xlu0 0
  %1162 = vperm.xlu0 %1161, %v738
  %v1163 = vpop.permute.xlu0 %1162
  %1164 = vset.pattern.permute.xlu0 0
  %1165 = vperm.xlu0 %1164, %v740
  %v1166 = vpop.permute.xlu0 %1165
  %1167 = vset.pattern.permute.xlu0 0
  %1168 = vperm.xlu0 %1167, %v742
  %v1169 = vpop.permute.xlu0 %1168
  %1170 = vset.pattern.permute.xlu0 0
  %1171 = vperm.xlu0 %1170, %v744
  %v1172 = vpop.permute.xlu0 %1171
  %1173 = vset.pattern.permute.xlu0 0
  %1174 = vperm.xlu0 %1173, %v746
  %v1175 = vpop.permute.xlu0 %1174
  %1176 = vset.pattern.permute.xlu0 0
  %1177 = vperm.xlu0 %1176, %v748
  %v1178 = vpop.permute.xlu0 %1177
  %1179 = vset.pattern.permute.xlu0 0
  %1180 = vperm.xlu0 %1179, %v750
  %v1181 = vpop.permute.xlu0 %1180
  %1182 = vset.pattern.permute.xlu0 0
  %1183 = vperm.xlu0 %1182, %v752
  %v1184 = vpop.permute.xlu0 %1183
  %1185 = vset.pattern.permute.xlu0 0
  %1186 = vperm.xlu0 %1185, %v754
  %v1187 = vpop.permute.xlu0 %1186
  %1188 = vset.pattern.permute.xlu0 0
  %1189 = vperm.xlu0 %1188, %v756
  %v1190 = vpop.permute.xlu0 %1189
  %1191 = vset.pattern.permute.xlu0 0
  %1192 = vperm.xlu0 %1191, %v758
  %v1193 = vpop.permute.xlu0 %1192
  %1194 = vset.pattern.permute.xlu0 0
  %1195 = vperm.xlu0 %1194, %v760
  %v1196 = vpop.permute.xlu0 %1195
  %1197 = vset.pattern.permute.xlu0 0
  %1198 = vperm.xlu0 %1197, %v762
  %v1199 = vpop.permute.xlu0 %1198
  %1200 = vset.pattern.permute.xlu0 0
  %1201 = vperm.xlu0 %1200, %v764
  %v1202 = vpop.permute.xlu0 %1201
  %1203 = vset.pattern.permute.xlu0 0
  %1204 = vperm.xlu0 %1203, %v766
  %v1205 = vpop.permute.xlu0 %1204
  %1206 = vset.pattern.permute.xlu0 0
  %1207 = vperm.xlu0 %1206, %v768
  %v1208 = vpop.permute.xlu0 %1207
  %1209 = vset.pattern.permute.xlu0 0
  %1210 = vperm.xlu0 %1209, %v770
  %v1211 = vpop.permute.xlu0 %1210
  %1212 = vset.pattern.permute.xlu0 0
  %1213 = vperm.xlu0 %1212, %v772
  %v1214 = vpop.permute.xlu0 %1213
  %1215 = vset.pattern.permute.xlu0 0
  %1216 = vperm.xlu0 %1215, %v774
  %v1217 = vpop.permute.xlu0 %1216
  %1218 = vset.pattern.permute.xlu0 0
  %1219 = vperm.xlu0 %1218, %v776
  %v1220 = vpop.permute.xlu0 %1219
  %1221 = vset.pattern.permute.xlu0 0
  %1222 = vperm.xlu0 %1221, %v778
  %v1223 = vpop.permute.xlu0 %1222
  %1224 = vset.pattern.permute.xlu0 0
  %1225 = vperm.xlu0 %1224, %v780
  %v1226 = vpop.permute.xlu0 %1225
  %1227 = vset.pattern.permute.xlu0 0
  %1228 = vperm.xlu0 %1227, %v782
  %v1229 = vpop.permute.xlu0 %1228
  %1230 = vset.pattern.permute.xlu0 0
  %1231 = vperm.xlu0 %1230, %v784
  %v1232 = vpop.permute.xlu0 %1231
  %1233 = vset.pattern.permute.xlu0 0
  %1234 = vperm.xlu0 %1233, %v786
  %v1235 = vpop.permute.xlu0 %1234
  %1236 = vset.pattern.permute.xlu0 0
  %1237 = vperm.xlu0 %1236, %v788
  %v1238 = vpop.permute.xlu0 %1237
  %1239 = vset.pattern.permute.xlu0 0
  %1240 = vperm.xlu0 %1239, %v790
  %v1241 = vpop.permute.xlu0 %1240
  %1242 = vset.pattern.permute.xlu0 0
  %1243 = vperm.xlu0 %1242, %v792
  %v1244 = vpop.permute.xlu0 %1243
  %1245 = vset.pattern.permute.xlu0 0
  %1246 = vperm.xlu0 %1245, %v794
  %v1247 = vpop.permute.xlu0 %1246
  %1248 = vset.pattern.permute.xlu0 0
  %1249 = vperm.xlu0 %1248, %v796
  %v1250 = vpop.permute.xlu0 %1249
  %1251 = vset.pattern.permute.xlu0 0
  %1252 = vperm.xlu0 %1251, %v798
  %v1253 = vpop.permute.xlu0 %1252
  %1254 = vset.pattern.permute.xlu0 0
  %1255 = vperm.xlu0 %1254, %v800
  %v1256 = vpop.permute.xlu0 %1255
  %1257 = vset.pattern.permute.xlu0 0
  %1258 = vperm.xlu0 %1257, %v802
  %v1259 = vpop.permute.xlu0 %1258
  %1260 = vset.pattern.permute.xlu0 0
  %1261 = vperm.xlu0 %1260, %v804
  %v1262 = vpop.permute.xlu0 %1261
  %1263 = vset.pattern.permute.xlu0 0
  %1264 = vperm.xlu0 %1263, %v806
  %v1265 = vpop.permute.xlu0 %1264
  %1266 = vset.pattern.permute.xlu0 0
  %1267 = vperm.xlu0 %1266, %v808
  %v1268 = vpop.permute.xlu0 %1267
  %1269 = vset.pattern.permute.xlu0 0
  %1270 = vperm.xlu0 %1269, %v810
  %v1271 = vpop.permute.xlu0 %1270
  %1272 = vset.pattern.permute.xlu0 0
  %1273 = vperm.xlu0 %1272, %v812
  %v1274 = vpop.permute.xlu0 %1273
  %1275 = vset.pattern.permute.xlu0 0
  %1276 = vperm.xlu0 %1275, %v814
  %v1277 = vpop.permute.xlu0 %1276
  %1278 = vset.pattern.permute.xlu0 0
  %1279 = vperm.xlu0 %1278, %v816
  %v1280 = vpop.permute.xlu0 %1279
  %1281 = vset.pattern.permute.xlu0 0
  %1282 = vperm.xlu0 %1281, %v818
  %v1283 = vpop.permute.xlu0 %1282
  %1284 = vset.pattern.permute.xlu0 0
  %1285 = vperm.xlu0 %1284, %v820
  %v1286 = vpop.permute.xlu0 %1285
  %1287 = vset.pattern.permute.xlu0 0
  %1288 = vperm.xlu0 %1287, %v822
  %v1289 = vpop.permute.xlu0 %1288
  %1290 = vset.pattern.permute.xlu0 0
  %1291 = vperm.xlu0 %1290, %v824
  %v1292 = vpop.permute.xlu0 %1291
  %1293 = vset.pattern.permute.xlu0 0
  %1294 = vperm.xlu0 %1293, %v826
  %v1295 = vpop.permute.xlu0 %1294
  %1296 = vset.pattern.permute.xlu0 0
  %1297 = vperm.xlu0 %1296, %v828
  %v1298 = vpop.permute.xlu0 %1297
  %1299 = vset.pattern.permute.xlu0 0
  %1300 = vperm.xlu0 %1299, %v830
  %v1301 = vpop.permute.xlu0 %1300
  %1302 = vset.pattern.permute.xlu0 0
  %1303 = vperm.xlu0 %1302, %v832
  %v1304 = vpop.permute.xlu0 %1303
  %1305 = vset.pattern.permute.xlu0 0
  %1306 = vperm.xlu0 %1305, %v834
  %v1307 = vpop.permute.xlu0 %1306
  %1308 = vset.pattern.permute.xlu0 0
  %1309 = vperm.xlu0 %1308, %v836
  %v1310 = vpop.permute.xlu0 %1309
  %1311 = vset.pattern.permute.xlu0 0
  %1312 = vperm.xlu0 %1311, %v838
  %v1313 = vpop.permute.xlu0 %1312
  %1314 = vset.pattern.permute.xlu0 0
  %1315 = vperm.xlu0 %1314, %v840
  %v1316 = vpop.permute.xlu0 %1315
  %1317 = vset.pattern.permute.xlu0 0
  %1318 = vperm.xlu0 %1317, %v842
  %v1319 = vpop.permute.xlu0 %1318
  %1320 = vset.pattern.permute.xlu0 0
  %1321 = vperm.xlu0 %1320, %v844
  %v1322 = vpop.permute.xlu0 %1321
  %1323 = vset.pattern.permute.xlu0 0
  %1324 = vperm.xlu0 %1323, %v846
  %v1325 = vpop.permute.xlu0 %1324
  %1326 = vset.pattern.permute.xlu0 0
  %1327 = vperm.xlu0 %1326, %v848
  %v1328 = vpop.permute.xlu0 %1327
  %1329 = vset.pattern.permute.xlu0 0
  %1330 = vperm.xlu0 %1329, %v850
  %v1331 = vpop.permute.xlu0 %1330
  %1332 = vset.pattern.permute.xlu0 0
  %1333 = vperm.xlu0 %1332, %v852
  %v1334 = vpop.permute.xlu0 %1333
  %v1335 = vlaneseq
  %v1336 = vand.u32 %v1335, 127
  %v1337 = vlaneseq
  %v1338 = vshrl.u32 %v1337, 7
  %v1339 = vsub.s32 %v1336, %v1338
  %v1340 = vrot.slane %v953, %v1339
  %v1341 = vadd.s32 %v1336, 4294967288
  %v1342 = vlaneseq
  %v1343 = vshrl.u32 %v1342, 7
  %v1344 = vsub.s32 %v1341, %v1343
  %v1345 = vrot.slane %v956, %v1344
  %vm1346 = vcmask 130112
  %v1347 = vsel %vm1346, %v1345, %v1340
  %v1348 = vlaneseq
  %v1349 = vshrl.u32 %v1348, 7
  %v1350 = vsub.s32 %v1336, %v1349
  %v1351 = vrot.slane %v959, %v1350
  %v1352 = vlaneseq
  %v1353 = vshrl.u32 %v1352, 7
  %v1354 = vsub.s32 %v1341, %v1353
  %v1355 = vrot.slane %v962, %v1354
  %v1356 = vsel %vm1346, %v1355, %v1351
  %v1357 = vlaneseq
  %v1358 = vshrl.u32 %v1357, 7
  %v1359 = vsub.s32 %v1336, %v1358
  %v1360 = vrot.slane %v965, %v1359
  %v1361 = vlaneseq
  %v1362 = vshrl.u32 %v1361, 7
  %v1363 = vsub.s32 %v1341, %v1362
  %v1364 = vrot.slane %v968, %v1363
  %v1365 = vsel %vm1346, %v1364, %v1360
  %v1366 = vlaneseq
  %v1367 = vshrl.u32 %v1366, 7
  %v1368 = vsub.s32 %v1336, %v1367
  %v1369 = vrot.slane %v971, %v1368
  %v1370 = vlaneseq
  %v1371 = vshrl.u32 %v1370, 7
  %v1372 = vsub.s32 %v1341, %v1371
  %v1373 = vrot.slane %v974, %v1372
  %v1374 = vsel %vm1346, %v1373, %v1369
  %v1375 = vlaneseq
  %v1376 = vshrl.u32 %v1375, 7
  %v1377 = vsub.s32 %v1336, %v1376
  %v1378 = vrot.slane %v977, %v1377
  %v1379 = vlaneseq
  %v1380 = vshrl.u32 %v1379, 7
  %v1381 = vsub.s32 %v1341, %v1380
  %v1382 = vrot.slane %v980, %v1381
  %v1383 = vsel %vm1346, %v1382, %v1378
  %v1384 = vlaneseq
  %v1385 = vshrl.u32 %v1384, 7
  %v1386 = vsub.s32 %v1336, %v1385
  %v1387 = vrot.slane %v983, %v1386
  %v1388 = vlaneseq
  %v1389 = vshrl.u32 %v1388, 7
  %v1390 = vsub.s32 %v1341, %v1389
  %v1391 = vrot.slane %v986, %v1390
  %v1392 = vsel %vm1346, %v1391, %v1387
  %v1393 = vlaneseq
  %v1394 = vshrl.u32 %v1393, 7
  %v1395 = vsub.s32 %v1336, %v1394
  %v1396 = vrot.slane %v989, %v1395
  %v1397 = vlaneseq
  %v1398 = vshrl.u32 %v1397, 7
  %v1399 = vsub.s32 %v1341, %v1398
  %v1400 = vrot.slane %v992, %v1399
  %v1401 = vsel %vm1346, %v1400, %v1396
  %v1402 = vlaneseq
  %v1403 = vshrl.u32 %v1402, 7
  %v1404 = vsub.s32 %v1336, %v1403
  %v1405 = vrot.slane %v995, %v1404
  %v1406 = vlaneseq
  %v1407 = vshrl.u32 %v1406, 7
  %v1408 = vsub.s32 %v1341, %v1407
  %v1409 = vrot.slane %v998, %v1408
  %v1410 = vsel %vm1346, %v1409, %v1405
  %v1411 = vlaneseq
  %v1412 = vshrl.u32 %v1411, 7
  %v1413 = vsub.s32 %v1336, %v1412
  %v1414 = vrot.slane %v1001, %v1413
  %v1415 = vlaneseq
  %v1416 = vshrl.u32 %v1415, 7
  %v1417 = vsub.s32 %v1341, %v1416
  %v1418 = vrot.slane %v1004, %v1417
  %v1419 = vsel %vm1346, %v1418, %v1414
  %v1420 = vlaneseq
  %v1421 = vshrl.u32 %v1420, 7
  %v1422 = vsub.s32 %v1336, %v1421
  %v1423 = vrot.slane %v1007, %v1422
  %v1424 = vlaneseq
  %v1425 = vshrl.u32 %v1424, 7
  %v1426 = vsub.s32 %v1341, %v1425
  %v1427 = vrot.slane %v1010, %v1426
  %v1428 = vsel %vm1346, %v1427, %v1423
  %v1429 = vlaneseq
  %v1430 = vshrl.u32 %v1429, 7
  %v1431 = vsub.s32 %v1336, %v1430
  %v1432 = vrot.slane %v1013, %v1431
  %v1433 = vlaneseq
  %v1434 = vshrl.u32 %v1433, 7
  %v1435 = vsub.s32 %v1341, %v1434
  %v1436 = vrot.slane %v1016, %v1435
  %v1437 = vsel %vm1346, %v1436, %v1432
  %v1438 = vlaneseq
  %v1439 = vshrl.u32 %v1438, 7
  %v1440 = vsub.s32 %v1336, %v1439
  %v1441 = vrot.slane %v1019, %v1440
  %v1442 = vlaneseq
  %v1443 = vshrl.u32 %v1442, 7
  %v1444 = vsub.s32 %v1341, %v1443
  %v1445 = vrot.slane %v1022, %v1444
  %v1446 = vsel %vm1346, %v1445, %v1441
  %v1447 = vlaneseq
  %v1448 = vshrl.u32 %v1447, 7
  %v1449 = vsub.s32 %v1336, %v1448
  %v1450 = vrot.slane %v1025, %v1449
  %v1451 = vlaneseq
  %v1452 = vshrl.u32 %v1451, 7
  %v1453 = vsub.s32 %v1341, %v1452
  %v1454 = vrot.slane %v1028, %v1453
  %v1455 = vsel %vm1346, %v1454, %v1450
  %v1456 = vlaneseq
  %v1457 = vshrl.u32 %v1456, 7
  %v1458 = vsub.s32 %v1336, %v1457
  %v1459 = vrot.slane %v1031, %v1458
  %v1460 = vlaneseq
  %v1461 = vshrl.u32 %v1460, 7
  %v1462 = vsub.s32 %v1341, %v1461
  %v1463 = vrot.slane %v1034, %v1462
  %v1464 = vsel %vm1346, %v1463, %v1459
  %v1465 = vlaneseq
  %v1466 = vshrl.u32 %v1465, 7
  %v1467 = vsub.s32 %v1336, %v1466
  %v1468 = vrot.slane %v1037, %v1467
  %v1469 = vlaneseq
  %v1470 = vshrl.u32 %v1469, 7
  %v1471 = vsub.s32 %v1341, %v1470
  %v1472 = vrot.slane %v1040, %v1471
  %v1473 = vsel %vm1346, %v1472, %v1468
  %v1474 = vlaneseq
  %v1475 = vshrl.u32 %v1474, 7
  %v1476 = vsub.s32 %v1336, %v1475
  %v1477 = vrot.slane %v1043, %v1476
  %v1478 = vlaneseq
  %v1479 = vshrl.u32 %v1478, 7
  %v1480 = vsub.s32 %v1341, %v1479
  %v1481 = vrot.slane %v1046, %v1480
  %v1482 = vsel %vm1346, %v1481, %v1477
  %v1483 = vlaneseq
  %v1484 = vshrl.u32 %v1483, 7
  %v1485 = vsub.s32 %v1336, %v1484
  %v1486 = vrot.slane %v1049, %v1485
  %v1487 = vlaneseq
  %v1488 = vshrl.u32 %v1487, 7
  %v1489 = vsub.s32 %v1341, %v1488
  %v1490 = vrot.slane %v1052, %v1489
  %v1491 = vsel %vm1346, %v1490, %v1486
  %v1492 = vlaneseq
  %v1493 = vshrl.u32 %v1492, 7
  %v1494 = vsub.s32 %v1336, %v1493
  %v1495 = vrot.slane %v1055, %v1494
  %v1496 = vlaneseq
  %v1497 = vshrl.u32 %v1496, 7
  %v1498 = vsub.s32 %v1341, %v1497
  %v1499 = vrot.slane %v1058, %v1498
  %v1500 = vsel %vm1346, %v1499, %v1495
  %v1501 = vlaneseq
  %v1502 = vshrl.u32 %v1501, 7
  %v1503 = vsub.s32 %v1336, %v1502
  %v1504 = vrot.slane %v1061, %v1503
  %v1505 = vlaneseq
  %v1506 = vshrl.u32 %v1505, 7
  %v1507 = vsub.s32 %v1341, %v1506
  %v1508 = vrot.slane %v1064, %v1507
  %v1509 = vsel %vm1346, %v1508, %v1504
  %v1510 = vlaneseq
  %v1511 = vshrl.u32 %v1510, 7
  %v1512 = vsub.s32 %v1336, %v1511
  %v1513 = vrot.slane %v1067, %v1512
  %v1514 = vlaneseq
  %v1515 = vshrl.u32 %v1514, 7
  %v1516 = vsub.s32 %v1341, %v1515
  %v1517 = vrot.slane %v1070, %v1516
  %v1518 = vsel %vm1346, %v1517, %v1513
  %v1519 = vlaneseq
  %v1520 = vshrl.u32 %v1519, 7
  %v1521 = vsub.s32 %v1336, %v1520
  %v1522 = vrot.slane %v1073, %v1521
  %v1523 = vlaneseq
  %v1524 = vshrl.u32 %v1523, 7
  %v1525 = vsub.s32 %v1341, %v1524
  %v1526 = vrot.slane %v1076, %v1525
  %v1527 = vsel %vm1346, %v1526, %v1522
  %v1528 = vlaneseq
  %v1529 = vshrl.u32 %v1528, 7
  %v1530 = vsub.s32 %v1336, %v1529
  %v1531 = vrot.slane %v1079, %v1530
  %v1532 = vlaneseq
  %v1533 = vshrl.u32 %v1532, 7
  %v1534 = vsub.s32 %v1341, %v1533
  %v1535 = vrot.slane %v1082, %v1534
  %v1536 = vsel %vm1346, %v1535, %v1531
  %v1537 = vlaneseq
  %v1538 = vshrl.u32 %v1537, 7
  %v1539 = vsub.s32 %v1336, %v1538
  %v1540 = vrot.slane %v1085, %v1539
  %v1541 = vlaneseq
  %v1542 = vshrl.u32 %v1541, 7
  %v1543 = vsub.s32 %v1341, %v1542
  %v1544 = vrot.slane %v1088, %v1543
  %v1545 = vsel %vm1346, %v1544, %v1540
  %v1546 = vlaneseq
  %v1547 = vshrl.u32 %v1546, 7
  %v1548 = vsub.s32 %v1336, %v1547
  %v1549 = vrot.slane %v1091, %v1548
  %v1550 = vlaneseq
  %v1551 = vshrl.u32 %v1550, 7
  %v1552 = vsub.s32 %v1341, %v1551
  %v1553 = vrot.slane %v1094, %v1552
  %v1554 = vsel %vm1346, %v1553, %v1549
  %v1555 = vlaneseq
  %v1556 = vshrl.u32 %v1555, 7
  %v1557 = vsub.s32 %v1336, %v1556
  %v1558 = vrot.slane %v1097, %v1557
  %v1559 = vlaneseq
  %v1560 = vshrl.u32 %v1559, 7
  %v1561 = vsub.s32 %v1341, %v1560
  %v1562 = vrot.slane %v1100, %v1561
  %v1563 = vsel %vm1346, %v1562, %v1558
  %v1564 = vlaneseq
  %v1565 = vshrl.u32 %v1564, 7
  %v1566 = vsub.s32 %v1336, %v1565
  %v1567 = vrot.slane %v1103, %v1566
  %v1568 = vlaneseq
  %v1569 = vshrl.u32 %v1568, 7
  %v1570 = vsub.s32 %v1341, %v1569
  %v1571 = vrot.slane %v1106, %v1570
  %v1572 = vsel %vm1346, %v1571, %v1567
  %v1573 = vlaneseq
  %v1574 = vshrl.u32 %v1573, 7
  %v1575 = vsub.s32 %v1336, %v1574
  %v1576 = vrot.slane %v1109, %v1575
  %v1577 = vlaneseq
  %v1578 = vshrl.u32 %v1577, 7
  %v1579 = vsub.s32 %v1341, %v1578
  %v1580 = vrot.slane %v1112, %v1579
  %v1581 = vsel %vm1346, %v1580, %v1576
  %v1582 = vlaneseq
  %v1583 = vshrl.u32 %v1582, 7
  %v1584 = vsub.s32 %v1336, %v1583
  %v1585 = vrot.slane %v1115, %v1584
  %v1586 = vlaneseq
  %v1587 = vshrl.u32 %v1586, 7
  %v1588 = vsub.s32 %v1341, %v1587
  %v1589 = vrot.slane %v1118, %v1588
  %v1590 = vsel %vm1346, %v1589, %v1585
  %v1591 = vlaneseq
  %v1592 = vshrl.u32 %v1591, 7
  %v1593 = vsub.s32 %v1336, %v1592
  %v1594 = vrot.slane %v1121, %v1593
  %v1595 = vlaneseq
  %v1596 = vshrl.u32 %v1595, 7
  %v1597 = vsub.s32 %v1341, %v1596
  %v1598 = vrot.slane %v1124, %v1597
  %v1599 = vsel %vm1346, %v1598, %v1594
  %v1600 = vlaneseq
  %v1601 = vshrl.u32 %v1600, 7
  %v1602 = vsub.s32 %v1336, %v1601
  %v1603 = vrot.slane %v1127, %v1602
  %v1604 = vlaneseq
  %v1605 = vshrl.u32 %v1604, 7
  %v1606 = vsub.s32 %v1341, %v1605
  %v1607 = vrot.slane %v1130, %v1606
  %v1608 = vsel %vm1346, %v1607, %v1603
  %v1609 = vlaneseq
  %v1610 = vshrl.u32 %v1609, 7
  %v1611 = vsub.s32 %v1336, %v1610
  %v1612 = vrot.slane %v1133, %v1611
  %v1613 = vlaneseq
  %v1614 = vshrl.u32 %v1613, 7
  %v1615 = vsub.s32 %v1341, %v1614
  %v1616 = vrot.slane %v1136, %v1615
  %v1617 = vsel %vm1346, %v1616, %v1612
  %v1618 = vlaneseq
  %v1619 = vshrl.u32 %v1618, 7
  %v1620 = vsub.s32 %v1336, %v1619
  %v1621 = vrot.slane %v1139, %v1620
  %v1622 = vlaneseq
  %v1623 = vshrl.u32 %v1622, 7
  %v1624 = vsub.s32 %v1341, %v1623
  %v1625 = vrot.slane %v1142, %v1624
  %v1626 = vsel %vm1346, %v1625, %v1621
  %v1627 = vlaneseq
  %v1628 = vshrl.u32 %v1627, 7
  %v1629 = vsub.s32 %v1336, %v1628
  %v1630 = vrot.slane %v1145, %v1629
  %v1631 = vlaneseq
  %v1632 = vshrl.u32 %v1631, 7
  %v1633 = vsub.s32 %v1341, %v1632
  %v1634 = vrot.slane %v1148, %v1633
  %v1635 = vsel %vm1346, %v1634, %v1630
  %v1636 = vlaneseq
  %v1637 = vshrl.u32 %v1636, 7
  %v1638 = vsub.s32 %v1336, %v1637
  %v1639 = vrot.slane %v1151, %v1638
  %v1640 = vlaneseq
  %v1641 = vshrl.u32 %v1640, 7
  %v1642 = vsub.s32 %v1341, %v1641
  %v1643 = vrot.slane %v1154, %v1642
  %v1644 = vsel %vm1346, %v1643, %v1639
  %v1645 = vlaneseq
  %v1646 = vshrl.u32 %v1645, 7
  %v1647 = vsub.s32 %v1336, %v1646
  %v1648 = vrot.slane %v1157, %v1647
  %v1649 = vlaneseq
  %v1650 = vshrl.u32 %v1649, 7
  %v1651 = vsub.s32 %v1341, %v1650
  %v1652 = vrot.slane %v1160, %v1651
  %v1653 = vsel %vm1346, %v1652, %v1648
  %v1654 = vlaneseq
  %v1655 = vshrl.u32 %v1654, 7
  %v1656 = vsub.s32 %v1336, %v1655
  %v1657 = vrot.slane %v1163, %v1656
  %v1658 = vlaneseq
  %v1659 = vshrl.u32 %v1658, 7
  %v1660 = vsub.s32 %v1341, %v1659
  %v1661 = vrot.slane %v1166, %v1660
  %v1662 = vsel %vm1346, %v1661, %v1657
  %v1663 = vlaneseq
  %v1664 = vshrl.u32 %v1663, 7
  %v1665 = vsub.s32 %v1336, %v1664
  %v1666 = vrot.slane %v1169, %v1665
  %v1667 = vlaneseq
  %v1668 = vshrl.u32 %v1667, 7
  %v1669 = vsub.s32 %v1341, %v1668
  %v1670 = vrot.slane %v1172, %v1669
  %v1671 = vsel %vm1346, %v1670, %v1666
  %v1672 = vlaneseq
  %v1673 = vshrl.u32 %v1672, 7
  %v1674 = vsub.s32 %v1336, %v1673
  %v1675 = vrot.slane %v1175, %v1674
  %v1676 = vlaneseq
  %v1677 = vshrl.u32 %v1676, 7
  %v1678 = vsub.s32 %v1341, %v1677
  %v1679 = vrot.slane %v1178, %v1678
  %v1680 = vsel %vm1346, %v1679, %v1675
  %v1681 = vlaneseq
  %v1682 = vshrl.u32 %v1681, 7
  %v1683 = vsub.s32 %v1336, %v1682
  %v1684 = vrot.slane %v1181, %v1683
  %v1685 = vlaneseq
  %v1686 = vshrl.u32 %v1685, 7
  %v1687 = vsub.s32 %v1341, %v1686
  %v1688 = vrot.slane %v1184, %v1687
  %v1689 = vsel %vm1346, %v1688, %v1684
  %v1690 = vlaneseq
  %v1691 = vshrl.u32 %v1690, 7
  %v1692 = vsub.s32 %v1336, %v1691
  %v1693 = vrot.slane %v1187, %v1692
  %v1694 = vlaneseq
  %v1695 = vshrl.u32 %v1694, 7
  %v1696 = vsub.s32 %v1341, %v1695
  %v1697 = vrot.slane %v1190, %v1696
  %v1698 = vsel %vm1346, %v1697, %v1693
  %v1699 = vlaneseq
  %v1700 = vshrl.u32 %v1699, 7
  %v1701 = vsub.s32 %v1336, %v1700
  %v1702 = vrot.slane %v1193, %v1701
  %v1703 = vlaneseq
  %v1704 = vshrl.u32 %v1703, 7
  %v1705 = vsub.s32 %v1341, %v1704
  %v1706 = vrot.slane %v1196, %v1705
  %v1707 = vsel %vm1346, %v1706, %v1702
  %v1708 = vlaneseq
  %v1709 = vshrl.u32 %v1708, 7
  %v1710 = vsub.s32 %v1336, %v1709
  %v1711 = vrot.slane %v1199, %v1710
  %v1712 = vlaneseq
  %v1713 = vshrl.u32 %v1712, 7
  %v1714 = vsub.s32 %v1341, %v1713
  %v1715 = vrot.slane %v1202, %v1714
  %v1716 = vsel %vm1346, %v1715, %v1711
  %v1717 = vlaneseq
  %v1718 = vshrl.u32 %v1717, 7
  %v1719 = vsub.s32 %v1336, %v1718
  %v1720 = vrot.slane %v1205, %v1719
  %v1721 = vlaneseq
  %v1722 = vshrl.u32 %v1721, 7
  %v1723 = vsub.s32 %v1341, %v1722
  %v1724 = vrot.slane %v1208, %v1723
  %v1725 = vsel %vm1346, %v1724, %v1720
  %v1726 = vlaneseq
  %v1727 = vshrl.u32 %v1726, 7
  %v1728 = vsub.s32 %v1336, %v1727
  %v1729 = vrot.slane %v1211, %v1728
  %v1730 = vlaneseq
  %v1731 = vshrl.u32 %v1730, 7
  %v1732 = vsub.s32 %v1341, %v1731
  %v1733 = vrot.slane %v1214, %v1732
  %v1734 = vsel %vm1346, %v1733, %v1729
  %v1735 = vlaneseq
  %v1736 = vshrl.u32 %v1735, 7
  %v1737 = vsub.s32 %v1336, %v1736
  %v1738 = vrot.slane %v1217, %v1737
  %v1739 = vlaneseq
  %v1740 = vshrl.u32 %v1739, 7
  %v1741 = vsub.s32 %v1341, %v1740
  %v1742 = vrot.slane %v1220, %v1741
  %v1743 = vsel %vm1346, %v1742, %v1738
  %v1744 = vlaneseq
  %v1745 = vshrl.u32 %v1744, 7
  %v1746 = vsub.s32 %v1336, %v1745
  %v1747 = vrot.slane %v1223, %v1746
  %v1748 = vlaneseq
  %v1749 = vshrl.u32 %v1748, 7
  %v1750 = vsub.s32 %v1341, %v1749
  %v1751 = vrot.slane %v1226, %v1750
  %v1752 = vsel %vm1346, %v1751, %v1747
  %v1753 = vlaneseq
  %v1754 = vshrl.u32 %v1753, 7
  %v1755 = vsub.s32 %v1336, %v1754
  %v1756 = vrot.slane %v1229, %v1755
  %v1757 = vlaneseq
  %v1758 = vshrl.u32 %v1757, 7
  %v1759 = vsub.s32 %v1341, %v1758
  %v1760 = vrot.slane %v1232, %v1759
  %v1761 = vsel %vm1346, %v1760, %v1756
  %v1762 = vlaneseq
  %v1763 = vshrl.u32 %v1762, 7
  %v1764 = vsub.s32 %v1336, %v1763
  %v1765 = vrot.slane %v1235, %v1764
  %v1766 = vlaneseq
  %v1767 = vshrl.u32 %v1766, 7
  %v1768 = vsub.s32 %v1341, %v1767
  %v1769 = vrot.slane %v1238, %v1768
  %v1770 = vsel %vm1346, %v1769, %v1765
  %v1771 = vlaneseq
  %v1772 = vshrl.u32 %v1771, 7
  %v1773 = vsub.s32 %v1336, %v1772
  %v1774 = vrot.slane %v1241, %v1773
  %v1775 = vlaneseq
  %v1776 = vshrl.u32 %v1775, 7
  %v1777 = vsub.s32 %v1341, %v1776
  %v1778 = vrot.slane %v1244, %v1777
  %v1779 = vsel %vm1346, %v1778, %v1774
  %v1780 = vlaneseq
  %v1781 = vshrl.u32 %v1780, 7
  %v1782 = vsub.s32 %v1336, %v1781
  %v1783 = vrot.slane %v1247, %v1782
  %v1784 = vlaneseq
  %v1785 = vshrl.u32 %v1784, 7
  %v1786 = vsub.s32 %v1341, %v1785
  %v1787 = vrot.slane %v1250, %v1786
  %v1788 = vsel %vm1346, %v1787, %v1783
  %v1789 = vlaneseq
  %v1790 = vshrl.u32 %v1789, 7
  %v1791 = vsub.s32 %v1336, %v1790
  %v1792 = vrot.slane %v1253, %v1791
  %v1793 = vlaneseq
  %v1794 = vshrl.u32 %v1793, 7
  %v1795 = vsub.s32 %v1341, %v1794
  %v1796 = vrot.slane %v1256, %v1795
  %v1797 = vsel %vm1346, %v1796, %v1792
  %v1798 = vlaneseq
  %v1799 = vshrl.u32 %v1798, 7
  %v1800 = vsub.s32 %v1336, %v1799
  %v1801 = vrot.slane %v1259, %v1800
  %v1802 = vlaneseq
  %v1803 = vshrl.u32 %v1802, 7
  %v1804 = vsub.s32 %v1341, %v1803
  %v1805 = vrot.slane %v1262, %v1804
  %v1806 = vsel %vm1346, %v1805, %v1801
  %v1807 = vlaneseq
  %v1808 = vshrl.u32 %v1807, 7
  %v1809 = vsub.s32 %v1336, %v1808
  %v1810 = vrot.slane %v1265, %v1809
  %v1811 = vlaneseq
  %v1812 = vshrl.u32 %v1811, 7
  %v1813 = vsub.s32 %v1341, %v1812
  %v1814 = vrot.slane %v1268, %v1813
  %v1815 = vsel %vm1346, %v1814, %v1810
  %v1816 = vlaneseq
  %v1817 = vshrl.u32 %v1816, 7
  %v1818 = vsub.s32 %v1336, %v1817
  %v1819 = vrot.slane %v1271, %v1818
  %v1820 = vlaneseq
  %v1821 = vshrl.u32 %v1820, 7
  %v1822 = vsub.s32 %v1341, %v1821
  %v1823 = vrot.slane %v1274, %v1822
  %v1824 = vsel %vm1346, %v1823, %v1819
  %v1825 = vlaneseq
  %v1826 = vshrl.u32 %v1825, 7
  %v1827 = vsub.s32 %v1336, %v1826
  %v1828 = vrot.slane %v1277, %v1827
  %v1829 = vlaneseq
  %v1830 = vshrl.u32 %v1829, 7
  %v1831 = vsub.s32 %v1341, %v1830
  %v1832 = vrot.slane %v1280, %v1831
  %v1833 = vsel %vm1346, %v1832, %v1828
  %v1834 = vlaneseq
  %v1835 = vshrl.u32 %v1834, 7
  %v1836 = vsub.s32 %v1336, %v1835
  %v1837 = vrot.slane %v1283, %v1836
  %v1838 = vlaneseq
  %v1839 = vshrl.u32 %v1838, 7
  %v1840 = vsub.s32 %v1341, %v1839
  %v1841 = vrot.slane %v1286, %v1840
  %v1842 = vsel %vm1346, %v1841, %v1837
  %v1843 = vlaneseq
  %v1844 = vshrl.u32 %v1843, 7
  %v1845 = vsub.s32 %v1336, %v1844
  %v1846 = vrot.slane %v1289, %v1845
  %v1847 = vlaneseq
  %v1848 = vshrl.u32 %v1847, 7
  %v1849 = vsub.s32 %v1341, %v1848
  %v1850 = vrot.slane %v1292, %v1849
  %v1851 = vsel %vm1346, %v1850, %v1846
  %v1852 = vlaneseq
  %v1853 = vshrl.u32 %v1852, 7
  %v1854 = vsub.s32 %v1336, %v1853
  %v1855 = vrot.slane %v1295, %v1854
  %v1856 = vlaneseq
  %v1857 = vshrl.u32 %v1856, 7
  %v1858 = vsub.s32 %v1341, %v1857
  %v1859 = vrot.slane %v1298, %v1858
  %v1860 = vsel %vm1346, %v1859, %v1855
  %v1861 = vlaneseq
  %v1862 = vshrl.u32 %v1861, 7
  %v1863 = vsub.s32 %v1336, %v1862
  %v1864 = vrot.slane %v1301, %v1863
  %v1865 = vlaneseq
  %v1866 = vshrl.u32 %v1865, 7
  %v1867 = vsub.s32 %v1341, %v1866
  %v1868 = vrot.slane %v1304, %v1867
  %v1869 = vsel %vm1346, %v1868, %v1864
  %v1870 = vlaneseq
  %v1871 = vshrl.u32 %v1870, 7
  %v1872 = vsub.s32 %v1336, %v1871
  %v1873 = vrot.slane %v1307, %v1872
  %v1874 = vlaneseq
  %v1875 = vshrl.u32 %v1874, 7
  %v1876 = vsub.s32 %v1341, %v1875
  %v1877 = vrot.slane %v1310, %v1876
  %v1878 = vsel %vm1346, %v1877, %v1873
  %v1879 = vlaneseq
  %v1880 = vshrl.u32 %v1879, 7
  %v1881 = vsub.s32 %v1336, %v1880
  %v1882 = vrot.slane %v1313, %v1881
  %v1883 = vlaneseq
  %v1884 = vshrl.u32 %v1883, 7
  %v1885 = vsub.s32 %v1341, %v1884
  %v1886 = vrot.slane %v1316, %v1885
  %v1887 = vsel %vm1346, %v1886, %v1882
  %v1888 = vlaneseq
  %v1889 = vshrl.u32 %v1888, 7
  %v1890 = vsub.s32 %v1336, %v1889
  %v1891 = vrot.slane %v1319, %v1890
  %v1892 = vlaneseq
  %v1893 = vshrl.u32 %v1892, 7
  %v1894 = vsub.s32 %v1341, %v1893
  %v1895 = vrot.slane %v1322, %v1894
  %v1896 = vsel %vm1346, %v1895, %v1891
  %v1897 = vlaneseq
  %v1898 = vshrl.u32 %v1897, 7
  %v1899 = vsub.s32 %v1336, %v1898
  %v1900 = vrot.slane %v1325, %v1899
  %v1901 = vlaneseq
  %v1902 = vshrl.u32 %v1901, 7
  %v1903 = vsub.s32 %v1341, %v1902
  %v1904 = vrot.slane %v1328, %v1903
  %v1905 = vsel %vm1346, %v1904, %v1900
  %v1906 = vlaneseq
  %v1907 = vshrl.u32 %v1906, 7
  %v1908 = vsub.s32 %v1336, %v1907
  %v1909 = vrot.slane %v1331, %v1908
  %v1910 = vlaneseq
  %v1911 = vshrl.u32 %v1910, 7
  %v1912 = vsub.s32 %v1341, %v1911
  %v1913 = vrot.slane %v1334, %v1912
  %v1914 = vsel %vm1346, %v1913, %v1909
  %vm1915 = vcmask 1041409
  %v1916 = vsel %vm1915, %v1356, %v1347
  %vm1917 = vcmask 1042434
  %v1918 = vsel %vm1917, %v1365, %v1916
  %vm1919 = vcmask 1043459
  %v1920 = vsel %vm1919, %v1374, %v1918
  %vm1921 = vcmask 1044484
  %v1922 = vsel %vm1921, %v1383, %v1920
  %vm1923 = vcmask 1045509
  %v1924 = vsel %vm1923, %v1392, %v1922
  %vm1925 = vcmask 1046534
  %v1926 = vsel %vm1925, %v1401, %v1924
  %vm1927 = vcmask 1047559
  %v1928 = vsel %vm1927, %v1410, %v1926
  %v1929 = vsel %vm1915, %v1428, %v1419
  %v1930 = vsel %vm1917, %v1437, %v1929
  %v1931 = vsel %vm1919, %v1446, %v1930
  %v1932 = vsel %vm1921, %v1455, %v1931
  %v1933 = vsel %vm1923, %v1464, %v1932
  %v1934 = vsel %vm1925, %v1473, %v1933
  %v1935 = vsel %vm1927, %v1482, %v1934
  %v1936 = vsel %vm1915, %v1500, %v1491
  %v1937 = vsel %vm1917, %v1509, %v1936
  %v1938 = vsel %vm1919, %v1518, %v1937
  %v1939 = vsel %vm1921, %v1527, %v1938
  %v1940 = vsel %vm1923, %v1536, %v1939
  %v1941 = vsel %vm1925, %v1545, %v1940
  %v1942 = vsel %vm1927, %v1554, %v1941
  %v1943 = vsel %vm1915, %v1572, %v1563
  %v1944 = vsel %vm1917, %v1581, %v1943
  %v1945 = vsel %vm1919, %v1590, %v1944
  %v1946 = vsel %vm1921, %v1599, %v1945
  %v1947 = vsel %vm1923, %v1608, %v1946
  %v1948 = vsel %vm1925, %v1617, %v1947
  %v1949 = vsel %vm1927, %v1626, %v1948
  %v1950 = vsel %vm1915, %v1644, %v1635
  %v1951 = vsel %vm1917, %v1653, %v1950
  %v1952 = vsel %vm1919, %v1662, %v1951
  %v1953 = vsel %vm1921, %v1671, %v1952
  %v1954 = vsel %vm1923, %v1680, %v1953
  %v1955 = vsel %vm1925, %v1689, %v1954
  %v1956 = vsel %vm1927, %v1698, %v1955
  %v1957 = vsel %vm1915, %v1716, %v1707
  %v1958 = vsel %vm1917, %v1725, %v1957
  %v1959 = vsel %vm1919, %v1734, %v1958
  %v1960 = vsel %vm1921, %v1743, %v1959
  %v1961 = vsel %vm1923, %v1752, %v1960
  %v1962 = vsel %vm1925, %v1761, %v1961
  %v1963 = vsel %vm1927, %v1770, %v1962
  %v1964 = vsel %vm1915, %v1788, %v1779
  %v1965 = vsel %vm1917, %v1797, %v1964
  %v1966 = vsel %vm1919, %v1806, %v1965
  %v1967 = vsel %vm1921, %v1815, %v1966
  %v1968 = vsel %vm1923, %v1824, %v1967
  %v1969 = vsel %vm1925, %v1833, %v1968
  %v1970 = vsel %vm1927, %v1842, %v1969
  %v1971 = vsel %vm1915, %v1860, %v1851
  %v1972 = vsel %vm1917, %v1869, %v1971
  %v1973 = vsel %vm1919, %v1878, %v1972
  %v1974 = vsel %vm1921, %v1887, %v1973
  %v1975 = vsel %vm1923, %v1896, %v1974
  %v1976 = vsel %vm1925, %v1905, %v1975
  %v1977 = vsel %vm1927, %v1914, %v1976
  %v1986 = vadd.f32 %v943, %v1928
  %v1987 = vadd.f32 %v944, %v1935
  %v1988 = vadd.f32 %v945, %v1942
  %v1989 = vadd.f32 %v946, %v1949
  %v1990 = vadd.f32 %v947, %v1956
  %v1991 = vadd.f32 %v948, %v1963
  %v1992 = vadd.f32 %v949, %v1970
  %v1993 = vadd.f32 %v950, %v1977
  %vm1994 = vcmp.ge.f32.partialorder %v1986, 0.0
  %vm1995 = vcmp.ge.f32.partialorder %v1987, 0.0
  %vm1996 = vcmp.ge.f32.partialorder %v1988, 0.0
  %vm1997 = vcmp.ge.f32.partialorder %v1989, 0.0
  %vm1998 = vcmp.ge.f32.partialorder %v1990, 0.0
  %vm1999 = vcmp.ge.f32.partialorder %v1991, 0.0
  %vm2000 = vcmp.ge.f32.partialorder %v1992, 0.0
  %vm2001 = vcmp.ge.f32.partialorder %v1993, 0.0
  %v2002 = vmul.f32 %v1986, 0.2
  %v2003 = vmul.f32 %v1987, 0.2
  %v2004 = vmul.f32 %v1988, 0.2
  %v2005 = vmul.f32 %v1989, 0.2
  %v2006 = vmul.f32 %v1990, 0.2
  %v2007 = vmul.f32 %v1991, 0.2
  %v2008 = vmul.f32 %v1992, 0.2
  %v2009 = vmul.f32 %v1993, 0.2
  %v2010 = vsel %vm1994, %v1986, %v2002
  %v2011 = vsel %vm1995, %v1987, %v2003
  %v2012 = vsel %vm1996, %v1988, %v2004
  %v2013 = vsel %vm1997, %v1989, %v2005
  %v2014 = vsel %vm1998, %v1990, %v2006
  %v2015 = vsel %vm1999, %v1991, %v2007
  %v2016 = vsel %vm2000, %v1992, %v2008
  %v2017 = vsel %vm2001, %v1993, %v2009
  %v2018 = vadd.f32 %v2010, %v36
  %v2019 = vadd.f32 %v2011, %v37
  %v2020 = vadd.f32 %v2012, %v36
  %v2021 = vadd.f32 %v2013, %v37
  %v2022 = vadd.f32 %v2014, %v36
  %v2023 = vadd.f32 %v2015, %v37
  %v2024 = vadd.f32 %v2016, %v36
  %v2025 = vadd.f32 %v2017, %v37
  %v2026 = vsel %vm286, %v2018, -inf
  %2027 = vmax.xlane.f32.xlu0 %v2026
  %v2028 = vpop.xlane.xlu0 %2027
  %v2029 = vsel %vm286, %v2019, -inf
  %2030 = vmax.xlane.f32.xlu0 %v2029
  %v2031 = vpop.xlane.xlu0 %2030
  %v2032 = vsel %vm286, %v2020, -inf
  %2033 = vmax.xlane.f32.xlu0 %v2032
  %v2034 = vpop.xlane.xlu0 %2033
  %v2035 = vsel %vm286, %v2021, -inf
  %2036 = vmax.xlane.f32.xlu0 %v2035
  %v2037 = vpop.xlane.xlu0 %2036
  %v2038 = vsel %vm286, %v2022, -inf
  %2039 = vmax.xlane.f32.xlu0 %v2038
  %v2040 = vpop.xlane.xlu0 %2039
  %v2041 = vsel %vm286, %v2023, -inf
  %2042 = vmax.xlane.f32.xlu0 %v2041
  %v2043 = vpop.xlane.xlu0 %2042
  %v2044 = vsel %vm286, %v2024, -inf
  %2045 = vmax.xlane.f32.xlu0 %v2044
  %v2046 = vpop.xlane.xlu0 %2045
  %v2047 = vsel %vm286, %v2025, -inf
  %2048 = vmax.xlane.f32.xlu0 %v2047
  %v2049 = vpop.xlane.xlu0 %2048
  %v2050 = vsub.f32 %v2018, %v2028
  %v2051 = vsub.f32 %v2019, %v2031
  %v2052 = vsub.f32 %v2020, %v2034
  %v2053 = vsub.f32 %v2021, %v2037
  %v2054 = vsub.f32 %v2022, %v2040
  %v2055 = vsub.f32 %v2023, %v2043
  %v2056 = vsub.f32 %v2024, %v2046
  %v2057 = vsub.f32 %v2025, %v2049
  %v2058 = vmul.f32 %v2050, 1.442695
  %v2059 = vpow.pop %v2058
  %v2060 = vmul.f32 %v2051, 1.442695
  %v2061 = vpow.pop %v2060
  %v2062 = vmul.f32 %v2052, 1.442695
  %v2063 = vpow.pop %v2062
  %v2064 = vmul.f32 %v2053, 1.442695
  %v2065 = vpow.pop %v2064
  %v2066 = vmul.f32 %v2054, 1.442695
  %v2067 = vpow.pop %v2066
  %v2068 = vmul.f32 %v2055, 1.442695
  %v2069 = vpow.pop %v2068
  %v2070 = vmul.f32 %v2056, 1.442695
  %v2071 = vpow.pop %v2070
  %v2072 = vmul.f32 %v2057, 1.442695
  %v2073 = vpow.pop %v2072
  %v2074 = vsel %vm286, %v2059, 0.0
  %2075 = vadd.xlane.f32.xlu0 %v2074
  %v2076 = vpop.xlane.xlu0 %2075
  %v2077 = vsel %vm286, %v2061, 0.0
  %2078 = vadd.xlane.f32.xlu0 %v2077
  %v2079 = vpop.xlane.xlu0 %2078
  %v2080 = vsel %vm286, %v2063, 0.0
  %2081 = vadd.xlane.f32.xlu0 %v2080
  %v2082 = vpop.xlane.xlu0 %2081
  %v2083 = vsel %vm286, %v2065, 0.0
  %2084 = vadd.xlane.f32.xlu0 %v2083
  %v2085 = vpop.xlane.xlu0 %2084
  %v2086 = vsel %vm286, %v2067, 0.0
  %2087 = vadd.xlane.f32.xlu0 %v2086
  %v2088 = vpop.xlane.xlu0 %2087
  %v2089 = vsel %vm286, %v2069, 0.0
  %2090 = vadd.xlane.f32.xlu0 %v2089
  %v2091 = vpop.xlane.xlu0 %2090
  %v2092 = vsel %vm286, %v2071, 0.0
  %2093 = vadd.xlane.f32.xlu0 %v2092
  %v2094 = vpop.xlane.xlu0 %2093
  %v2095 = vsel %vm286, %v2073, 0.0
  %2096 = vadd.xlane.f32.xlu0 %v2095
  %v2097 = vpop.xlane.xlu0 %2096
  %v2098 = vadd.f32 %v2076, 1e-16
  %v2099 = vadd.f32 %v2079, 1e-16
  %v2100 = vadd.f32 %v2082, 1e-16
  %v2101 = vadd.f32 %v2085, 1e-16
  %v2102 = vadd.f32 %v2088, 1e-16
  %v2103 = vadd.f32 %v2091, 1e-16
  %v2104 = vadd.f32 %v2094, 1e-16
  %v2105 = vadd.f32 %v2097, 1e-16
  %v2106 = vrcp.pop %v2098
  %v2107 = vrcp.pop %v2099
  %v2108 = vrcp.pop %v2100
  %v2109 = vrcp.pop %v2101
  %v2110 = vrcp.pop %v2102
  %v2111 = vrcp.pop %v2103
  %v2112 = vrcp.pop %v2104
  %v2113 = vrcp.pop %v2105
  %v2114 = vmul.f32 %v2059, %v2106
  %v2115 = vmul.f32 %v2061, %v2107
  %v2116 = vmul.f32 %v2063, %v2108
  %v2117 = vmul.f32 %v2065, %v2109
  %v2118 = vmul.f32 %v2067, %v2110
  %v2119 = vmul.f32 %v2069, %v2111
  %v2120 = vmul.f32 %v2071, %v2112
  %v2121 = vmul.f32 %v2073, %v2113
  %v2123 = vsel %vm286, %v2114, 0
  %v2126 = vsel %vm286, %v2115, 0
  %2128 = vmatprep.subr.mxu0 0.0
  %2129 = vmatpush1.msra.mxu0 %v578
  %2130 = vmatprep.subr.mxu0 0.0
  %2131 = vmatpush1.msra.mxu0 %v584
  %2132 = vmatprep.subr.mxu0 0.0
  %2133 = vmatpush1.msra.mxu0 0.0
  %2134 = vmatprep.subr.mxu0 0.0
  %2135 = vmatpush1.msra.mxu0 0.0
  %2136 = vmatprep.subr.mxu0 0.0
  %2137 = vmatpush1.msra.mxu0 0.0
  %2138 = vmatprep.subr.mxu0 0.0
  %2139 = vmatpush1.msra.mxu0 0.0
  %2140 = vmatprep.subr.mxu0 0.0
  %2141 = vmatpush1.msra.mxu0 0.0
  %2142 = vmatprep.subr.mxu0 0.0
  %2143 = vmatpush1.msra.mxu0 0.0
  %2144 = vmatprep.subr.mxu0 0.0
  %2145 = vmatpush1.msra.mxu0 0.0
  %2146 = vmatprep.subr.mxu0 0.0
  %2147 = vmatpush1.msra.mxu0 0.0
  %2148 = vmatprep.subr.mxu0 0.0
  %2149 = vmatpush1.msra.mxu0 0.0
  %2150 = vmatprep.subr.mxu0 0.0
  %2151 = vmatpush1.msra.mxu0 0.0
  %2152 = vmatprep.subr.mxu0 0.0
  %2153 = vmatpush1.msra.mxu0 0.0
  %2154 = vmatprep.subr.mxu0 0.0
  %2155 = vmatpush1.msra.mxu0 0.0
  %2156 = vmatprep.subr.mxu0 0.0
  %2157 = vmatpush1.msra.mxu0 0.0
  %2158 = vmatprep.subr.mxu0 0.0
  %2159 = vmatpush1.msra.mxu0 0.0
  %2160 = vmatprep.subr.mxu0 0.0
  %2161 = vmatpush1.msra.mxu0 0.0
  %2162 = vmatprep.subr.mxu0 0.0
  %2163 = vmatpush1.msra.mxu0 0.0
  %2164 = vmatprep.subr.mxu0 0.0
  %2165 = vmatpush1.msra.mxu0 0.0
  %2166 = vmatprep.subr.mxu0 0.0
  %2167 = vmatpush1.msra.mxu0 0.0
  %2168 = vmatprep.subr.mxu0 0.0
  %2169 = vmatpush1.msra.mxu0 0.0
  %2170 = vmatprep.subr.mxu0 0.0
  %2171 = vmatpush1.msra.mxu0 0.0
  %2172 = vmatprep.subr.mxu0 0.0
  %2173 = vmatpush1.msra.mxu0 0.0
  %2174 = vmatprep.subr.mxu0 0.0
  %2175 = vmatpush1.msra.mxu0 0.0
  %2176 = vmatprep.subr.mxu0 0.0
  %2177 = vmatpush1.msra.mxu0 0.0
  %2178 = vmatprep.subr.mxu0 0.0
  %2179 = vmatpush1.msra.mxu0 0.0
  %2180 = vmatprep.subr.mxu0 0.0
  %2181 = vmatpush1.msra.mxu0 0.0
  %2182 = vmatprep.subr.mxu0 0.0
  %2183 = vmatpush1.msra.mxu0 0.0
  %2184 = vmatprep.subr.mxu0 0.0
  %2185 = vmatpush1.msra.mxu0 0.0
  %2186 = vmatprep.subr.mxu0 0.0
  %2187 = vmatpush1.msra.mxu0 0.0
  %2188 = vmatprep.subr.mxu0 0.0
  %2189 = vmatpush1.msra.mxu0 0.0
  %2190 = vmatprep.subr.mxu0 0.0
  %2191 = vmatpush1.msra.mxu0 0.0
  %2192 = vmatprep.mubr.f32.mxu0 0.0
  %2193 = vmatmul.mubr.f32.gmra.mrb[0].mxu0 %v2123
  %v2194 = vpop.f32.mrb[0].mxu0
  %v2195 = vadd.f32 0.0, %v2194
  %v2196 = vpop.f32.mrb[0].mxu0
  %2197 = vmatprep.mubr.f32.mxu0 0.0
  %2198 = vmatmul.mubr.f32.gmra.mrb[0].mxu0 %v2126
  %v2199 = vpop.f32.mrb[0].mxu0
  %v2200 = vadd.f32 0.0, %v2199
  %v2201 = vpop.f32.mrb[0].mxu0
  %2202 = vdwg.mxu0
  %2203 = vrot.lane.b32.xlu0 %v578, 112
  %v2204 = vpop.permute.xlu0 %2203
  %2205 = vrot.lane.b32.xlu0 %v584, 112
  %v2206 = vpop.permute.xlu0 %2205
  %v2210 = vsel %vm286, %v2116, 0
  %v2213 = vsel %vm286, %v2117, 0
  %2215 = vmatprep.subr.mxu0 0.0
  %2216 = vmatpush1.msra.mxu0 %v2204
  %2217 = vmatprep.subr.mxu0 0.0
  %2218 = vmatpush1.msra.mxu0 %v2206
  %2219 = vmatprep.subr.mxu0 0.0
  %2220 = vmatpush1.msra.mxu0 0.0
  %2221 = vmatprep.subr.mxu0 0.0
  %2222 = vmatpush1.msra.mxu0 0.0
  %2223 = vmatprep.subr.mxu0 0.0
  %2224 = vmatpush1.msra.mxu0 0.0
  %2225 = vmatprep.subr.mxu0 0.0
  %2226 = vmatpush1.msra.mxu0 0.0
  %2227 = vmatprep.subr.mxu0 0.0
  %2228 = vmatpush1.msra.mxu0 0.0
  %2229 = vmatprep.subr.mxu0 0.0
  %2230 = vmatpush1.msra.mxu0 0.0
  %2231 = vmatprep.subr.mxu0 0.0
  %2232 = vmatpush1.msra.mxu0 0.0
  %2233 = vmatprep.subr.mxu0 0.0
  %2234 = vmatpush1.msra.mxu0 0.0
  %2235 = vmatprep.subr.mxu0 0.0
  %2236 = vmatpush1.msra.mxu0 0.0
  %2237 = vmatprep.subr.mxu0 0.0
  %2238 = vmatpush1.msra.mxu0 0.0
  %2239 = vmatprep.subr.mxu0 0.0
  %2240 = vmatpush1.msra.mxu0 0.0
  %2241 = vmatprep.subr.mxu0 0.0
  %2242 = vmatpush1.msra.mxu0 0.0
  %2243 = vmatprep.subr.mxu0 0.0
  %2244 = vmatpush1.msra.mxu0 0.0
  %2245 = vmatprep.subr.mxu0 0.0
  %2246 = vmatpush1.msra.mxu0 0.0
  %2247 = vmatprep.subr.mxu0 0.0
  %2248 = vmatpush1.msra.mxu0 0.0
  %2249 = vmatprep.subr.mxu0 0.0
  %2250 = vmatpush1.msra.mxu0 0.0
  %2251 = vmatprep.subr.mxu0 0.0
  %2252 = vmatpush1.msra.mxu0 0.0
  %2253 = vmatprep.subr.mxu0 0.0
  %2254 = vmatpush1.msra.mxu0 0.0
  %2255 = vmatprep.subr.mxu0 0.0
  %2256 = vmatpush1.msra.mxu0 0.0
  %2257 = vmatprep.subr.mxu0 0.0
  %2258 = vmatpush1.msra.mxu0 0.0
  %2259 = vmatprep.subr.mxu0 0.0
  %2260 = vmatpush1.msra.mxu0 0.0
  %2261 = vmatprep.subr.mxu0 0.0
  %2262 = vmatpush1.msra.mxu0 0.0
  %2263 = vmatprep.subr.mxu0 0.0
  %2264 = vmatpush1.msra.mxu0 0.0
  %2265 = vmatprep.subr.mxu0 0.0
  %2266 = vmatpush1.msra.mxu0 0.0
  %2267 = vmatprep.subr.mxu0 0.0
  %2268 = vmatpush1.msra.mxu0 0.0
  %2269 = vmatprep.subr.mxu0 0.0
  %2270 = vmatpush1.msra.mxu0 0.0
  %2271 = vmatprep.subr.mxu0 0.0
  %2272 = vmatpush1.msra.mxu0 0.0
  %2273 = vmatprep.subr.mxu0 0.0
  %2274 = vmatpush1.msra.mxu0 0.0
  %2275 = vmatprep.subr.mxu0 0.0
  %2276 = vmatpush1.msra.mxu0 0.0
  %2277 = vmatprep.subr.mxu0 0.0
  %2278 = vmatpush1.msra.mxu0 0.0
  %2279 = vmatprep.mubr.f32.mxu0 0.0
  %2280 = vmatmul.mubr.f32.gmra.mrb[0].mxu0 %v2210
  %v2281 = vpop.f32.mrb[0].mxu0
  %v2282 = vadd.f32 0.0, %v2281
  %v2283 = vpop.f32.mrb[0].mxu0
  %2284 = vmatprep.mubr.f32.mxu0 0.0
  %2285 = vmatmul.mubr.f32.gmra.mrb[0].mxu0 %v2213
  %v2286 = vpop.f32.mrb[0].mxu0
  %v2287 = vadd.f32 0.0, %v2286
  %v2288 = vpop.f32.mrb[0].mxu0
  %2289 = vdwg.mxu0
  %2290 = vrot.lane.b32.xlu0 %v578, 96
  %v2291 = vpop.permute.xlu0 %2290
  %2292 = vrot.lane.b32.xlu0 %v584, 96
  %v2293 = vpop.permute.xlu0 %2292
  %v2297 = vsel %vm286, %v2118, 0
  %v2300 = vsel %vm286, %v2119, 0
  %2302 = vmatprep.subr.mxu0 0.0
  %2303 = vmatpush1.msra.mxu0 %v2291
  %2304 = vmatprep.subr.mxu0 0.0
  %2305 = vmatpush1.msra.mxu0 %v2293
  %2306 = vmatprep.subr.mxu0 0.0
  %2307 = vmatpush1.msra.mxu0 0.0
  %2308 = vmatprep.subr.mxu0 0.0
  %2309 = vmatpush1.msra.mxu0 0.0
  %2310 = vmatprep.subr.mxu0 0.0
  %2311 = vmatpush1.msra.mxu0 0.0
  %2312 = vmatprep.subr.mxu0 0.0
  %2313 = vmatpush1.msra.mxu0 0.0
  %2314 = vmatprep.subr.mxu0 0.0
  %2315 = vmatpush1.msra.mxu0 0.0
  %2316 = vmatprep.subr.mxu0 0.0
  %2317 = vmatpush1.msra.mxu0 0.0
  %2318 = vmatprep.subr.mxu0 0.0
  %2319 = vmatpush1.msra.mxu0 0.0
  %2320 = vmatprep.subr.mxu0 0.0
  %2321 = vmatpush1.msra.mxu0 0.0
  %2322 = vmatprep.subr.mxu0 0.0
  %2323 = vmatpush1.msra.mxu0 0.0
  %2324 = vmatprep.subr.mxu0 0.0
  %2325 = vmatpush1.msra.mxu0 0.0
  %2326 = vmatprep.subr.mxu0 0.0
  %2327 = vmatpush1.msra.mxu0 0.0
  %2328 = vmatprep.subr.mxu0 0.0
  %2329 = vmatpush1.msra.mxu0 0.0
  %2330 = vmatprep.subr.mxu0 0.0
  %2331 = vmatpush1.msra.mxu0 0.0
  %2332 = vmatprep.subr.mxu0 0.0
  %2333 = vmatpush1.msra.mxu0 0.0
  %2334 = vmatprep.subr.mxu0 0.0
  %2335 = vmatpush1.msra.mxu0 0.0
  %2336 = vmatprep.subr.mxu0 0.0
  %2337 = vmatpush1.msra.mxu0 0.0
  %2338 = vmatprep.subr.mxu0 0.0
  %2339 = vmatpush1.msra.mxu0 0.0
  %2340 = vmatprep.subr.mxu0 0.0
  %2341 = vmatpush1.msra.mxu0 0.0
  %2342 = vmatprep.subr.mxu0 0.0
  %2343 = vmatpush1.msra.mxu0 0.0
  %2344 = vmatprep.subr.mxu0 0.0
  %2345 = vmatpush1.msra.mxu0 0.0
  %2346 = vmatprep.subr.mxu0 0.0
  %2347 = vmatpush1.msra.mxu0 0.0
  %2348 = vmatprep.subr.mxu0 0.0
  %2349 = vmatpush1.msra.mxu0 0.0
  %2350 = vmatprep.subr.mxu0 0.0
  %2351 = vmatpush1.msra.mxu0 0.0
  %2352 = vmatprep.subr.mxu0 0.0
  %2353 = vmatpush1.msra.mxu0 0.0
  %2354 = vmatprep.subr.mxu0 0.0
  %2355 = vmatpush1.msra.mxu0 0.0
  %2356 = vmatprep.subr.mxu0 0.0
  %2357 = vmatpush1.msra.mxu0 0.0
  %2358 = vmatprep.subr.mxu0 0.0
  %2359 = vmatpush1.msra.mxu0 0.0
  %2360 = vmatprep.subr.mxu0 0.0
  %2361 = vmatpush1.msra.mxu0 0.0
  %2362 = vmatprep.subr.mxu0 0.0
  %2363 = vmatpush1.msra.mxu0 0.0
  %2364 = vmatprep.subr.mxu0 0.0
  %2365 = vmatpush1.msra.mxu0 0.0
  %2366 = vmatprep.mubr.f32.mxu0 0.0
  %2367 = vmatmul.mubr.f32.gmra.mrb[0].mxu0 %v2297
  %v2368 = vpop.f32.mrb[0].mxu0
  %v2369 = vadd.f32 0.0, %v2368
  %v2370 = vpop.f32.mrb[0].mxu0
  %2371 = vmatprep.mubr.f32.mxu0 0.0
  %2372 = vmatmul.mubr.f32.gmra.mrb[0].mxu0 %v2300
  %v2373 = vpop.f32.mrb[0].mxu0
  %v2374 = vadd.f32 0.0, %v2373
  %v2375 = vpop.f32.mrb[0].mxu0
  %2376 = vdwg.mxu0
  %2377 = vrot.lane.b32.xlu0 %v578, 80
  %v2378 = vpop.permute.xlu0 %2377
  %2379 = vrot.lane.b32.xlu0 %v584, 80
  %v2380 = vpop.permute.xlu0 %2379
  %v2384 = vsel %vm286, %v2120, 0
  %v2387 = vsel %vm286, %v2121, 0
  %2389 = vmatprep.subr.mxu0 0.0
  %2390 = vmatpush1.msra.mxu0 %v2378
  %2391 = vmatprep.subr.mxu0 0.0
  %2392 = vmatpush1.msra.mxu0 %v2380
  %2393 = vmatprep.subr.mxu0 0.0
  %2394 = vmatpush1.msra.mxu0 0.0
  %2395 = vmatprep.subr.mxu0 0.0
  %2396 = vmatpush1.msra.mxu0 0.0
  %2397 = vmatprep.subr.mxu0 0.0
  %2398 = vmatpush1.msra.mxu0 0.0
  %2399 = vmatprep.subr.mxu0 0.0
  %2400 = vmatpush1.msra.mxu0 0.0
  %2401 = vmatprep.subr.mxu0 0.0
  %2402 = vmatpush1.msra.mxu0 0.0
  %2403 = vmatprep.subr.mxu0 0.0
  %2404 = vmatpush1.msra.mxu0 0.0
  %2405 = vmatprep.subr.mxu0 0.0
  %2406 = vmatpush1.msra.mxu0 0.0
  %2407 = vmatprep.subr.mxu0 0.0
  %2408 = vmatpush1.msra.mxu0 0.0
  %2409 = vmatprep.subr.mxu0 0.0
  %2410 = vmatpush1.msra.mxu0 0.0
  %2411 = vmatprep.subr.mxu0 0.0
  %2412 = vmatpush1.msra.mxu0 0.0
  %2413 = vmatprep.subr.mxu0 0.0
  %2414 = vmatpush1.msra.mxu0 0.0
  %2415 = vmatprep.subr.mxu0 0.0
  %2416 = vmatpush1.msra.mxu0 0.0
  %2417 = vmatprep.subr.mxu0 0.0
  %2418 = vmatpush1.msra.mxu0 0.0
  %2419 = vmatprep.subr.mxu0 0.0
  %2420 = vmatpush1.msra.mxu0 0.0
  %2421 = vmatprep.subr.mxu0 0.0
  %2422 = vmatpush1.msra.mxu0 0.0
  %2423 = vmatprep.subr.mxu0 0.0
  %2424 = vmatpush1.msra.mxu0 0.0
  %2425 = vmatprep.subr.mxu0 0.0
  %2426 = vmatpush1.msra.mxu0 0.0
  %2427 = vmatprep.subr.mxu0 0.0
  %2428 = vmatpush1.msra.mxu0 0.0
  %2429 = vmatprep.subr.mxu0 0.0
  %2430 = vmatpush1.msra.mxu0 0.0
  %2431 = vmatprep.subr.mxu0 0.0
  %2432 = vmatpush1.msra.mxu0 0.0
  %2433 = vmatprep.subr.mxu0 0.0
  %2434 = vmatpush1.msra.mxu0 0.0
  %2435 = vmatprep.subr.mxu0 0.0
  %2436 = vmatpush1.msra.mxu0 0.0
  %2437 = vmatprep.subr.mxu0 0.0
  %2438 = vmatpush1.msra.mxu0 0.0
  %2439 = vmatprep.subr.mxu0 0.0
  %2440 = vmatpush1.msra.mxu0 0.0
  %2441 = vmatprep.subr.mxu0 0.0
  %2442 = vmatpush1.msra.mxu0 0.0
  %2443 = vmatprep.subr.mxu0 0.0
  %2444 = vmatpush1.msra.mxu0 0.0
  %2445 = vmatprep.subr.mxu0 0.0
  %2446 = vmatpush1.msra.mxu0 0.0
  %2447 = vmatprep.subr.mxu0 0.0
  %2448 = vmatpush1.msra.mxu0 0.0
  %2449 = vmatprep.subr.mxu0 0.0
  %2450 = vmatpush1.msra.mxu0 0.0
  %2451 = vmatprep.subr.mxu0 0.0
  %2452 = vmatpush1.msra.mxu0 0.0
  %2453 = vmatprep.mubr.f32.mxu0 0.0
  %2454 = vmatmul.mubr.f32.gmra.mrb[0].mxu0 %v2384
  %v2455 = vpop.f32.mrb[0].mxu0
  %v2456 = vadd.f32 0.0, %v2455
  %v2457 = vpop.f32.mrb[0].mxu0
  %2458 = vmatprep.mubr.f32.mxu0 0.0
  %2459 = vmatmul.mubr.f32.gmra.mrb[0].mxu0 %v2387
  %v2460 = vpop.f32.mrb[0].mxu0
  %v2461 = vadd.f32 0.0, %v2460
  %v2462 = vpop.f32.mrb[0].mxu0
  %2463 = vdwg.mxu0
  %2466 = vrot.lane.b32.xlu0 %v2282, 16
  %v2467 = vpop.permute.xlu0 %2466
  %2468 = vrot.lane.b32.xlu0 %v2287, 16
  %v2469 = vpop.permute.xlu0 %2468
  %2474 = vrot.lane.b32.xlu0 %v2369, 32
  %v2475 = vpop.permute.xlu0 %2474
  %2476 = vrot.lane.b32.xlu0 %v2374, 32
  %v2477 = vpop.permute.xlu0 %2476
  %2482 = vrot.lane.b32.xlu0 %v2456, 48
  %v2483 = vpop.permute.xlu0 %2482
  %2484 = vrot.lane.b32.xlu0 %v2461, 48
  %v2485 = vpop.permute.xlu0 %2484
  %v2488 = vsel %vm286, %v2195, %v2467
  %v2489 = vsel %vm286, %v2200, %v2469
  %v2490 = vsel %vm504, %v2488, %v2475
  %v2491 = vsel %vm504, %v2489, %v2477
  %vm2492 = vcmask 392192
  %v2493 = vsel %vm2492, %v2490, %v2483
  %v2494 = vsel %vm2492, %v2491, %v2485
  %2497 = vrot.lane.b32.xlu0 %v578, 56
  %v2498 = vpop.permute.xlu0 %2497
  %2499 = vrot.lane.b32.xlu0 %v580, 56
  %v2500 = vpop.permute.xlu0 %2499
  %2501 = vrot.lane.b32.xlu0 %v584, 56
  %v2502 = vpop.permute.xlu0 %2501
  %2503 = vrot.lane.b32.xlu0 %v586, 56
  %v2504 = vpop.permute.xlu0 %2503
  %vm2505 = vcmask 457728
  %v2506 = vsel %vm2505, %v2498, %v2500
  %v2507 = vsel %vm2505, %v2502, %v2504
  %v2510 = vadd.f32 %v2493, %v2506
  %v2511 = vadd.f32 %v2494, %v2507
  %v2513 = vlaneseq
  %v2514 = vshrl.u32 %v2513, 7
  %v2515 = vsub.s32 0, %v2514
  %v2516 = vrot.slane %v628, %v2515
  %v2518 = vadd.f32 %v2510, %v2516
  %v2519 = vadd.f32 %v2511, %v2516
  %vm2520 = vcmp.gt.f32.partialorder %v2518, 0.0
  %vm2521 = vcmp.gt.f32.partialorder %v2519, 0.0
  %v2522 = vmin.f32 %v2518, 0.0
  %v2523 = vmin.f32 %v2519, 0.0
  %v2524 = vmul.f32 %v2522, 1.442695
  %v2525 = vpow.pop %v2524
  %v2526 = vmul.f32 %v2523, 1.442695
  %v2527 = vpow.pop %v2526
  %v2528 = vsub.f32 %v2525, 1.0
  %v2529 = vsub.f32 %v2527, 1.0
  %v2530 = vsel %vm2520, %v2518, %v2528
  %v2531 = vsel %vm2521, %v2519, %v2529
  %v2532 = vld [vmem:[%s6] sm:$0xff]
  %v2533 = vld [vmem:[%s6 + $0x8] sm:$0xff]
  %v2534 = vld [vmem:[%s6 + $0x10] sm:$0xff]
  %v2535 = vld [vmem:[%s6 + $0x18] sm:$0xff]
  %v2536 = vld [vmem:[%s6 + $0x20] sm:$0xff]
  %v2537 = vld [vmem:[%s6 + $0x28] sm:$0xff]
  %v2538 = vld [vmem:[%s6 + $0x30] sm:$0xff]
  %v2539 = vld [vmem:[%s6 + $0x38] sm:$0xff]
  %vm2540 = vcmask 523264
  %v2542 = vsel %vm2540, %v2530, 0
  %v2545 = vsel %vm2540, %v2531, 0
  %2547 = vmatprep.subr.mxu0 0.0
  %2548 = vmatpush1.msra.mxu0 %v2532
  %2549 = vmatprep.subr.mxu0 0.0
  %2550 = vmatpush1.msra.mxu0 %v2533
  %2551 = vmatprep.subr.mxu0 0.0
  %2552 = vmatpush1.msra.mxu0 %v2534
  %2553 = vmatprep.subr.mxu0 0.0
  %2554 = vmatpush1.msra.mxu0 %v2535
  %2555 = vmatprep.subr.mxu0 0.0
  %2556 = vmatpush1.msra.mxu0 %v2536
  %2557 = vmatprep.subr.mxu0 0.0
  %2558 = vmatpush1.msra.mxu0 %v2537
  %2559 = vmatprep.subr.mxu0 0.0
  %2560 = vmatpush1.msra.mxu0 %v2538
  %2561 = vmatprep.subr.mxu0 0.0
  %2562 = vmatpush1.msra.mxu0 %v2539
  %2563 = vmatprep.subr.mxu0 0.0
  %2564 = vmatpush1.msra.mxu0 0.0
  %2565 = vmatprep.subr.mxu0 0.0
  %2566 = vmatpush1.msra.mxu0 0.0
  %2567 = vmatprep.subr.mxu0 0.0
  %2568 = vmatpush1.msra.mxu0 0.0
  %2569 = vmatprep.subr.mxu0 0.0
  %2570 = vmatpush1.msra.mxu0 0.0
  %2571 = vmatprep.subr.mxu0 0.0
  %2572 = vmatpush1.msra.mxu0 0.0
  %2573 = vmatprep.subr.mxu0 0.0
  %2574 = vmatpush1.msra.mxu0 0.0
  %2575 = vmatprep.subr.mxu0 0.0
  %2576 = vmatpush1.msra.mxu0 0.0
  %2577 = vmatprep.subr.mxu0 0.0
  %2578 = vmatpush1.msra.mxu0 0.0
  %2579 = vmatprep.subr.mxu0 0.0
  %2580 = vmatpush1.msra.mxu0 0.0
  %2581 = vmatprep.subr.mxu0 0.0
  %2582 = vmatpush1.msra.mxu0 0.0
  %2583 = vmatprep.subr.mxu0 0.0
  %2584 = vmatpush1.msra.mxu0 0.0
  %2585 = vmatprep.subr.mxu0 0.0
  %2586 = vmatpush1.msra.mxu0 0.0
  %2587 = vmatprep.subr.mxu0 0.0
  %2588 = vmatpush1.msra.mxu0 0.0
  %2589 = vmatprep.subr.mxu0 0.0
  %2590 = vmatpush1.msra.mxu0 0.0
  %2591 = vmatprep.subr.mxu0 0.0
  %2592 = vmatpush1.msra.mxu0 0.0
  %2593 = vmatprep.subr.mxu0 0.0
  %2594 = vmatpush1.msra.mxu0 0.0
  %2595 = vmatprep.subr.mxu0 0.0
  %2596 = vmatpush1.msra.mxu0 0.0
  %2597 = vmatprep.subr.mxu0 0.0
  %2598 = vmatpush1.msra.mxu0 0.0
  %2599 = vmatprep.subr.mxu0 0.0
  %2600 = vmatpush1.msra.mxu0 0.0
  %2601 = vmatprep.subr.mxu0 0.0
  %2602 = vmatpush1.msra.mxu0 0.0
  %2603 = vmatprep.subr.mxu0 0.0
  %2604 = vmatpush1.msra.mxu0 0.0
  %2605 = vmatprep.subr.mxu0 0.0
  %2606 = vmatpush1.msra.mxu0 0.0
  %2607 = vmatprep.subr.mxu0 0.0
  %2608 = vmatpush1.msra.mxu0 0.0
  %2609 = vmatprep.subr.mxu0 0.0
  %2610 = vmatpush1.msra.mxu0 0.0
  %2611 = vmatprep.mubr.f32.mxu0 0.0
  %2612 = vmatmul.mubr.f32.gmra.mrb[0].mxu0 %v2542
  %v2613 = vpop.f32.mrb[0].mxu0
  %v2614 = vadd.f32 0.0, %v2613
  %v2615 = vpop.f32.mrb[0].mxu0
  %2616 = vmatprep.mubr.f32.mxu0 0.0
  %2617 = vmatmul.mubr.f32.gmra.mrb[0].mxu0 %v2545
  %v2618 = vpop.f32.mrb[0].mxu0
  %v2619 = vadd.f32 0.0, %v2618
  %v2620 = vpop.f32.mrb[0].mxu0
  %2621 = vdwg.mxu0
  %2624 = vrot.lane.b32.xlu0 %v2614, 96
  %v2625 = vpop.permute.xlu0 %2624
  %2626 = vrot.lane.b32.xlu0 %v2619, 96
  %v2627 = vpop.permute.xlu0 %2626
  %2630 = vxpose.xlu0.b32.start [1/16] %v2625, 128
  %2631 = vxpose.xlu0.b32.cont [2/16] %v2627, 128
  %2632 = vxpose.xlu0.b32.cont [3/16] 0.0, 128
  %2633 = vxpose.xlu0.b32.cont [4/16] 0.0, 128
  %2634 = vxpose.xlu0.b32.cont [5/16] 0.0, 128
  %2635 = vxpose.xlu0.b32.cont [6/16] 0.0, 128
  %2636 = vxpose.xlu0.b32.cont [7/16] 0.0, 128
  %2637 = vxpose.xlu0.b32.cont [8/16] 0.0, 128
  %2638 = vxpose.xlu0.b32.cont [9/16] 0.0, 128
  %2639 = vxpose.xlu0.b32.cont [10/16] 0.0, 128
  %2640 = vxpose.xlu0.b32.cont [11/16] 0.0, 128
  %2641 = vxpose.xlu0.b32.cont [12/16] 0.0, 128
  %2642 = vxpose.xlu0.b32.cont [13/16] 0.0, 128
  %2643 = vxpose.xlu0.b32.cont [14/16] 0.0, 128
  %2644 = vxpose.xlu0.b32.cont [15/16] 0.0, 128
  %2645 = vxpose.xlu0.b32.end [16/16] 0.0, 128
  %v2646 = vpop.trf.xlu0
  %v2647 = vpop.trf.xlu0
  %v2648 = vpop.trf.xlu0
  %v2649 = vpop.trf.xlu0
  %v2650 = vpop.trf.xlu0
  %v2651 = vpop.trf.xlu0
  %v2652 = vpop.trf.xlu0
  %v2653 = vpop.trf.xlu0
  %v2654 = vpop.trf.xlu0
  %v2655 = vpop.trf.xlu0
  %v2656 = vpop.trf.xlu0
  %v2657 = vpop.trf.xlu0
  %v2658 = vpop.trf.xlu0
  %v2659 = vpop.trf.xlu0
  %v2660 = vpop.trf.xlu0
  %v2661 = vpop.trf.xlu0
  %v2662 = vld [vmem:[%s7] sm:$0x1]
  %v2663 = vlaneseq
  %v2664 = vshrl.u32 %v2663, 7
  %v2665 = vsub.s32 0, %v2664
  %v2666 = vrot.slane %v2646, %v2665
  %2668 = vbcast.lane.b32.xlu0 %v2666, 256
  %v2669 = vpop.permute.xlu0 %2668
  %s2671 = sor.u32 256, 8
  %2672 = vbcast.lane.b32.xlu0 %v2666, %s2671
  %v2673 = vpop.permute.xlu0 %2672
  %v2674 = vlaneseq
  %v2675 = vshrl.u32 %v2674, 7
  %v2676 = vsub.s32 1, %v2675
  %v2677 = vrot.slane %v2646, %v2676
  %2679 = vbcast.lane.b32.xlu0 %v2677, 256
  %v2680 = vpop.permute.xlu0 %2679
  %s2682 = sor.u32 256, 8
  %2683 = vbcast.lane.b32.xlu0 %v2677, %s2682
  %v2684 = vpop.permute.xlu0 %2683
  %v2685 = vlaneseq
  %v2686 = vshrl.u32 %v2685, 7
  %v2687 = vsub.s32 2, %v2686
  %v2688 = vrot.slane %v2646, %v2687
  %2690 = vbcast.lane.b32.xlu0 %v2688, 256
  %v2691 = vpop.permute.xlu0 %2690
  %s2693 = sor.u32 256, 8
  %2694 = vbcast.lane.b32.xlu0 %v2688, %s2693
  %v2695 = vpop.permute.xlu0 %2694
  %v2696 = vlaneseq
  %v2697 = vshrl.u32 %v2696, 7
  %v2698 = vsub.s32 3, %v2697
  %v2699 = vrot.slane %v2646, %v2698
  %2701 = vbcast.lane.b32.xlu0 %v2699, 256
  %v2702 = vpop.permute.xlu0 %2701
  %s2704 = sor.u32 256, 8
  %2705 = vbcast.lane.b32.xlu0 %v2699, %s2704
  %v2706 = vpop.permute.xlu0 %2705
  %v2708 = vcombine.high %v2646, %v2646
  %v2710 = vunpack.c.l.s4 1966171168
  %v2711 = vunpack.c.0.s8 %v2710
  %v2712 = vlaneseq
  %v2713 = vshrl.u32 %v2712, 7
  %v2714 = vsub.s32 %v2711, %v2713
  %v2715 = vrot.slane %v2708, %v2714
  %v2716 = vcombine.high %v2715, %v2715
  %v2718 = vunpack.c.l.s4 1966171168
  %v2719 = vunpack.c.0.s8 %v2718
  %v2720 = vlaneseq
  %v2721 = vshrl.u32 %v2720, 7
  %v2722 = vsub.s32 %v2719, %v2721
  %v2723 = vrot.slane %v2715, %v2722
  %v2725 = vunpack.c.l.s4 1966171168
  %v2726 = vunpack.c.0.s8 %v2725
  %v2727 = vlaneseq
  %v2728 = vshrl.u32 %v2727, 7
  %v2729 = vsub.s32 %v2726, %v2728
  %v2730 = vrot.slane %v2716, %v2729
  %v2731 = vcombine.high %v2723, %v2723
  %v2732 = vcombine.high %v2730, %v2730
  %v2733 = vlaneseq
  %v2734 = vshrl.u32 %v2733, 7
  %v2735 = vsub.s32 0, %v2734
  %v2736 = vrot.slane %v2723, %v2735
  %v2737 = vlaneseq
  %v2738 = vshrl.u32 %v2737, 7
  %v2739 = vsub.s32 0, %v2738
  %v2740 = vrot.slane %v2730, %v2739
  %v2741 = vlaneseq
  %v2742 = vshrl.u32 %v2741, 7
  %v2743 = vsub.s32 0, %v2742
  %v2744 = vrot.slane %v2731, %v2743
  %v2745 = vlaneseq
  %v2746 = vshrl.u32 %v2745, 7
  %v2747 = vsub.s32 0, %v2746
  %v2748 = vrot.slane %v2732, %v2747
  %v2753 = vadd.f32 %v2669, %v2736
  %v2754 = vadd.f32 %v2673, %v2736
  %v2755 = vadd.f32 %v2680, %v2740
  %v2756 = vadd.f32 %v2684, %v2740
  %v2757 = vadd.f32 %v2691, %v2744
  %v2758 = vadd.f32 %v2695, %v2744
  %v2759 = vadd.f32 %v2702, %v2748
  %v2760 = vadd.f32 %v2706, %v2748
  %2761 = vset.pattern.permute.xlu0 4
  %2762 = vperm.xlu0 %2761, %v370
  %v2763 = vpop.permute.xlu0 %2762
  %2764 = vset.pattern.permute.xlu0 4
  %2765 = vperm.xlu0 %2764, %v373
  %v2766 = vpop.permute.xlu0 %2765
  %2767 = vset.pattern.permute.xlu0 4
  %2768 = vperm.xlu0 %2767, %v378
  %v2769 = vpop.permute.xlu0 %2768
  %2770 = vset.pattern.permute.xlu0 4
  %2771 = vperm.xlu0 %2770, %v381
  %v2772 = vpop.permute.xlu0 %2771
  %2773 = vset.pattern.permute.xlu0 4
  %2774 = vperm.xlu0 %2773, %v386
  %v2775 = vpop.permute.xlu0 %2774
  %2776 = vset.pattern.permute.xlu0 4
  %2777 = vperm.xlu0 %2776, %v389
  %v2778 = vpop.permute.xlu0 %2777
  %2779 = vset.pattern.permute.xlu0 4
  %2780 = vperm.xlu0 %2779, %v394
  %v2781 = vpop.permute.xlu0 %2780
  %2782 = vset.pattern.permute.xlu0 4
  %2783 = vperm.xlu0 %2782, %v397
  %v2784 = vpop.permute.xlu0 %2783
  %2785 = vset.pattern.permute.xlu0 4
  %2786 = vperm.xlu0 %2785, %v402
  %v2787 = vpop.permute.xlu0 %2786
  %2788 = vset.pattern.permute.xlu0 4
  %2789 = vperm.xlu0 %2788, %v405
  %v2790 = vpop.permute.xlu0 %2789
  %2791 = vset.pattern.permute.xlu0 4
  %2792 = vperm.xlu0 %2791, %v410
  %v2793 = vpop.permute.xlu0 %2792
  %2794 = vset.pattern.permute.xlu0 4
  %2795 = vperm.xlu0 %2794, %v413
  %v2796 = vpop.permute.xlu0 %2795
  %2797 = vset.pattern.permute.xlu0 4
  %2798 = vperm.xlu0 %2797, %v418
  %v2799 = vpop.permute.xlu0 %2798
  %2800 = vset.pattern.permute.xlu0 4
  %2801 = vperm.xlu0 %2800, %v421
  %v2802 = vpop.permute.xlu0 %2801
  %2803 = vset.pattern.permute.xlu0 4
  %2804 = vperm.xlu0 %2803, %v426
  %v2805 = vpop.permute.xlu0 %2804
  %2806 = vset.pattern.permute.xlu0 4
  %2807 = vperm.xlu0 %2806, %v429
  %v2808 = vpop.permute.xlu0 %2807
  %2809 = vset.pattern.permute.xlu0 4
  %2810 = vperm.xlu0 %2809, %v434
  %v2811 = vpop.permute.xlu0 %2810
  %2812 = vset.pattern.permute.xlu0 4
  %2813 = vperm.xlu0 %2812, %v437
  %v2814 = vpop.permute.xlu0 %2813
  %2815 = vset.pattern.permute.xlu0 4
  %2816 = vperm.xlu0 %2815, %v442
  %v2817 = vpop.permute.xlu0 %2816
  %2818 = vset.pattern.permute.xlu0 4
  %2819 = vperm.xlu0 %2818, %v445
  %v2820 = vpop.permute.xlu0 %2819
  %2821 = vset.pattern.permute.xlu0 4
  %2822 = vperm.xlu0 %2821, %v450
  %v2823 = vpop.permute.xlu0 %2822
  %2824 = vset.pattern.permute.xlu0 4
  %2825 = vperm.xlu0 %2824, %v453
  %v2826 = vpop.permute.xlu0 %2825
  %2827 = vset.pattern.permute.xlu0 4
  %2828 = vperm.xlu0 %2827, %v458
  %v2829 = vpop.permute.xlu0 %2828
  %2830 = vset.pattern.permute.xlu0 4
  %2831 = vperm.xlu0 %2830, %v461
  %v2832 = vpop.permute.xlu0 %2831
  %2833 = vset.pattern.permute.xlu0 4
  %2834 = vperm.xlu0 %2833, %v466
  %v2835 = vpop.permute.xlu0 %2834
  %2836 = vset.pattern.permute.xlu0 4
  %2837 = vperm.xlu0 %2836, %v469
  %v2838 = vpop.permute.xlu0 %2837
  %2839 = vset.pattern.permute.xlu0 4
  %2840 = vperm.xlu0 %2839, %v474
  %v2841 = vpop.permute.xlu0 %2840
  %2842 = vset.pattern.permute.xlu0 4
  %2843 = vperm.xlu0 %2842, %v477
  %v2844 = vpop.permute.xlu0 %2843
  %2845 = vset.pattern.permute.xlu0 4
  %2846 = vperm.xlu0 %2845, %v482
  %v2847 = vpop.permute.xlu0 %2846
  %2848 = vset.pattern.permute.xlu0 4
  %2849 = vperm.xlu0 %2848, %v485
  %v2850 = vpop.permute.xlu0 %2849
  %2851 = vset.pattern.permute.xlu0 4
  %2852 = vperm.xlu0 %2851, %v490
  %v2853 = vpop.permute.xlu0 %2852
  %2854 = vset.pattern.permute.xlu0 4
  %2855 = vperm.xlu0 %2854, %v493
  %v2856 = vpop.permute.xlu0 %2855
  %2857 = vset.pattern.permute.xlu0 4
  %2858 = vperm.xlu0 %2857, %v662
  %v2859 = vpop.permute.xlu0 %2858
  %2860 = vset.pattern.permute.xlu0 4
  %2861 = vperm.xlu0 %2860, %v664
  %v2862 = vpop.permute.xlu0 %2861
  %2863 = vset.pattern.permute.xlu0 4
  %2864 = vperm.xlu0 %2863, %v666
  %v2865 = vpop.permute.xlu0 %2864
  %2866 = vset.pattern.permute.xlu0 4
  %2867 = vperm.xlu0 %2866, %v668
  %v2868 = vpop.permute.xlu0 %2867
  %2869 = vset.pattern.permute.xlu0 4
  %2870 = vperm.xlu0 %2869, %v670
  %v2871 = vpop.permute.xlu0 %2870
  %2872 = vset.pattern.permute.xlu0 4
  %2873 = vperm.xlu0 %2872, %v672
  %v2874 = vpop.permute.xlu0 %2873
  %2875 = vset.pattern.permute.xlu0 4
  %2876 = vperm.xlu0 %2875, %v674
  %v2877 = vpop.permute.xlu0 %2876
  %2878 = vset.pattern.permute.xlu0 4
  %2879 = vperm.xlu0 %2878, %v676
  %v2880 = vpop.permute.xlu0 %2879
  %2881 = vset.pattern.permute.xlu0 4
  %2882 = vperm.xlu0 %2881, %v678
  %v2883 = vpop.permute.xlu0 %2882
  %2884 = vset.pattern.permute.xlu0 4
  %2885 = vperm.xlu0 %2884, %v680
  %v2886 = vpop.permute.xlu0 %2885
  %2887 = vset.pattern.permute.xlu0 4
  %2888 = vperm.xlu0 %2887, %v682
  %v2889 = vpop.permute.xlu0 %2888
  %2890 = vset.pattern.permute.xlu0 4
  %2891 = vperm.xlu0 %2890, %v684
  %v2892 = vpop.permute.xlu0 %2891
  %2893 = vset.pattern.permute.xlu0 4
  %2894 = vperm.xlu0 %2893, %v686
  %v2895 = vpop.permute.xlu0 %2894
  %2896 = vset.pattern.permute.xlu0 4
  %2897 = vperm.xlu0 %2896, %v688
  %v2898 = vpop.permute.xlu0 %2897
  %2899 = vset.pattern.permute.xlu0 4
  %2900 = vperm.xlu0 %2899, %v690
  %v2901 = vpop.permute.xlu0 %2900
  %2902 = vset.pattern.permute.xlu0 4
  %2903 = vperm.xlu0 %2902, %v692
  %v2904 = vpop.permute.xlu0 %2903
  %2905 = vset.pattern.permute.xlu0 4
  %2906 = vperm.xlu0 %2905, %v694
  %v2907 = vpop.permute.xlu0 %2906
  %2908 = vset.pattern.permute.xlu0 4
  %2909 = vperm.xlu0 %2908, %v696
  %v2910 = vpop.permute.xlu0 %2909
  %2911 = vset.pattern.permute.xlu0 4
  %2912 = vperm.xlu0 %2911, %v698
  %v2913 = vpop.permute.xlu0 %2912
  %2914 = vset.pattern.permute.xlu0 4
  %2915 = vperm.xlu0 %2914, %v700
  %v2916 = vpop.permute.xlu0 %2915
  %2917 = vset.pattern.permute.xlu0 4
  %2918 = vperm.xlu0 %2917, %v702
  %v2919 = vpop.permute.xlu0 %2918
  %2920 = vset.pattern.permute.xlu0 4
  %2921 = vperm.xlu0 %2920, %v704
  %v2922 = vpop.permute.xlu0 %2921
  %2923 = vset.pattern.permute.xlu0 4
  %2924 = vperm.xlu0 %2923, %v706
  %v2925 = vpop.permute.xlu0 %2924
  %2926 = vset.pattern.permute.xlu0 4
  %2927 = vperm.xlu0 %2926, %v708
  %v2928 = vpop.permute.xlu0 %2927
  %2929 = vset.pattern.permute.xlu0 4
  %2930 = vperm.xlu0 %2929, %v710
  %v2931 = vpop.permute.xlu0 %2930
  %2932 = vset.pattern.permute.xlu0 4
  %2933 = vperm.xlu0 %2932, %v712
  %v2934 = vpop.permute.xlu0 %2933
  %2935 = vset.pattern.permute.xlu0 4
  %2936 = vperm.xlu0 %2935, %v714
  %v2937 = vpop.permute.xlu0 %2936
  %2938 = vset.pattern.permute.xlu0 4
  %2939 = vperm.xlu0 %2938, %v716
  %v2940 = vpop.permute.xlu0 %2939
  %2941 = vset.pattern.permute.xlu0 4
  %2942 = vperm.xlu0 %2941, %v718
  %v2943 = vpop.permute.xlu0 %2942
  %2944 = vset.pattern.permute.xlu0 4
  %2945 = vperm.xlu0 %2944, %v720
  %v2946 = vpop.permute.xlu0 %2945
  %2947 = vset.pattern.permute.xlu0 4
  %2948 = vperm.xlu0 %2947, %v722
  %v2949 = vpop.permute.xlu0 %2948
  %2950 = vset.pattern.permute.xlu0 4
  %2951 = vperm.xlu0 %2950, %v724
  %v2952 = vpop.permute.xlu0 %2951
  %2953 = vset.pattern.permute.xlu0 4
  %2954 = vperm.xlu0 %2953, %v726
  %v2955 = vpop.permute.xlu0 %2954
  %2956 = vset.pattern.permute.xlu0 4
  %2957 = vperm.xlu0 %2956, %v728
  %v2958 = vpop.permute.xlu0 %2957
  %2959 = vset.pattern.permute.xlu0 4
  %2960 = vperm.xlu0 %2959, %v730
  %v2961 = vpop.permute.xlu0 %2960
  %2962 = vset.pattern.permute.xlu0 4
  %2963 = vperm.xlu0 %2962, %v732
  %v2964 = vpop.permute.xlu0 %2963
  %2965 = vset.pattern.permute.xlu0 4
  %2966 = vperm.xlu0 %2965, %v734
  %v2967 = vpop.permute.xlu0 %2966
  %2968 = vset.pattern.permute.xlu0 4
  %2969 = vperm.xlu0 %2968, %v736
  %v2970 = vpop.permute.xlu0 %2969
  %2971 = vset.pattern.permute.xlu0 4
  %2972 = vperm.xlu0 %2971, %v738
  %v2973 = vpop.permute.xlu0 %2972
  %2974 = vset.pattern.permute.xlu0 4
  %2975 = vperm.xlu0 %2974, %v740
  %v2976 = vpop.permute.xlu0 %2975
  %2977 = vset.pattern.permute.xlu0 4
  %2978 = vperm.xlu0 %2977, %v742
  %v2979 = vpop.permute.xlu0 %2978
  %2980 = vset.pattern.permute.xlu0 4
  %2981 = vperm.xlu0 %2980, %v744
  %v2982 = vpop.permute.xlu0 %2981
  %2983 = vset.pattern.permute.xlu0 4
  %2984 = vperm.xlu0 %2983, %v746
  %v2985 = vpop.permute.xlu0 %2984
  %2986 = vset.pattern.permute.xlu0 4
  %2987 = vperm.xlu0 %2986, %v748
  %v2988 = vpop.permute.xlu0 %2987
  %2989 = vset.pattern.permute.xlu0 4
  %2990 = vperm.xlu0 %2989, %v750
  %v2991 = vpop.permute.xlu0 %2990
  %2992 = vset.pattern.permute.xlu0 4
  %2993 = vperm.xlu0 %2992, %v752
  %v2994 = vpop.permute.xlu0 %2993
  %2995 = vset.pattern.permute.xlu0 4
  %2996 = vperm.xlu0 %2995, %v754
  %v2997 = vpop.permute.xlu0 %2996
  %2998 = vset.pattern.permute.xlu0 4
  %2999 = vperm.xlu0 %2998, %v756
  %v3000 = vpop.permute.xlu0 %2999
  %3001 = vset.pattern.permute.xlu0 4
  %3002 = vperm.xlu0 %3001, %v758
  %v3003 = vpop.permute.xlu0 %3002
  %3004 = vset.pattern.permute.xlu0 4
  %3005 = vperm.xlu0 %3004, %v760
  %v3006 = vpop.permute.xlu0 %3005
  %3007 = vset.pattern.permute.xlu0 4
  %3008 = vperm.xlu0 %3007, %v762
  %v3009 = vpop.permute.xlu0 %3008
  %3010 = vset.pattern.permute.xlu0 4
  %3011 = vperm.xlu0 %3010, %v764
  %v3012 = vpop.permute.xlu0 %3011
  %3013 = vset.pattern.permute.xlu0 4
  %3014 = vperm.xlu0 %3013, %v766
  %v3015 = vpop.permute.xlu0 %3014
  %3016 = vset.pattern.permute.xlu0 4
  %3017 = vperm.xlu0 %3016, %v768
  %v3018 = vpop.permute.xlu0 %3017
  %3019 = vset.pattern.permute.xlu0 4
  %3020 = vperm.xlu0 %3019, %v770
  %v3021 = vpop.permute.xlu0 %3020
  %3022 = vset.pattern.permute.xlu0 4
  %3023 = vperm.xlu0 %3022, %v772
  %v3024 = vpop.permute.xlu0 %3023
  %3025 = vset.pattern.permute.xlu0 4
  %3026 = vperm.xlu0 %3025, %v774
  %v3027 = vpop.permute.xlu0 %3026
  %3028 = vset.pattern.permute.xlu0 4
  %3029 = vperm.xlu0 %3028, %v776
  %v3030 = vpop.permute.xlu0 %3029
  %3031 = vset.pattern.permute.xlu0 4
  %3032 = vperm.xlu0 %3031, %v778
  %v3033 = vpop.permute.xlu0 %3032
  %3034 = vset.pattern.permute.xlu0 4
  %3035 = vperm.xlu0 %3034, %v780
  %v3036 = vpop.permute.xlu0 %3035
  %3037 = vset.pattern.permute.xlu0 4
  %3038 = vperm.xlu0 %3037, %v782
  %v3039 = vpop.permute.xlu0 %3038
  %3040 = vset.pattern.permute.xlu0 4
  %3041 = vperm.xlu0 %3040, %v784
  %v3042 = vpop.permute.xlu0 %3041
  %3043 = vset.pattern.permute.xlu0 4
  %3044 = vperm.xlu0 %3043, %v786
  %v3045 = vpop.permute.xlu0 %3044
  %3046 = vset.pattern.permute.xlu0 4
  %3047 = vperm.xlu0 %3046, %v788
  %v3048 = vpop.permute.xlu0 %3047
  %3049 = vset.pattern.permute.xlu0 4
  %3050 = vperm.xlu0 %3049, %v790
  %v3051 = vpop.permute.xlu0 %3050
  %3052 = vset.pattern.permute.xlu0 4
  %3053 = vperm.xlu0 %3052, %v792
  %v3054 = vpop.permute.xlu0 %3053
  %3055 = vset.pattern.permute.xlu0 4
  %3056 = vperm.xlu0 %3055, %v794
  %v3057 = vpop.permute.xlu0 %3056
  %3058 = vset.pattern.permute.xlu0 4
  %3059 = vperm.xlu0 %3058, %v796
  %v3060 = vpop.permute.xlu0 %3059
  %3061 = vset.pattern.permute.xlu0 4
  %3062 = vperm.xlu0 %3061, %v798
  %v3063 = vpop.permute.xlu0 %3062
  %3064 = vset.pattern.permute.xlu0 4
  %3065 = vperm.xlu0 %3064, %v800
  %v3066 = vpop.permute.xlu0 %3065
  %3067 = vset.pattern.permute.xlu0 4
  %3068 = vperm.xlu0 %3067, %v802
  %v3069 = vpop.permute.xlu0 %3068
  %3070 = vset.pattern.permute.xlu0 4
  %3071 = vperm.xlu0 %3070, %v804
  %v3072 = vpop.permute.xlu0 %3071
  %3073 = vset.pattern.permute.xlu0 4
  %3074 = vperm.xlu0 %3073, %v806
  %v3075 = vpop.permute.xlu0 %3074
  %3076 = vset.pattern.permute.xlu0 4
  %3077 = vperm.xlu0 %3076, %v808
  %v3078 = vpop.permute.xlu0 %3077
  %3079 = vset.pattern.permute.xlu0 4
  %3080 = vperm.xlu0 %3079, %v810
  %v3081 = vpop.permute.xlu0 %3080
  %3082 = vset.pattern.permute.xlu0 4
  %3083 = vperm.xlu0 %3082, %v812
  %v3084 = vpop.permute.xlu0 %3083
  %3085 = vset.pattern.permute.xlu0 4
  %3086 = vperm.xlu0 %3085, %v814
  %v3087 = vpop.permute.xlu0 %3086
  %3088 = vset.pattern.permute.xlu0 4
  %3089 = vperm.xlu0 %3088, %v816
  %v3090 = vpop.permute.xlu0 %3089
  %3091 = vset.pattern.permute.xlu0 4
  %3092 = vperm.xlu0 %3091, %v818
  %v3093 = vpop.permute.xlu0 %3092
  %3094 = vset.pattern.permute.xlu0 4
  %3095 = vperm.xlu0 %3094, %v820
  %v3096 = vpop.permute.xlu0 %3095
  %3097 = vset.pattern.permute.xlu0 4
  %3098 = vperm.xlu0 %3097, %v822
  %v3099 = vpop.permute.xlu0 %3098
  %3100 = vset.pattern.permute.xlu0 4
  %3101 = vperm.xlu0 %3100, %v824
  %v3102 = vpop.permute.xlu0 %3101
  %3103 = vset.pattern.permute.xlu0 4
  %3104 = vperm.xlu0 %3103, %v826
  %v3105 = vpop.permute.xlu0 %3104
  %3106 = vset.pattern.permute.xlu0 4
  %3107 = vperm.xlu0 %3106, %v828
  %v3108 = vpop.permute.xlu0 %3107
  %3109 = vset.pattern.permute.xlu0 4
  %3110 = vperm.xlu0 %3109, %v830
  %v3111 = vpop.permute.xlu0 %3110
  %3112 = vset.pattern.permute.xlu0 4
  %3113 = vperm.xlu0 %3112, %v832
  %v3114 = vpop.permute.xlu0 %3113
  %3115 = vset.pattern.permute.xlu0 4
  %3116 = vperm.xlu0 %3115, %v834
  %v3117 = vpop.permute.xlu0 %3116
  %3118 = vset.pattern.permute.xlu0 4
  %3119 = vperm.xlu0 %3118, %v836
  %v3120 = vpop.permute.xlu0 %3119
  %3121 = vset.pattern.permute.xlu0 4
  %3122 = vperm.xlu0 %3121, %v838
  %v3123 = vpop.permute.xlu0 %3122
  %3124 = vset.pattern.permute.xlu0 4
  %3125 = vperm.xlu0 %3124, %v840
  %v3126 = vpop.permute.xlu0 %3125
  %3127 = vset.pattern.permute.xlu0 4
  %3128 = vperm.xlu0 %3127, %v842
  %v3129 = vpop.permute.xlu0 %3128
  %3130 = vset.pattern.permute.xlu0 4
  %3131 = vperm.xlu0 %3130, %v844
  %v3132 = vpop.permute.xlu0 %3131
  %3133 = vset.pattern.permute.xlu0 4
  %3134 = vperm.xlu0 %3133, %v846
  %v3135 = vpop.permute.xlu0 %3134
  %3136 = vset.pattern.permute.xlu0 4
  %3137 = vperm.xlu0 %3136, %v848
  %v3138 = vpop.permute.xlu0 %3137
  %3139 = vset.pattern.permute.xlu0 4
  %3140 = vperm.xlu0 %3139, %v850
  %v3141 = vpop.permute.xlu0 %3140
  %3142 = vset.pattern.permute.xlu0 4
  %3143 = vperm.xlu0 %3142, %v852
  %v3144 = vpop.permute.xlu0 %3143
  %v3145 = vlaneseq
  %v3146 = vshrl.u32 %v3145, 7
  %v3147 = vsub.s32 %v1336, %v3146
  %v3148 = vrot.slane %v2763, %v3147
  %v3149 = vlaneseq
  %v3150 = vshrl.u32 %v3149, 7
  %v3151 = vsub.s32 %v1341, %v3150
  %v3152 = vrot.slane %v2766, %v3151
  %v3153 = vsel %vm1346, %v3152, %v3148
  %v3154 = vlaneseq
  %v3155 = vshrl.u32 %v3154, 7
  %v3156 = vsub.s32 %v1336, %v3155
  %v3157 = vrot.slane %v2769, %v3156
  %v3158 = vlaneseq
  %v3159 = vshrl.u32 %v3158, 7
  %v3160 = vsub.s32 %v1341, %v3159
  %v3161 = vrot.slane %v2772, %v3160
  %v3162 = vsel %vm1346, %v3161, %v3157
  %v3163 = vlaneseq
  %v3164 = vshrl.u32 %v3163, 7
  %v3165 = vsub.s32 %v1336, %v3164
  %v3166 = vrot.slane %v2775, %v3165
  %v3167 = vlaneseq
  %v3168 = vshrl.u32 %v3167, 7
  %v3169 = vsub.s32 %v1341, %v3168
  %v3170 = vrot.slane %v2778, %v3169
  %v3171 = vsel %vm1346, %v3170, %v3166
  %v3172 = vlaneseq
  %v3173 = vshrl.u32 %v3172, 7
  %v3174 = vsub.s32 %v1336, %v3173
  %v3175 = vrot.slane %v2781, %v3174
  %v3176 = vlaneseq
  %v3177 = vshrl.u32 %v3176, 7
  %v3178 = vsub.s32 %v1341, %v3177
  %v3179 = vrot.slane %v2784, %v3178
  %v3180 = vsel %vm1346, %v3179, %v3175
  %v3181 = vlaneseq
  %v3182 = vshrl.u32 %v3181, 7
  %v3183 = vsub.s32 %v1336, %v3182
  %v3184 = vrot.slane %v2787, %v3183
  %v3185 = vlaneseq
  %v3186 = vshrl.u32 %v3185, 7
  %v3187 = vsub.s32 %v1341, %v3186
  %v3188 = vrot.slane %v2790, %v3187
  %v3189 = vsel %vm1346, %v3188, %v3184
  %v3190 = vlaneseq
  %v3191 = vshrl.u32 %v3190, 7
  %v3192 = vsub.s32 %v1336, %v3191
  %v3193 = vrot.slane %v2793, %v3192
  %v3194 = vlaneseq
  %v3195 = vshrl.u32 %v3194, 7
  %v3196 = vsub.s32 %v1341, %v3195
  %v3197 = vrot.slane %v2796, %v3196
  %v3198 = vsel %vm1346, %v3197, %v3193
  %v3199 = vlaneseq
  %v3200 = vshrl.u32 %v3199, 7
  %v3201 = vsub.s32 %v1336, %v3200
  %v3202 = vrot.slane %v2799, %v3201
  %v3203 = vlaneseq
  %v3204 = vshrl.u32 %v3203, 7
  %v3205 = vsub.s32 %v1341, %v3204
  %v3206 = vrot.slane %v2802, %v3205
  %v3207 = vsel %vm1346, %v3206, %v3202
  %v3208 = vlaneseq
  %v3209 = vshrl.u32 %v3208, 7
  %v3210 = vsub.s32 %v1336, %v3209
  %v3211 = vrot.slane %v2805, %v3210
  %v3212 = vlaneseq
  %v3213 = vshrl.u32 %v3212, 7
  %v3214 = vsub.s32 %v1341, %v3213
  %v3215 = vrot.slane %v2808, %v3214
  %v3216 = vsel %vm1346, %v3215, %v3211
  %v3217 = vlaneseq
  %v3218 = vshrl.u32 %v3217, 7
  %v3219 = vsub.s32 %v1336, %v3218
  %v3220 = vrot.slane %v2811, %v3219
  %v3221 = vlaneseq
  %v3222 = vshrl.u32 %v3221, 7
  %v3223 = vsub.s32 %v1341, %v3222
  %v3224 = vrot.slane %v2814, %v3223
  %v3225 = vsel %vm1346, %v3224, %v3220
  %v3226 = vlaneseq
  %v3227 = vshrl.u32 %v3226, 7
  %v3228 = vsub.s32 %v1336, %v3227
  %v3229 = vrot.slane %v2817, %v3228
  %v3230 = vlaneseq
  %v3231 = vshrl.u32 %v3230, 7
  %v3232 = vsub.s32 %v1341, %v3231
  %v3233 = vrot.slane %v2820, %v3232
  %v3234 = vsel %vm1346, %v3233, %v3229
  %v3235 = vlaneseq
  %v3236 = vshrl.u32 %v3235, 7
  %v3237 = vsub.s32 %v1336, %v3236
  %v3238 = vrot.slane %v2823, %v3237
  %v3239 = vlaneseq
  %v3240 = vshrl.u32 %v3239, 7
  %v3241 = vsub.s32 %v1341, %v3240
  %v3242 = vrot.slane %v2826, %v3241
  %v3243 = vsel %vm1346, %v3242, %v3238
  %v3244 = vlaneseq
  %v3245 = vshrl.u32 %v3244, 7
  %v3246 = vsub.s32 %v1336, %v3245
  %v3247 = vrot.slane %v2829, %v3246
  %v3248 = vlaneseq
  %v3249 = vshrl.u32 %v3248, 7
  %v3250 = vsub.s32 %v1341, %v3249
  %v3251 = vrot.slane %v2832, %v3250
  %v3252 = vsel %vm1346, %v3251, %v3247
  %v3253 = vlaneseq
  %v3254 = vshrl.u32 %v3253, 7
  %v3255 = vsub.s32 %v1336, %v3254
  %v3256 = vrot.slane %v2835, %v3255
  %v3257 = vlaneseq
  %v3258 = vshrl.u32 %v3257, 7
  %v3259 = vsub.s32 %v1341, %v3258
  %v3260 = vrot.slane %v2838, %v3259
  %v3261 = vsel %vm1346, %v3260, %v3256
  %v3262 = vlaneseq
  %v3263 = vshrl.u32 %v3262, 7
  %v3264 = vsub.s32 %v1336, %v3263
  %v3265 = vrot.slane %v2841, %v3264
  %v3266 = vlaneseq
  %v3267 = vshrl.u32 %v3266, 7
  %v3268 = vsub.s32 %v1341, %v3267
  %v3269 = vrot.slane %v2844, %v3268
  %v3270 = vsel %vm1346, %v3269, %v3265
  %v3271 = vlaneseq
  %v3272 = vshrl.u32 %v3271, 7
  %v3273 = vsub.s32 %v1336, %v3272
  %v3274 = vrot.slane %v2847, %v3273
  %v3275 = vlaneseq
  %v3276 = vshrl.u32 %v3275, 7
  %v3277 = vsub.s32 %v1341, %v3276
  %v3278 = vrot.slane %v2850, %v3277
  %v3279 = vsel %vm1346, %v3278, %v3274
  %v3280 = vlaneseq
  %v3281 = vshrl.u32 %v3280, 7
  %v3282 = vsub.s32 %v1336, %v3281
  %v3283 = vrot.slane %v2853, %v3282
  %v3284 = vlaneseq
  %v3285 = vshrl.u32 %v3284, 7
  %v3286 = vsub.s32 %v1341, %v3285
  %v3287 = vrot.slane %v2856, %v3286
  %v3288 = vsel %vm1346, %v3287, %v3283
  %v3289 = vlaneseq
  %v3290 = vshrl.u32 %v3289, 7
  %v3291 = vsub.s32 %v1336, %v3290
  %v3292 = vrot.slane %v2859, %v3291
  %v3293 = vlaneseq
  %v3294 = vshrl.u32 %v3293, 7
  %v3295 = vsub.s32 %v1341, %v3294
  %v3296 = vrot.slane %v2862, %v3295
  %v3297 = vsel %vm1346, %v3296, %v3292
  %v3298 = vlaneseq
  %v3299 = vshrl.u32 %v3298, 7
  %v3300 = vsub.s32 %v1336, %v3299
  %v3301 = vrot.slane %v2865, %v3300
  %v3302 = vlaneseq
  %v3303 = vshrl.u32 %v3302, 7
  %v3304 = vsub.s32 %v1341, %v3303
  %v3305 = vrot.slane %v2868, %v3304
  %v3306 = vsel %vm1346, %v3305, %v3301
  %v3307 = vlaneseq
  %v3308 = vshrl.u32 %v3307, 7
  %v3309 = vsub.s32 %v1336, %v3308
  %v3310 = vrot.slane %v2871, %v3309
  %v3311 = vlaneseq
  %v3312 = vshrl.u32 %v3311, 7
  %v3313 = vsub.s32 %v1341, %v3312
  %v3314 = vrot.slane %v2874, %v3313
  %v3315 = vsel %vm1346, %v3314, %v3310
  %v3316 = vlaneseq
  %v3317 = vshrl.u32 %v3316, 7
  %v3318 = vsub.s32 %v1336, %v3317
  %v3319 = vrot.slane %v2877, %v3318
  %v3320 = vlaneseq
  %v3321 = vshrl.u32 %v3320, 7
  %v3322 = vsub.s32 %v1341, %v3321
  %v3323 = vrot.slane %v2880, %v3322
  %v3324 = vsel %vm1346, %v3323, %v3319
  %v3325 = vlaneseq
  %v3326 = vshrl.u32 %v3325, 7
  %v3327 = vsub.s32 %v1336, %v3326
  %v3328 = vrot.slane %v2883, %v3327
  %v3329 = vlaneseq
  %v3330 = vshrl.u32 %v3329, 7
  %v3331 = vsub.s32 %v1341, %v3330
  %v3332 = vrot.slane %v2886, %v3331
  %v3333 = vsel %vm1346, %v3332, %v3328
  %v3334 = vlaneseq
  %v3335 = vshrl.u32 %v3334, 7
  %v3336 = vsub.s32 %v1336, %v3335
  %v3337 = vrot.slane %v2889, %v3336
  %v3338 = vlaneseq
  %v3339 = vshrl.u32 %v3338, 7
  %v3340 = vsub.s32 %v1341, %v3339
  %v3341 = vrot.slane %v2892, %v3340
  %v3342 = vsel %vm1346, %v3341, %v3337
  %v3343 = vlaneseq
  %v3344 = vshrl.u32 %v3343, 7
  %v3345 = vsub.s32 %v1336, %v3344
  %v3346 = vrot.slane %v2895, %v3345
  %v3347 = vlaneseq
  %v3348 = vshrl.u32 %v3347, 7
  %v3349 = vsub.s32 %v1341, %v3348
  %v3350 = vrot.slane %v2898, %v3349
  %v3351 = vsel %vm1346, %v3350, %v3346
  %v3352 = vlaneseq
  %v3353 = vshrl.u32 %v3352, 7
  %v3354 = vsub.s32 %v1336, %v3353
  %v3355 = vrot.slane %v2901, %v3354
  %v3356 = vlaneseq
  %v3357 = vshrl.u32 %v3356, 7
  %v3358 = vsub.s32 %v1341, %v3357
  %v3359 = vrot.slane %v2904, %v3358
  %v3360 = vsel %vm1346, %v3359, %v3355
  %v3361 = vlaneseq
  %v3362 = vshrl.u32 %v3361, 7
  %v3363 = vsub.s32 %v1336, %v3362
  %v3364 = vrot.slane %v2907, %v3363
  %v3365 = vlaneseq
  %v3366 = vshrl.u32 %v3365, 7
  %v3367 = vsub.s32 %v1341, %v3366
  %v3368 = vrot.slane %v2910, %v3367
  %v3369 = vsel %vm1346, %v3368, %v3364
  %v3370 = vlaneseq
  %v3371 = vshrl.u32 %v3370, 7
  %v3372 = vsub.s32 %v1336, %v3371
  %v3373 = vrot.slane %v2913, %v3372
  %v3374 = vlaneseq
  %v3375 = vshrl.u32 %v3374, 7
  %v3376 = vsub.s32 %v1341, %v3375
  %v3377 = vrot.slane %v2916, %v3376
  %v3378 = vsel %vm1346, %v3377, %v3373
  %v3379 = vlaneseq
  %v3380 = vshrl.u32 %v3379, 7
  %v3381 = vsub.s32 %v1336, %v3380
  %v3382 = vrot.slane %v2919, %v3381
  %v3383 = vlaneseq
  %v3384 = vshrl.u32 %v3383, 7
  %v3385 = vsub.s32 %v1341, %v3384
  %v3386 = vrot.slane %v2922, %v3385
  %v3387 = vsel %vm1346, %v3386, %v3382
  %v3388 = vlaneseq
  %v3389 = vshrl.u32 %v3388, 7
  %v3390 = vsub.s32 %v1336, %v3389
  %v3391 = vrot.slane %v2925, %v3390
  %v3392 = vlaneseq
  %v3393 = vshrl.u32 %v3392, 7
  %v3394 = vsub.s32 %v1341, %v3393
  %v3395 = vrot.slane %v2928, %v3394
  %v3396 = vsel %vm1346, %v3395, %v3391
  %v3397 = vlaneseq
  %v3398 = vshrl.u32 %v3397, 7
  %v3399 = vsub.s32 %v1336, %v3398
  %v3400 = vrot.slane %v2931, %v3399
  %v3401 = vlaneseq
  %v3402 = vshrl.u32 %v3401, 7
  %v3403 = vsub.s32 %v1341, %v3402
  %v3404 = vrot.slane %v2934, %v3403
  %v3405 = vsel %vm1346, %v3404, %v3400
  %v3406 = vlaneseq
  %v3407 = vshrl.u32 %v3406, 7
  %v3408 = vsub.s32 %v1336, %v3407
  %v3409 = vrot.slane %v2937, %v3408
  %v3410 = vlaneseq
  %v3411 = vshrl.u32 %v3410, 7
  %v3412 = vsub.s32 %v1341, %v3411
  %v3413 = vrot.slane %v2940, %v3412
  %v3414 = vsel %vm1346, %v3413, %v3409
  %v3415 = vlaneseq
  %v3416 = vshrl.u32 %v3415, 7
  %v3417 = vsub.s32 %v1336, %v3416
  %v3418 = vrot.slane %v2943, %v3417
  %v3419 = vlaneseq
  %v3420 = vshrl.u32 %v3419, 7
  %v3421 = vsub.s32 %v1341, %v3420
  %v3422 = vrot.slane %v2946, %v3421
  %v3423 = vsel %vm1346, %v3422, %v3418
  %v3424 = vlaneseq
  %v3425 = vshrl.u32 %v3424, 7
  %v3426 = vsub.s32 %v1336, %v3425
  %v3427 = vrot.slane %v2949, %v3426
  %v3428 = vlaneseq
  %v3429 = vshrl.u32 %v3428, 7
  %v3430 = vsub.s32 %v1341, %v3429
  %v3431 = vrot.slane %v2952, %v3430
  %v3432 = vsel %vm1346, %v3431, %v3427
  %v3433 = vlaneseq
  %v3434 = vshrl.u32 %v3433, 7
  %v3435 = vsub.s32 %v1336, %v3434
  %v3436 = vrot.slane %v2955, %v3435
  %v3437 = vlaneseq
  %v3438 = vshrl.u32 %v3437, 7
  %v3439 = vsub.s32 %v1341, %v3438
  %v3440 = vrot.slane %v2958, %v3439
  %v3441 = vsel %vm1346, %v3440, %v3436
  %v3442 = vlaneseq
  %v3443 = vshrl.u32 %v3442, 7
  %v3444 = vsub.s32 %v1336, %v3443
  %v3445 = vrot.slane %v2961, %v3444
  %v3446 = vlaneseq
  %v3447 = vshrl.u32 %v3446, 7
  %v3448 = vsub.s32 %v1341, %v3447
  %v3449 = vrot.slane %v2964, %v3448
  %v3450 = vsel %vm1346, %v3449, %v3445
  %v3451 = vlaneseq
  %v3452 = vshrl.u32 %v3451, 7
  %v3453 = vsub.s32 %v1336, %v3452
  %v3454 = vrot.slane %v2967, %v3453
  %v3455 = vlaneseq
  %v3456 = vshrl.u32 %v3455, 7
  %v3457 = vsub.s32 %v1341, %v3456
  %v3458 = vrot.slane %v2970, %v3457
  %v3459 = vsel %vm1346, %v3458, %v3454
  %v3460 = vlaneseq
  %v3461 = vshrl.u32 %v3460, 7
  %v3462 = vsub.s32 %v1336, %v3461
  %v3463 = vrot.slane %v2973, %v3462
  %v3464 = vlaneseq
  %v3465 = vshrl.u32 %v3464, 7
  %v3466 = vsub.s32 %v1341, %v3465
  %v3467 = vrot.slane %v2976, %v3466
  %v3468 = vsel %vm1346, %v3467, %v3463
  %v3469 = vlaneseq
  %v3470 = vshrl.u32 %v3469, 7
  %v3471 = vsub.s32 %v1336, %v3470
  %v3472 = vrot.slane %v2979, %v3471
  %v3473 = vlaneseq
  %v3474 = vshrl.u32 %v3473, 7
  %v3475 = vsub.s32 %v1341, %v3474
  %v3476 = vrot.slane %v2982, %v3475
  %v3477 = vsel %vm1346, %v3476, %v3472
  %v3478 = vlaneseq
  %v3479 = vshrl.u32 %v3478, 7
  %v3480 = vsub.s32 %v1336, %v3479
  %v3481 = vrot.slane %v2985, %v3480
  %v3482 = vlaneseq
  %v3483 = vshrl.u32 %v3482, 7
  %v3484 = vsub.s32 %v1341, %v3483
  %v3485 = vrot.slane %v2988, %v3484
  %v3486 = vsel %vm1346, %v3485, %v3481
  %v3487 = vlaneseq
  %v3488 = vshrl.u32 %v3487, 7
  %v3489 = vsub.s32 %v1336, %v3488
  %v3490 = vrot.slane %v2991, %v3489
  %v3491 = vlaneseq
  %v3492 = vshrl.u32 %v3491, 7
  %v3493 = vsub.s32 %v1341, %v3492
  %v3494 = vrot.slane %v2994, %v3493
  %v3495 = vsel %vm1346, %v3494, %v3490
  %v3496 = vlaneseq
  %v3497 = vshrl.u32 %v3496, 7
  %v3498 = vsub.s32 %v1336, %v3497
  %v3499 = vrot.slane %v2997, %v3498
  %v3500 = vlaneseq
  %v3501 = vshrl.u32 %v3500, 7
  %v3502 = vsub.s32 %v1341, %v3501
  %v3503 = vrot.slane %v3000, %v3502
  %v3504 = vsel %vm1346, %v3503, %v3499
  %v3505 = vlaneseq
  %v3506 = vshrl.u32 %v3505, 7
  %v3507 = vsub.s32 %v1336, %v3506
  %v3508 = vrot.slane %v3003, %v3507
  %v3509 = vlaneseq
  %v3510 = vshrl.u32 %v3509, 7
  %v3511 = vsub.s32 %v1341, %v3510
  %v3512 = vrot.slane %v3006, %v3511
  %v3513 = vsel %vm1346, %v3512, %v3508
  %v3514 = vlaneseq
  %v3515 = vshrl.u32 %v3514, 7
  %v3516 = vsub.s32 %v1336, %v3515
  %v3517 = vrot.slane %v3009, %v3516
  %v3518 = vlaneseq
  %v3519 = vshrl.u32 %v3518, 7
  %v3520 = vsub.s32 %v1341, %v3519
  %v3521 = vrot.slane %v3012, %v3520
  %v3522 = vsel %vm1346, %v3521, %v3517
  %v3523 = vlaneseq
  %v3524 = vshrl.u32 %v3523, 7
  %v3525 = vsub.s32 %v1336, %v3524
  %v3526 = vrot.slane %v3015, %v3525
  %v3527 = vlaneseq
  %v3528 = vshrl.u32 %v3527, 7
  %v3529 = vsub.s32 %v1341, %v3528
  %v3530 = vrot.slane %v3018, %v3529
  %v3531 = vsel %vm1346, %v3530, %v3526
  %v3532 = vlaneseq
  %v3533 = vshrl.u32 %v3532, 7
  %v3534 = vsub.s32 %v1336, %v3533
  %v3535 = vrot.slane %v3021, %v3534
  %v3536 = vlaneseq
  %v3537 = vshrl.u32 %v3536, 7
  %v3538 = vsub.s32 %v1341, %v3537
  %v3539 = vrot.slane %v3024, %v3538
  %v3540 = vsel %vm1346, %v3539, %v3535
  %v3541 = vlaneseq
  %v3542 = vshrl.u32 %v3541, 7
  %v3543 = vsub.s32 %v1336, %v3542
  %v3544 = vrot.slane %v3027, %v3543
  %v3545 = vlaneseq
  %v3546 = vshrl.u32 %v3545, 7
  %v3547 = vsub.s32 %v1341, %v3546
  %v3548 = vrot.slane %v3030, %v3547
  %v3549 = vsel %vm1346, %v3548, %v3544
  %v3550 = vlaneseq
  %v3551 = vshrl.u32 %v3550, 7
  %v3552 = vsub.s32 %v1336, %v3551
  %v3553 = vrot.slane %v3033, %v3552
  %v3554 = vlaneseq
  %v3555 = vshrl.u32 %v3554, 7
  %v3556 = vsub.s32 %v1341, %v3555
  %v3557 = vrot.slane %v3036, %v3556
  %v3558 = vsel %vm1346, %v3557, %v3553
  %v3559 = vlaneseq
  %v3560 = vshrl.u32 %v3559, 7
  %v3561 = vsub.s32 %v1336, %v3560
  %v3562 = vrot.slane %v3039, %v3561
  %v3563 = vlaneseq
  %v3564 = vshrl.u32 %v3563, 7
  %v3565 = vsub.s32 %v1341, %v3564
  %v3566 = vrot.slane %v3042, %v3565
  %v3567 = vsel %vm1346, %v3566, %v3562
  %v3568 = vlaneseq
  %v3569 = vshrl.u32 %v3568, 7
  %v3570 = vsub.s32 %v1336, %v3569
  %v3571 = vrot.slane %v3045, %v3570
  %v3572 = vlaneseq
  %v3573 = vshrl.u32 %v3572, 7
  %v3574 = vsub.s32 %v1341, %v3573
  %v3575 = vrot.slane %v3048, %v3574
  %v3576 = vsel %vm1346, %v3575, %v3571
  %v3577 = vlaneseq
  %v3578 = vshrl.u32 %v3577, 7
  %v3579 = vsub.s32 %v1336, %v3578
  %v3580 = vrot.slane %v3051, %v3579
  %v3581 = vlaneseq
  %v3582 = vshrl.u32 %v3581, 7
  %v3583 = vsub.s32 %v1341, %v3582
  %v3584 = vrot.slane %v3054, %v3583
  %v3585 = vsel %vm1346, %v3584, %v3580
  %v3586 = vlaneseq
  %v3587 = vshrl.u32 %v3586, 7
  %v3588 = vsub.s32 %v1336, %v3587
  %v3589 = vrot.slane %v3057, %v3588
  %v3590 = vlaneseq
  %v3591 = vshrl.u32 %v3590, 7
  %v3592 = vsub.s32 %v1341, %v3591
  %v3593 = vrot.slane %v3060, %v3592
  %v3594 = vsel %vm1346, %v3593, %v3589
  %v3595 = vlaneseq
  %v3596 = vshrl.u32 %v3595, 7
  %v3597 = vsub.s32 %v1336, %v3596
  %v3598 = vrot.slane %v3063, %v3597
  %v3599 = vlaneseq
  %v3600 = vshrl.u32 %v3599, 7
  %v3601 = vsub.s32 %v1341, %v3600
  %v3602 = vrot.slane %v3066, %v3601
  %v3603 = vsel %vm1346, %v3602, %v3598
  %v3604 = vlaneseq
  %v3605 = vshrl.u32 %v3604, 7
  %v3606 = vsub.s32 %v1336, %v3605
  %v3607 = vrot.slane %v3069, %v3606
  %v3608 = vlaneseq
  %v3609 = vshrl.u32 %v3608, 7
  %v3610 = vsub.s32 %v1341, %v3609
  %v3611 = vrot.slane %v3072, %v3610
  %v3612 = vsel %vm1346, %v3611, %v3607
  %v3613 = vlaneseq
  %v3614 = vshrl.u32 %v3613, 7
  %v3615 = vsub.s32 %v1336, %v3614
  %v3616 = vrot.slane %v3075, %v3615
  %v3617 = vlaneseq
  %v3618 = vshrl.u32 %v3617, 7
  %v3619 = vsub.s32 %v1341, %v3618
  %v3620 = vrot.slane %v3078, %v3619
  %v3621 = vsel %vm1346, %v3620, %v3616
  %v3622 = vlaneseq
  %v3623 = vshrl.u32 %v3622, 7
  %v3624 = vsub.s32 %v1336, %v3623
  %v3625 = vrot.slane %v3081, %v3624
  %v3626 = vlaneseq
  %v3627 = vshrl.u32 %v3626, 7
  %v3628 = vsub.s32 %v1341, %v3627
  %v3629 = vrot.slane %v3084, %v3628
  %v3630 = vsel %vm1346, %v3629, %v3625
  %v3631 = vlaneseq
  %v3632 = vshrl.u32 %v3631, 7
  %v3633 = vsub.s32 %v1336, %v3632
  %v3634 = vrot.slane %v3087, %v3633
  %v3635 = vlaneseq
  %v3636 = vshrl.u32 %v3635, 7
  %v3637 = vsub.s32 %v1341, %v3636
  %v3638 = vrot.slane %v3090, %v3637
  %v3639 = vsel %vm1346, %v3638, %v3634
  %v3640 = vlaneseq
  %v3641 = vshrl.u32 %v3640, 7
  %v3642 = vsub.s32 %v1336, %v3641
  %v3643 = vrot.slane %v3093, %v3642
  %v3644 = vlaneseq
  %v3645 = vshrl.u32 %v3644, 7
  %v3646 = vsub.s32 %v1341, %v3645
  %v3647 = vrot.slane %v3096, %v3646
  %v3648 = vsel %vm1346, %v3647, %v3643
  %v3649 = vlaneseq
  %v3650 = vshrl.u32 %v3649, 7
  %v3651 = vsub.s32 %v1336, %v3650
  %v3652 = vrot.slane %v3099, %v3651
  %v3653 = vlaneseq
  %v3654 = vshrl.u32 %v3653, 7
  %v3655 = vsub.s32 %v1341, %v3654
  %v3656 = vrot.slane %v3102, %v3655
  %v3657 = vsel %vm1346, %v3656, %v3652
  %v3658 = vlaneseq
  %v3659 = vshrl.u32 %v3658, 7
  %v3660 = vsub.s32 %v1336, %v3659
  %v3661 = vrot.slane %v3105, %v3660
  %v3662 = vlaneseq
  %v3663 = vshrl.u32 %v3662, 7
  %v3664 = vsub.s32 %v1341, %v3663
  %v3665 = vrot.slane %v3108, %v3664
  %v3666 = vsel %vm1346, %v3665, %v3661
  %v3667 = vlaneseq
  %v3668 = vshrl.u32 %v3667, 7
  %v3669 = vsub.s32 %v1336, %v3668
  %v3670 = vrot.slane %v3111, %v3669
  %v3671 = vlaneseq
  %v3672 = vshrl.u32 %v3671, 7
  %v3673 = vsub.s32 %v1341, %v3672
  %v3674 = vrot.slane %v3114, %v3673
  %v3675 = vsel %vm1346, %v3674, %v3670
  %v3676 = vlaneseq
  %v3677 = vshrl.u32 %v3676, 7
  %v3678 = vsub.s32 %v1336, %v3677
  %v3679 = vrot.slane %v3117, %v3678
  %v3680 = vlaneseq
  %v3681 = vshrl.u32 %v3680, 7
  %v3682 = vsub.s32 %v1341, %v3681
  %v3683 = vrot.slane %v3120, %v3682
  %v3684 = vsel %vm1346, %v3683, %v3679
  %v3685 = vlaneseq
  %v3686 = vshrl.u32 %v3685, 7
  %v3687 = vsub.s32 %v1336, %v3686
  %v3688 = vrot.slane %v3123, %v3687
  %v3689 = vlaneseq
  %v3690 = vshrl.u32 %v3689, 7
  %v3691 = vsub.s32 %v1341, %v3690
  %v3692 = vrot.slane %v3126, %v3691
  %v3693 = vsel %vm1346, %v3692, %v3688
  %v3694 = vlaneseq
  %v3695 = vshrl.u32 %v3694, 7
  %v3696 = vsub.s32 %v1336, %v3695
  %v3697 = vrot.slane %v3129, %v3696
  %v3698 = vlaneseq
  %v3699 = vshrl.u32 %v3698, 7
  %v3700 = vsub.s32 %v1341, %v3699
  %v3701 = vrot.slane %v3132, %v3700
  %v3702 = vsel %vm1346, %v3701, %v3697
  %v3703 = vlaneseq
  %v3704 = vshrl.u32 %v3703, 7
  %v3705 = vsub.s32 %v1336, %v3704
  %v3706 = vrot.slane %v3135, %v3705
  %v3707 = vlaneseq
  %v3708 = vshrl.u32 %v3707, 7
  %v3709 = vsub.s32 %v1341, %v3708
  %v3710 = vrot.slane %v3138, %v3709
  %v3711 = vsel %vm1346, %v3710, %v3706
  %v3712 = vlaneseq
  %v3713 = vshrl.u32 %v3712, 7
  %v3714 = vsub.s32 %v1336, %v3713
  %v3715 = vrot.slane %v3141, %v3714
  %v3716 = vlaneseq
  %v3717 = vshrl.u32 %v3716, 7
  %v3718 = vsub.s32 %v1341, %v3717
  %v3719 = vrot.slane %v3144, %v3718
  %v3720 = vsel %vm1346, %v3719, %v3715
  %v3721 = vsel %vm1915, %v3162, %v3153
  %v3722 = vsel %vm1917, %v3171, %v3721
  %v3723 = vsel %vm1919, %v3180, %v3722
  %v3724 = vsel %vm1921, %v3189, %v3723
  %v3725 = vsel %vm1923, %v3198, %v3724
  %v3726 = vsel %vm1925, %v3207, %v3725
  %v3727 = vsel %vm1927, %v3216, %v3726
  %v3728 = vsel %vm1915, %v3234, %v3225
  %v3729 = vsel %vm1917, %v3243, %v3728
  %v3730 = vsel %vm1919, %v3252, %v3729
  %v3731 = vsel %vm1921, %v3261, %v3730
  %v3732 = vsel %vm1923, %v3270, %v3731
  %v3733 = vsel %vm1925, %v3279, %v3732
  %v3734 = vsel %vm1927, %v3288, %v3733
  %v3735 = vsel %vm1915, %v3306, %v3297
  %v3736 = vsel %vm1917, %v3315, %v3735
  %v3737 = vsel %vm1919, %v3324, %v3736
  %v3738 = vsel %vm1921, %v3333, %v3737
  %v3739 = vsel %vm1923, %v3342, %v3738
  %v3740 = vsel %vm1925, %v3351, %v3739
  %v3741 = vsel %vm1927, %v3360, %v3740
  %v3742 = vsel %vm1915, %v3378, %v3369
  %v3743 = vsel %vm1917, %v3387, %v3742
  %v3744 = vsel %vm1919, %v3396, %v3743
  %v3745 = vsel %vm1921, %v3405, %v3744
  %v3746 = vsel %vm1923, %v3414, %v3745
  %v3747 = vsel %vm1925, %v3423, %v3746
  %v3748 = vsel %vm1927, %v3432, %v3747
  %v3749 = vsel %vm1915, %v3450, %v3441
  %v3750 = vsel %vm1917, %v3459, %v3749
  %v3751 = vsel %vm1919, %v3468, %v3750
  %v3752 = vsel %vm1921, %v3477, %v3751
  %v3753 = vsel %vm1923, %v3486, %v3752
  %v3754 = vsel %vm1925, %v3495, %v3753
  %v3755 = vsel %vm1927, %v3504, %v3754
  %v3756 = vsel %vm1915, %v3522, %v3513
  %v3757 = vsel %vm1917, %v3531, %v3756
  %v3758 = vsel %vm1919, %v3540, %v3757
  %v3759 = vsel %vm1921, %v3549, %v3758
  %v3760 = vsel %vm1923, %v3558, %v3759
  %v3761 = vsel %vm1925, %v3567, %v3760
  %v3762 = vsel %vm1927, %v3576, %v3761
  %v3763 = vsel %vm1915, %v3594, %v3585
  %v3764 = vsel %vm1917, %v3603, %v3763
  %v3765 = vsel %vm1919, %v3612, %v3764
  %v3766 = vsel %vm1921, %v3621, %v3765
  %v3767 = vsel %vm1923, %v3630, %v3766
  %v3768 = vsel %vm1925, %v3639, %v3767
  %v3769 = vsel %vm1927, %v3648, %v3768
  %v3770 = vsel %vm1915, %v3666, %v3657
  %v3771 = vsel %vm1917, %v3675, %v3770
  %v3772 = vsel %vm1919, %v3684, %v3771
  %v3773 = vsel %vm1921, %v3693, %v3772
  %v3774 = vsel %vm1923, %v3702, %v3773
  %v3775 = vsel %vm1925, %v3711, %v3774
  %v3776 = vsel %vm1927, %v3720, %v3775
  %v3785 = vadd.f32 %v2753, %v3727
  %v3786 = vadd.f32 %v2754, %v3734
  %v3787 = vadd.f32 %v2755, %v3741
  %v3788 = vadd.f32 %v2756, %v3748
  %v3789 = vadd.f32 %v2757, %v3755
  %v3790 = vadd.f32 %v2758, %v3762
  %v3791 = vadd.f32 %v2759, %v3769
  %v3792 = vadd.f32 %v2760, %v3776
  %vm3793 = vcmp.ge.f32.partialorder %v3785, 0.0
  %vm3794 = vcmp.ge.f32.partialorder %v3786, 0.0
  %vm3795 = vcmp.ge.f32.partialorder %v3787, 0.0
  %vm3796 = vcmp.ge.f32.partialorder %v3788, 0.0
  %vm3797 = vcmp.ge.f32.partialorder %v3789, 0.0
  %vm3798 = vcmp.ge.f32.partialorder %v3790, 0.0
  %vm3799 = vcmp.ge.f32.partialorder %v3791, 0.0
  %vm3800 = vcmp.ge.f32.partialorder %v3792, 0.0
  %v3801 = vmul.f32 %v3785, 0.2
  %v3802 = vmul.f32 %v3786, 0.2
  %v3803 = vmul.f32 %v3787, 0.2
  %v3804 = vmul.f32 %v3788, 0.2
  %v3805 = vmul.f32 %v3789, 0.2
  %v3806 = vmul.f32 %v3790, 0.2
  %v3807 = vmul.f32 %v3791, 0.2
  %v3808 = vmul.f32 %v3792, 0.2
  %v3809 = vsel %vm3793, %v3785, %v3801
  %v3810 = vsel %vm3794, %v3786, %v3802
  %v3811 = vsel %vm3795, %v3787, %v3803
  %v3812 = vsel %vm3796, %v3788, %v3804
  %v3813 = vsel %vm3797, %v3789, %v3805
  %v3814 = vsel %vm3798, %v3790, %v3806
  %v3815 = vsel %vm3799, %v3791, %v3807
  %v3816 = vsel %vm3800, %v3792, %v3808
  %v3817 = vadd.f32 %v3809, %v36
  %v3818 = vadd.f32 %v3810, %v37
  %v3819 = vadd.f32 %v3811, %v36
  %v3820 = vadd.f32 %v3812, %v37
  %v3821 = vadd.f32 %v3813, %v36
  %v3822 = vadd.f32 %v3814, %v37
  %v3823 = vadd.f32 %v3815, %v36
  %v3824 = vadd.f32 %v3816, %v37
  %v3825 = vsel %vm286, %v3817, -inf
  %3826 = vmax.xlane.f32.xlu0 %v3825
  %v3827 = vpop.xlane.xlu0 %3826
  %v3828 = vsel %vm286, %v3818, -inf
  %3829 = vmax.xlane.f32.xlu0 %v3828
  %v3830 = vpop.xlane.xlu0 %3829
  %v3831 = vsel %vm286, %v3819, -inf
  %3832 = vmax.xlane.f32.xlu0 %v3831
  %v3833 = vpop.xlane.xlu0 %3832
  %v3834 = vsel %vm286, %v3820, -inf
  %3835 = vmax.xlane.f32.xlu0 %v3834
  %v3836 = vpop.xlane.xlu0 %3835
  %v3837 = vsel %vm286, %v3821, -inf
  %3838 = vmax.xlane.f32.xlu0 %v3837
  %v3839 = vpop.xlane.xlu0 %3838
  %v3840 = vsel %vm286, %v3822, -inf
  %3841 = vmax.xlane.f32.xlu0 %v3840
  %v3842 = vpop.xlane.xlu0 %3841
  %v3843 = vsel %vm286, %v3823, -inf
  %3844 = vmax.xlane.f32.xlu0 %v3843
  %v3845 = vpop.xlane.xlu0 %3844
  %v3846 = vsel %vm286, %v3824, -inf
  %3847 = vmax.xlane.f32.xlu0 %v3846
  %v3848 = vpop.xlane.xlu0 %3847
  %v3849 = vsub.f32 %v3817, %v3827
  %v3850 = vsub.f32 %v3818, %v3830
  %v3851 = vsub.f32 %v3819, %v3833
  %v3852 = vsub.f32 %v3820, %v3836
  %v3853 = vsub.f32 %v3821, %v3839
  %v3854 = vsub.f32 %v3822, %v3842
  %v3855 = vsub.f32 %v3823, %v3845
  %v3856 = vsub.f32 %v3824, %v3848
  %v3857 = vmul.f32 %v3849, 1.442695
  %v3858 = vpow.pop %v3857
  %v3859 = vmul.f32 %v3850, 1.442695
  %v3860 = vpow.pop %v3859
  %v3861 = vmul.f32 %v3851, 1.442695
  %v3862 = vpow.pop %v3861
  %v3863 = vmul.f32 %v3852, 1.442695
  %v3864 = vpow.pop %v3863
  %v3865 = vmul.f32 %v3853, 1.442695
  %v3866 = vpow.pop %v3865
  %v3867 = vmul.f32 %v3854, 1.442695
  %v3868 = vpow.pop %v3867
  %v3869 = vmul.f32 %v3855, 1.442695
  %v3870 = vpow.pop %v3869
  %v3871 = vmul.f32 %v3856, 1.442695
  %v3872 = vpow.pop %v3871
  %v3873 = vsel %vm286, %v3858, 0.0
  %3874 = vadd.xlane.f32.xlu0 %v3873
  %v3875 = vpop.xlane.xlu0 %3874
  %v3876 = vsel %vm286, %v3860, 0.0
  %3877 = vadd.xlane.f32.xlu0 %v3876
  %v3878 = vpop.xlane.xlu0 %3877
  %v3879 = vsel %vm286, %v3862, 0.0
  %3880 = vadd.xlane.f32.xlu0 %v3879
  %v3881 = vpop.xlane.xlu0 %3880
  %v3882 = vsel %vm286, %v3864, 0.0
  %3883 = vadd.xlane.f32.xlu0 %v3882
  %v3884 = vpop.xlane.xlu0 %3883
  %v3885 = vsel %vm286, %v3866, 0.0
  %3886 = vadd.xlane.f32.xlu0 %v3885
  %v3887 = vpop.xlane.xlu0 %3886
  %v3888 = vsel %vm286, %v3868, 0.0
  %3889 = vadd.xlane.f32.xlu0 %v3888
  %v3890 = vpop.xlane.xlu0 %3889
  %v3891 = vsel %vm286, %v3870, 0.0
  %3892 = vadd.xlane.f32.xlu0 %v3891
  %v3893 = vpop.xlane.xlu0 %3892
  %v3894 = vsel %vm286, %v3872, 0.0
  %3895 = vadd.xlane.f32.xlu0 %v3894
  %v3896 = vpop.xlane.xlu0 %3895
  %v3897 = vadd.f32 %v3875, 1e-16
  %v3898 = vadd.f32 %v3878, 1e-16
  %v3899 = vadd.f32 %v3881, 1e-16
  %v3900 = vadd.f32 %v3884, 1e-16
  %v3901 = vadd.f32 %v3887, 1e-16
  %v3902 = vadd.f32 %v3890, 1e-16
  %v3903 = vadd.f32 %v3893, 1e-16
  %v3904 = vadd.f32 %v3896, 1e-16
  %v3905 = vrcp.pop %v3897
  %v3906 = vrcp.pop %v3898
  %v3907 = vrcp.pop %v3899
  %v3908 = vrcp.pop %v3900
  %v3909 = vrcp.pop %v3901
  %v3910 = vrcp.pop %v3902
  %v3911 = vrcp.pop %v3903
  %v3912 = vrcp.pop %v3904
  %v3913 = vmul.f32 %v3858, %v3905
  %v3914 = vmul.f32 %v3860, %v3906
  %v3915 = vmul.f32 %v3862, %v3907
  %v3916 = vmul.f32 %v3864, %v3908
  %v3917 = vmul.f32 %v3866, %v3909
  %v3918 = vmul.f32 %v3868, %v3910
  %v3919 = vmul.f32 %v3870, %v3911
  %v3920 = vmul.f32 %v3872, %v3912
  %3921 = vrot.lane.b32.xlu0 %v2614, 88
  %v3922 = vpop.permute.xlu0 %3921
  %3923 = vrot.lane.b32.xlu0 %v2619, 88
  %v3924 = vpop.permute.xlu0 %3923
  %v3928 = vsel %vm286, %v3913, 0
  %v3931 = vsel %vm286, %v3914, 0
  %3933 = vmatprep.subr.mxu0 0.0
  %3934 = vmatpush1.msra.mxu0 %v2614
  %3935 = vmatprep.subr.mxu0 0.0
  %3936 = vmatpush1.msra.mxu0 %v2619
  %3937 = vmatprep.subr.mxu0 0.0
  %3938 = vmatpush1.msra.mxu0 0.0
  %3939 = vmatprep.subr.mxu0 0.0
  %3940 = vmatpush1.msra.mxu0 0.0
  %3941 = vmatprep.subr.mxu0 0.0
  %3942 = vmatpush1.msra.mxu0 0.0
  %3943 = vmatprep.subr.mxu0 0.0
  %3944 = vmatpush1.msra.mxu0 0.0
  %3945 = vmatprep.subr.mxu0 0.0
  %3946 = vmatpush1.msra.mxu0 0.0
  %3947 = vmatprep.subr.mxu0 0.0
  %3948 = vmatpush1.msra.mxu0 0.0
  %3949 = vmatprep.subr.mxu0 0.0
  %3950 = vmatpush1.msra.mxu0 0.0
  %3951 = vmatprep.subr.mxu0 0.0
  %3952 = vmatpush1.msra.mxu0 0.0
  %3953 = vmatprep.subr.mxu0 0.0
  %3954 = vmatpush1.msra.mxu0 0.0
  %3955 = vmatprep.subr.mxu0 0.0
  %3956 = vmatpush1.msra.mxu0 0.0
  %3957 = vmatprep.subr.mxu0 0.0
  %3958 = vmatpush1.msra.mxu0 0.0
  %3959 = vmatprep.subr.mxu0 0.0
  %3960 = vmatpush1.msra.mxu0 0.0
  %3961 = vmatprep.subr.mxu0 0.0
  %3962 = vmatpush1.msra.mxu0 0.0
  %3963 = vmatprep.subr.mxu0 0.0
  %3964 = vmatpush1.msra.mxu0 0.0
  %3965 = vmatprep.subr.mxu0 0.0
  %3966 = vmatpush1.msra.mxu0 0.0
  %3967 = vmatprep.subr.mxu0 0.0
  %3968 = vmatpush1.msra.mxu0 0.0
  %3969 = vmatprep.subr.mxu0 0.0
  %3970 = vmatpush1.msra.mxu0 0.0
  %3971 = vmatprep.subr.mxu0 0.0
  %3972 = vmatpush1.msra.mxu0 0.0
  %3973 = vmatprep.subr.mxu0 0.0
  %3974 = vmatpush1.msra.mxu0 0.0
  %3975 = vmatprep.subr.mxu0 0.0
  %3976 = vmatpush1.msra.mxu0 0.0
  %3977 = vmatprep.subr.mxu0 0.0
  %3978 = vmatpush1.msra.mxu0 0.0
  %3979 = vmatprep.subr.mxu0 0.0
  %3980 = vmatpush1.msra.mxu0 0.0
  %3981 = vmatprep.subr.mxu0 0.0
  %3982 = vmatpush1.msra.mxu0 0.0
  %3983 = vmatprep.subr.mxu0 0.0
  %3984 = vmatpush1.msra.mxu0 0.0
  %3985 = vmatprep.subr.mxu0 0.0
  %3986 = vmatpush1.msra.mxu0 0.0
  %3987 = vmatprep.subr.mxu0 0.0
  %3988 = vmatpush1.msra.mxu0 0.0
  %3989 = vmatprep.subr.mxu0 0.0
  %3990 = vmatpush1.msra.mxu0 0.0
  %3991 = vmatprep.subr.mxu0 0.0
  %3992 = vmatpush1.msra.mxu0 0.0
  %3993 = vmatprep.subr.mxu0 0.0
  %3994 = vmatpush1.msra.mxu0 0.0
  %3995 = vmatprep.subr.mxu0 0.0
  %3996 = vmatpush1.msra.mxu0 0.0
  %3997 = vmatprep.mubr.f32.mxu0 0.0
  %3998 = vmatmul.mubr.f32.gmra.mrb[0].mxu0 %v3928
  %v3999 = vpop.f32.mrb[0].mxu0
  %v4000 = vadd.f32 %v3922, %v3999
  %v4001 = vpop.f32.mrb[0].mxu0
  %4002 = vmatprep.mubr.f32.mxu0 0.0
  %4003 = vmatmul.mubr.f32.gmra.mrb[0].mxu0 %v3931
  %v4004 = vpop.f32.mrb[0].mxu0
  %v4005 = vadd.f32 %v3924, %v4004
  %v4006 = vpop.f32.mrb[0].mxu0
  %4007 = vdwg.mxu0
  %4008 = vrot.lane.b32.xlu0 %v2614, 120
  %v4009 = vpop.permute.xlu0 %4008
  %4010 = vrot.lane.b32.xlu0 %v2619, 120
  %v4011 = vpop.permute.xlu0 %4010
  %4014 = vrot.lane.b32.xlu0 %v2614, 80
  %v4015 = vpop.permute.xlu0 %4014
  %4016 = vrot.lane.b32.xlu0 %v2619, 80
  %v4017 = vpop.permute.xlu0 %4016
  %v4021 = vsel %vm286, %v3915, 0
  %v4024 = vsel %vm286, %v3916, 0
  %4026 = vmatprep.subr.mxu0 0.0
  %4027 = vmatpush1.msra.mxu0 %v4009
  %4028 = vmatprep.subr.mxu0 0.0
  %4029 = vmatpush1.msra.mxu0 %v4011
  %4030 = vmatprep.subr.mxu0 0.0
  %4031 = vmatpush1.msra.mxu0 0.0
  %4032 = vmatprep.subr.mxu0 0.0
  %4033 = vmatpush1.msra.mxu0 0.0
  %4034 = vmatprep.subr.mxu0 0.0
  %4035 = vmatpush1.msra.mxu0 0.0
  %4036 = vmatprep.subr.mxu0 0.0
  %4037 = vmatpush1.msra.mxu0 0.0
  %4038 = vmatprep.subr.mxu0 0.0
  %4039 = vmatpush1.msra.mxu0 0.0
  %4040 = vmatprep.subr.mxu0 0.0
  %4041 = vmatpush1.msra.mxu0 0.0
  %4042 = vmatprep.subr.mxu0 0.0
  %4043 = vmatpush1.msra.mxu0 0.0
  %4044 = vmatprep.subr.mxu0 0.0
  %4045 = vmatpush1.msra.mxu0 0.0
  %4046 = vmatprep.subr.mxu0 0.0
  %4047 = vmatpush1.msra.mxu0 0.0
  %4048 = vmatprep.subr.mxu0 0.0
  %4049 = vmatpush1.msra.mxu0 0.0
  %4050 = vmatprep.subr.mxu0 0.0
  %4051 = vmatpush1.msra.mxu0 0.0
  %4052 = vmatprep.subr.mxu0 0.0
  %4053 = vmatpush1.msra.mxu0 0.0
  %4054 = vmatprep.subr.mxu0 0.0
  %4055 = vmatpush1.msra.mxu0 0.0
  %4056 = vmatprep.subr.mxu0 0.0
  %4057 = vmatpush1.msra.mxu0 0.0
  %4058 = vmatprep.subr.mxu0 0.0
  %4059 = vmatpush1.msra.mxu0 0.0
  %4060 = vmatprep.subr.mxu0 0.0
  %4061 = vmatpush1.msra.mxu0 0.0
  %4062 = vmatprep.subr.mxu0 0.0
  %4063 = vmatpush1.msra.mxu0 0.0
  %4064 = vmatprep.subr.mxu0 0.0
  %4065 = vmatpush1.msra.mxu0 0.0
  %4066 = vmatprep.subr.mxu0 0.0
  %4067 = vmatpush1.msra.mxu0 0.0
  %4068 = vmatprep.subr.mxu0 0.0
  %4069 = vmatpush1.msra.mxu0 0.0
  %4070 = vmatprep.subr.mxu0 0.0
  %4071 = vmatpush1.msra.mxu0 0.0
  %4072 = vmatprep.subr.mxu0 0.0
  %4073 = vmatpush1.msra.mxu0 0.0
  %4074 = vmatprep.subr.mxu0 0.0
  %4075 = vmatpush1.msra.mxu0 0.0
  %4076 = vmatprep.subr.mxu0 0.0
  %4077 = vmatpush1.msra.mxu0 0.0
  %4078 = vmatprep.subr.mxu0 0.0
  %4079 = vmatpush1.msra.mxu0 0.0
  %4080 = vmatprep.subr.mxu0 0.0
  %4081 = vmatpush1.msra.mxu0 0.0
  %4082 = vmatprep.subr.mxu0 0.0
  %4083 = vmatpush1.msra.mxu0 0.0
  %4084 = vmatprep.subr.mxu0 0.0
  %4085 = vmatpush1.msra.mxu0 0.0
  %4086 = vmatprep.subr.mxu0 0.0
  %4087 = vmatpush1.msra.mxu0 0.0
  %4088 = vmatprep.subr.mxu0 0.0
  %4089 = vmatpush1.msra.mxu0 0.0
  %4090 = vmatprep.mubr.f32.mxu0 0.0
  %4091 = vmatmul.mubr.f32.gmra.mrb[0].mxu0 %v4021
  %v4092 = vpop.f32.mrb[0].mxu0
  %v4093 = vadd.f32 %v4015, %v4092
  %v4094 = vpop.f32.mrb[0].mxu0
  %4095 = vmatprep.mubr.f32.mxu0 0.0
  %4096 = vmatmul.mubr.f32.gmra.mrb[0].mxu0 %v4024
  %v4097 = vpop.f32.mrb[0].mxu0
  %v4098 = vadd.f32 %v4017, %v4097
  %v4099 = vpop.f32.mrb[0].mxu0
  %4100 = vdwg.mxu0
  %v4101 = vadd.f32 %v4000, %v4093
  %v4102 = vadd.f32 %v4005, %v4098
  %4103 = vrot.lane.b32.xlu0 %v2614, 112
  %v4104 = vpop.permute.xlu0 %4103
  %4105 = vrot.lane.b32.xlu0 %v2619, 112
  %v4106 = vpop.permute.xlu0 %4105
  %4109 = vrot.lane.b32.xlu0 %v2614, 72
  %v4110 = vpop.permute.xlu0 %4109
  %4111 = vrot.lane.b32.xlu0 %v2619, 72
  %v4112 = vpop.permute.xlu0 %4111
  %v4116 = vsel %vm286, %v3917, 0
  %v4119 = vsel %vm286, %v3918, 0
  %4121 = vmatprep.subr.mxu0 0.0
  %4122 = vmatpush1.msra.mxu0 %v4104
  %4123 = vmatprep.subr.mxu0 0.0
  %4124 = vmatpush1.msra.mxu0 %v4106
  %4125 = vmatprep.subr.mxu0 0.0
  %4126 = vmatpush1.msra.mxu0 0.0
  %4127 = vmatprep.subr.mxu0 0.0
  %4128 = vmatpush1.msra.mxu0 0.0
  %4129 = vmatprep.subr.mxu0 0.0
  %4130 = vmatpush1.msra.mxu0 0.0
  %4131 = vmatprep.subr.mxu0 0.0
  %4132 = vmatpush1.msra.mxu0 0.0
  %4133 = vmatprep.subr.mxu0 0.0
  %4134 = vmatpush1.msra.mxu0 0.0
  %4135 = vmatprep.subr.mxu0 0.0
  %4136 = vmatpush1.msra.mxu0 0.0
  %4137 = vmatprep.subr.mxu0 0.0
  %4138 = vmatpush1.msra.mxu0 0.0
  %4139 = vmatprep.subr.mxu0 0.0
  %4140 = vmatpush1.msra.mxu0 0.0
  %4141 = vmatprep.subr.mxu0 0.0
  %4142 = vmatpush1.msra.mxu0 0.0
  %4143 = vmatprep.subr.mxu0 0.0
  %4144 = vmatpush1.msra.mxu0 0.0
  %4145 = vmatprep.subr.mxu0 0.0
  %4146 = vmatpush1.msra.mxu0 0.0
  %4147 = vmatprep.subr.mxu0 0.0
  %4148 = vmatpush1.msra.mxu0 0.0
  %4149 = vmatprep.subr.mxu0 0.0
  %4150 = vmatpush1.msra.mxu0 0.0
  %4151 = vmatprep.subr.mxu0 0.0
  %4152 = vmatpush1.msra.mxu0 0.0
  %4153 = vmatprep.subr.mxu0 0.0
  %4154 = vmatpush1.msra.mxu0 0.0
  %4155 = vmatprep.subr.mxu0 0.0
  %4156 = vmatpush1.msra.mxu0 0.0
  %4157 = vmatprep.subr.mxu0 0.0
  %4158 = vmatpush1.msra.mxu0 0.0
  %4159 = vmatprep.subr.mxu0 0.0
  %4160 = vmatpush1.msra.mxu0 0.0
  %4161 = vmatprep.subr.mxu0 0.0
  %4162 = vmatpush1.msra.mxu0 0.0
  %4163 = vmatprep.subr.mxu0 0.0
  %4164 = vmatpush1.msra.mxu0 0.0
  %4165 = vmatprep.subr.mxu0 0.0
  %4166 = vmatpush1.msra.mxu0 0.0
  %4167 = vmatprep.subr.mxu0 0.0
  %4168 = vmatpush1.msra.mxu0 0.0
  %4169 = vmatprep.subr.mxu0 0.0
  %4170 = vmatpush1.msra.mxu0 0.0
  %4171 = vmatprep.subr.mxu0 0.0
  %4172 = vmatpush1.msra.mxu0 0.0
  %4173 = vmatprep.subr.mxu0 0.0
  %4174 = vmatpush1.msra.mxu0 0.0
  %4175 = vmatprep.subr.mxu0 0.0
  %4176 = vmatpush1.msra.mxu0 0.0
  %4177 = vmatprep.subr.mxu0 0.0
  %4178 = vmatpush1.msra.mxu0 0.0
  %4179 = vmatprep.subr.mxu0 0.0
  %4180 = vmatpush1.msra.mxu0 0.0
  %4181 = vmatprep.subr.mxu0 0.0
  %4182 = vmatpush1.msra.mxu0 0.0
  %4183 = vmatprep.subr.mxu0 0.0
  %4184 = vmatpush1.msra.mxu0 0.0
  %4185 = vmatprep.mubr.f32.mxu0 0.0
  %4186 = vmatmul.mubr.f32.gmra.mrb[0].mxu0 %v4116
  %v4187 = vpop.f32.mrb[0].mxu0
  %v4188 = vadd.f32 %v4110, %v4187
  %v4189 = vpop.f32.mrb[0].mxu0
  %4190 = vmatprep.mubr.f32.mxu0 0.0
  %4191 = vmatmul.mubr.f32.gmra.mrb[0].mxu0 %v4119
  %v4192 = vpop.f32.mrb[0].mxu0
  %v4193 = vadd.f32 %v4112, %v4192
  %v4194 = vpop.f32.mrb[0].mxu0
  %4195 = vdwg.mxu0
  %v4196 = vadd.f32 %v4101, %v4188
  %v4197 = vadd.f32 %v4102, %v4193
  %4198 = vrot.lane.b32.xlu0 %v2614, 104
  %v4199 = vpop.permute.xlu0 %4198
  %4200 = vrot.lane.b32.xlu0 %v2619, 104
  %v4201 = vpop.permute.xlu0 %4200
  %4204 = vrot.lane.b32.xlu0 %v2614, 64
  %v4205 = vpop.permute.xlu0 %4204
  %4206 = vrot.lane.b32.xlu0 %v2619, 64
  %v4207 = vpop.permute.xlu0 %4206
  %v4211 = vsel %vm286, %v3919, 0
  %v4214 = vsel %vm286, %v3920, 0
  %4216 = vmatprep.subr.mxu0 0.0
  %4217 = vmatpush1.msra.mxu0 %v4199
  %4218 = vmatprep.subr.mxu0 0.0
  %4219 = vmatpush1.msra.mxu0 %v4201
  %4220 = vmatprep.subr.mxu0 0.0
  %4221 = vmatpush1.msra.mxu0 0.0
  %4222 = vmatprep.subr.mxu0 0.0
  %4223 = vmatpush1.msra.mxu0 0.0
  %4224 = vmatprep.subr.mxu0 0.0
  %4225 = vmatpush1.msra.mxu0 0.0
  %4226 = vmatprep.subr.mxu0 0.0
  %4227 = vmatpush1.msra.mxu0 0.0
  %4228 = vmatprep.subr.mxu0 0.0
  %4229 = vmatpush1.msra.mxu0 0.0
  %4230 = vmatprep.subr.mxu0 0.0
  %4231 = vmatpush1.msra.mxu0 0.0
  %4232 = vmatprep.subr.mxu0 0.0
  %4233 = vmatpush1.msra.mxu0 0.0
  %4234 = vmatprep.subr.mxu0 0.0
  %4235 = vmatpush1.msra.mxu0 0.0
  %4236 = vmatprep.subr.mxu0 0.0
  %4237 = vmatpush1.msra.mxu0 0.0
  %4238 = vmatprep.subr.mxu0 0.0
  %4239 = vmatpush1.msra.mxu0 0.0
  %4240 = vmatprep.subr.mxu0 0.0
  %4241 = vmatpush1.msra.mxu0 0.0
  %4242 = vmatprep.subr.mxu0 0.0
  %4243 = vmatpush1.msra.mxu0 0.0
  %4244 = vmatprep.subr.mxu0 0.0
  %4245 = vmatpush1.msra.mxu0 0.0
  %4246 = vmatprep.subr.mxu0 0.0
  %4247 = vmatpush1.msra.mxu0 0.0
  %4248 = vmatprep.subr.mxu0 0.0
  %4249 = vmatpush1.msra.mxu0 0.0
  %4250 = vmatprep.subr.mxu0 0.0
  %4251 = vmatpush1.msra.mxu0 0.0
  %4252 = vmatprep.subr.mxu0 0.0
  %4253 = vmatpush1.msra.mxu0 0.0
  %4254 = vmatprep.subr.mxu0 0.0
  %4255 = vmatpush1.msra.mxu0 0.0
  %4256 = vmatprep.subr.mxu0 0.0
  %4257 = vmatpush1.msra.mxu0 0.0
  %4258 = vmatprep.subr.mxu0 0.0
  %4259 = vmatpush1.msra.mxu0 0.0
  %4260 = vmatprep.subr.mxu0 0.0
  %4261 = vmatpush1.msra.mxu0 0.0
  %4262 = vmatprep.subr.mxu0 0.0
  %4263 = vmatpush1.msra.mxu0 0.0
  %4264 = vmatprep.subr.mxu0 0.0
  %4265 = vmatpush1.msra.mxu0 0.0
  %4266 = vmatprep.subr.mxu0 0.0
  %4267 = vmatpush1.msra.mxu0 0.0
  %4268 = vmatprep.subr.mxu0 0.0
  %4269 = vmatpush1.msra.mxu0 0.0
  %4270 = vmatprep.subr.mxu0 0.0
  %4271 = vmatpush1.msra.mxu0 0.0
  %4272 = vmatprep.subr.mxu0 0.0
  %4273 = vmatpush1.msra.mxu0 0.0
  %4274 = vmatprep.subr.mxu0 0.0
  %4275 = vmatpush1.msra.mxu0 0.0
  %4276 = vmatprep.subr.mxu0 0.0
  %4277 = vmatpush1.msra.mxu0 0.0
  %4278 = vmatprep.subr.mxu0 0.0
  %4279 = vmatpush1.msra.mxu0 0.0
  %4280 = vmatprep.mubr.f32.mxu0 0.0
  %4281 = vmatmul.mubr.f32.gmra.mrb[0].mxu0 %v4211
  %v4282 = vpop.f32.mrb[0].mxu0
  %v4283 = vadd.f32 %v4205, %v4282
  %v4284 = vpop.f32.mrb[0].mxu0
  %4285 = vmatprep.mubr.f32.mxu0 0.0
  %4286 = vmatmul.mubr.f32.gmra.mrb[0].mxu0 %v4214
  %v4287 = vpop.f32.mrb[0].mxu0
  %v4288 = vadd.f32 %v4207, %v4287
  %v4289 = vpop.f32.mrb[0].mxu0
  %4290 = vdwg.mxu0
  %v4291 = vadd.f32 %v4196, %v4283
  %v4292 = vadd.f32 %v4197, %v4288
  %v4293 = vmul.f32 %v4291, 0.25
  %v4294 = vmul.f32 %v4292, 0.25
  %v4296 = vlaneseq
  %v4297 = vshrl.u32 %v4296, 7
  %v4298 = vsub.s32 0, %v4297
  %v4299 = vrot.slane %v2662, %v4298
  %v4301 = vadd.f32 %v4293, %v4299
  %v4302 = vadd.f32 %v4294, %v4299
  %vm4303 = vcmask 64512
  %4304 = vst.msk [vmem:[%s8] sm:$0xff] %vm4303, %v4301
  %4305 = vst.msk [vmem:[%s8 + $0x8] sm:$0xff] %vm4303, %v4302
  // Predicated region
  $region34: #{tpu_custom_call.1} parent=0 // pred_check
    _
  $region35: #{tpu_custom_call.1} parent=0 // pred_check_branch
    %4307 = sbr.rel (0) target = $region37
  $region36: #{tpu_custom_call.1} parent=0 // pred_region
    _
  $region37: #{tpu_custom_call.1} parent=0 // pred_fallthru
    _
  // Predicated region
  $region38: #{tpu_custom_call.1} parent=0 // pred_check
    _
  $region39: #{tpu_custom_call.1} parent=0 // pred_check_branch
    %4309 = sbr.rel (0) target = $region41
  $region40: #{tpu_custom_call.1} parent=0 // pred_region
    _
  $region41: #{tpu_custom_call.1} parent=0 // pred_fallthru
    _

</llo_original>
